<compile_context>
chip_gen: v7x
topology: tpu7x:2x2x1
jax: 0.10.0
libtpu: 0.0.40
codegen_flags: <defaults>
</compile_context>

<pallas_src>
import math
import functools

import jax
import jax.numpy as jnp
from jax.experimental import pallas as pl
from jax.experimental.pallas import tpu as pltpu


def _scaled_atan2(y, x, *, scale, quarter_turn, half_turn):
    """atan2(y, x) * scale from mul/add/cmp/select + one exact divide.

    Octant reduction + degree-11 odd minimax polynomial for atan on [0, 1]
    (max abs error ~1e-5 rad, far below the bin width).  quarter_turn /
    half_turn are supplied exactly (e.g. nbins/2 and nbins for max_angle=pi)
    so that gx==0 / gy==0 pixels land on exactly-integral phase_int, matching
    torch's atan2 at 0, +/-pi/2, +/-pi (incl. atan2(0, 0) == 0).
    """
    abs_y = jnp.abs(y)
    abs_x = jnp.abs(x)
    mx = jnp.maximum(abs_x, abs_y)
    mn = jnp.minimum(abs_x, abs_y)
    a = mn / jnp.maximum(mx, 1e-30)          # exact divide; mx == 0 -> a == 0
    s = a * a
    r = a * (0.99997726 + s * (-0.33262347 + s * (0.19354346
            + s * (-0.11643287 + s * (0.05265332 + s * (-0.01172120))))))
    r = r * scale
    r = jnp.where(abs_y > abs_x, quarter_turn - r, r)
    r = jnp.where(x < 0.0, half_turn - r, r)
    r = jnp.where(y < 0.0, -r, r)
    return r


def _mod_n(v, n):
    """v mod n for int32 v in [-n, n] (branchless)."""
    v = jnp.where(v < 0, v + n, v)
    return jnp.where(v >= n, v - n, v)


def _hog_kernel(xp_ref, out_ref, *, nbins, pool, scale, quarter_turn,
                half_turn, H, W):
    # xp_ref : (H+2, W+2, TB) f32 zero-padded image tile, batch on lanes.
    # out_ref: (nbins*hp*wp, TB) f32 pooled histogram, lane-dense slab.
    TB = xp_ref.shape[-1]
    hp, wp = H // pool, W // pool

    # --- Sobel bank factored into column / row differences --------------------
    # F.conv2d (cross-correlation) with
    #   w0 = [[1,0,-1],[2,0,-2],[1,0,-1]] (channel 0),  w1 = w0.T (channel 1)
    cd = xp_ref[:, 0:W, :] - xp_ref[:, 2:W + 2, :]                  # (H+2, W, TB)
    gx = cd[0:H] + 2.0 * cd[1:H + 1] + cd[2:H + 2]                  # (H, W, TB)
    rd = xp_ref[0:H, :, :] - xp_ref[2:H + 2, :, :]                  # (H, W+2, TB)
    gy = rd[:, 0:W, :] + 2.0 * rd[:, 1:W + 1, :] + rd[:, 2:W + 2, :]

    mag = jnp.sqrt(gx * gx + gy * gy)                # gxy.norm(dim=1)
    # phase/max_angle*nbins, computed directly in "bin" units.
    phase_int = _scaled_atan2(gx, gy, scale=scale, quarter_turn=quarter_turn,
                              half_turn=half_turn)
    # exact value lies in [-nbins, nbins]; clip guards the poly's overshoot
    phase_int = jnp.clip(phase_int, -float(nbins), float(nbins))

    t = phase_int.astype(jnp.int32)                  # trunc toward zero
    tf = t.astype(jnp.float32)
    is_int = phase_int == tf                         # floor == ceil
    f = t - (phase_int < tf).astype(jnp.int32)       # floor(phase_int)
    bin_f = _mod_n(f, nbins)                         # floor % nbins

    # out.scatter_(1, floor%nbins, mag); out.scatter_add_(1, ceil%nbins, 1-mag)
    # Non-integral phase: ceil%nbins == (floor%nbins + 1) % nbins, so the ceil
    # one-hot is the floor one-hot shifted by one bin.  Integral phase: torch
    # deposits mag + (1-mag) = 1 in the floor bin, nothing in the next bin.
    w_floor = jnp.where(is_int, 1.0, mag)
    w_ceil = jnp.where(is_int, 0.0, 1.0 - mag)

    # AvgPool2d(pool, stride=pool, padding=0, count_include_pad=True), written
    # into the dense (nbins*hp*wp, TB) output slab (per-bin rows are small
    # static sublane slices; the slab itself is lane/sublane dense).
    inv = 1.0 / float(pool * pool)
    for k in range(nbins):
        sel_f = bin_f == k                            # recomputed per bin (no
        sel_c = bin_f == ((k - 1) % nbins)            # spilled mask list)
        contrib = jnp.where(sel_f, w_floor, 0.0) + jnp.where(sel_c, w_ceil, 0.0)
        s1 = contrib.reshape(hp, pool, W, TB).sum(axis=1)       # (hp, W, TB)
        s2 = s1.reshape(hp * wp, pool, TB).sum(axis=1)          # (hp*wp, TB)
        out_ref[k * hp * wp:(k + 1) * hp * wp, :] = s2 * inv


def _round_up(a, b):
    return (a + b - 1) // b * b


def _tpu_vmem_bytes():
    try:
        cap = int(pltpu.get_tpu_info().vmem_capacity_bytes)
        if cap > 0:
            return cap
    except Exception:
        pass
    return 64 * 1024 * 1024       # conservative fallback (v7x per-TC VMEM)


def _pick_tb(N, H, W, nbins, pool, budget_bytes):
    hp, wp = H // pool, W // pool
    # Per-lane f32 footprint: double-buffered padded input block + dense output
    # block + ~14 simultaneously-live full-size (H, W) intermediates.
    per_lane = 4 * (2 * (H + 2) * (W + 2) + 2 * nbins * hp * wp + 14 * H * W)
    tb = 128
    for cand in (1024, 768, 512, 384, 256, 128):
        if cand * per_lane <= budget_bytes:
            tb = cand
            break
    # Don't over-pad small batches, but keep lanes dense (multiple of 128).
    tb = max(128, min(tb, _round_up(max(N, 1), 128)))
    # Keep >=2 grid steps when it costs no extra lane padding, so that both
    # TensorCores on dual-core chips (v7x) get a share of the "parallel" axis.
    if N > 128:
        half = _round_up((N + 1) // 2, 128)
        if _round_up(N, half) <= _round_up(N, tb):
            tb = min(tb, half)
    return tb


@functools.partial(
    jax.jit,
    static_argnames=("nbins", "pool", "max_angle", "padding", "batch_tile"))
def hog_layer(x, *, nbins=10, pool=8, max_angle=math.pi, padding=1,
              batch_tile=None):
    """JAX/Pallas equivalent of HOGLayer.forward (stride=1, dilation=1 defaults)."""
    N, C, H, W = x.shape
    assert C == 1, "HOGLayer's conv weight has in_channels=1"
    assert padding == 1, "kernel assumes the module's default padding=1"
    assert H % pool == 0 and W % pool == 0
    hp, wp = H // pool, W // pool

    vmem_cap = _tpu_vmem_bytes()
    TB = batch_tile if batch_tile is not None else _pick_tb(
        N, H, W, nbins, pool, budget_bytes=(vmem_cap * 3) // 8)
    N_pad = _round_up(max(N, 1), TB)

    # cast + zero pad (spatial padding=1 and batch padding) + batch->lane
    # transpose in one fused HBM pass under jit.
    xp = jnp.pad(x[:, 0].astype(jnp.float32), ((0, N_pad - N), (1, 1), (1, 1)))
    xp = jnp.transpose(xp, (1, 2, 0))                     # (H+2, W+2, N_pad)

    # Exact quarter/half-turn constants in bin units (nbins/2 and nbins for the
    # default max_angle=pi) so axis-aligned gradients bin exactly like torch.
    scale = float(nbins) / float(max_angle)
    if abs(float(max_angle) - math.pi) < 1e-12:
        half_turn = float(nbins)
        quarter_turn = float(nbins) / 2.0
    else:
        half_turn = scale * math.pi
        quarter_turn = scale * (math.pi / 2.0)

    kernel = functools.partial(_hog_kernel, nbins=nbins, pool=pool,
                               scale=scale, quarter_turn=quarter_turn,
                               half_turn=half_turn, H=H, W=W)
    out = pl.pallas_call(
        kernel,
        out_shape=jax.ShapeDtypeStruct((nbins * hp * wp, N_pad), jnp.float32),
        grid_spec=pltpu.PrefetchScalarGridSpec(
            num_scalar_prefetch=0,
            grid=(N_pad // TB,),
            in_specs=[pl.BlockSpec((H + 2, W + 2, TB), lambda b: (0, 0, b))],
            out_specs=pl.BlockSpec((nbins * hp * wp, TB), lambda b: (0, b)),
        ),
        compiler_params=pltpu.CompilerParams(
            dimension_semantics=("parallel",),
            vmem_limit_bytes=min((vmem_cap * 3) // 4, 96 * 1024 * 1024),
        ),
    )(xp)

    out = out[:, :N]                                       # (nbins*hp*wp, N)
    # torch: res.reshape(n, nbins, -1).reshape(n, -1) == (N, nbins*hp*wp)
    return jnp.transpose(out, (1, 0))


if __name__ == "__main__":
    key = jax.random.PRNGKey(0)
    x = jax.random.normal(key, (2, 1, 16, 16), dtype=jnp.float32)
    out = hog_layer(x)
    jax.block_until_ready(out)
    assert out.shape == (2, 10 * 2 * 2)
    assert bool(jnp.all(jnp.isfinite(out)))
    # Histogram mass conservation: each pixel deposits mag + (1-mag) = 1 across
    # bins, so every sample's pooled descriptor sums to H*W / pool**2 = 4.
    assert bool(jnp.allclose(jnp.sum(out, axis=1), 4.0, rtol=1e-3, atol=1e-3))

    # gx == gy == 0 edge case (torch puts the full unit weight in bin 0).
    x0 = jnp.zeros((1, 1, 16, 16), jnp.float32)
    out0 = hog_layer(x0)
    jax.block_until_ready(out0)
    ref0 = jnp.zeros((1, 40), jnp.float32).at[0, :4].set(1.0)
    assert bool(jnp.allclose(out0, ref0, atol=1e-6))

    print("KERNEL_OK")
</pallas_src>

<mosaic_0001>
module attributes {stable_mosaic.version = 11 : i64} {
  func.func @_hog_kernel(%arg0: i32, %arg1: memref<18x18x128xf32, #tpu.memory_space<vmem>>, %arg2: memref<40x128xf32, #tpu.memory_space<vmem>>) attributes {dimension_semantics = [#tpu.dimension_semantics<parallel>], iteration_bounds = array<i64: 1>, scalar_prefetch = 0 : i64, scratch_operands = 0 : i64, tpu.core_type = #tpu.core_type<tc>, window_params = [{transform_indices = @transform_0, window_bounds = array<i64: 18, 18, 128>}, {transform_indices = @transform_1, window_bounds = array<i64: 40, 128>}]} {
    %c0 = arith.constant 0 : index
    %c0_0 = arith.constant 0 : index
    %c0_1 = arith.constant 0 : index
    %0 = vector.load %arg1[%c0, %c0_0, %c0_1] : memref<18x18x128xf32, #tpu.memory_space<vmem>>, vector<18x16x128xf32>
    %c0_2 = arith.constant 0 : index
    %c2 = arith.constant 2 : index
    %c0_3 = arith.constant 0 : index
    %1 = vector.load %arg1[%c0_2, %c2, %c0_3] : memref<18x18x128xf32, #tpu.memory_space<vmem>>, vector<18x16x128xf32>
    %2 = arith.subf %0, %1 : vector<18x16x128xf32>
    %3 = vector.extract_strided_slice %2 {offsets = [0, 0, 0], sizes = [16, 16, 128], strides = [1, 1, 1]} : vector<18x16x128xf32> to vector<16x16x128xf32>
    %4 = vector.extract_strided_slice %2 {offsets = [1, 0, 0], sizes = [16, 16, 128], strides = [1, 1, 1]} : vector<18x16x128xf32> to vector<16x16x128xf32>
    %cst = arith.constant 2.000000e+00 : f32
    %5 = vector.broadcast %cst : f32 to vector<16x16x128xf32>
    %6 = arith.mulf %5, %4 : vector<16x16x128xf32>
    %7 = arith.addf %3, %6 : vector<16x16x128xf32>
    %8 = vector.extract_strided_slice %2 {offsets = [2, 0, 0], sizes = [16, 16, 128], strides = [1, 1, 1]} : vector<18x16x128xf32> to vector<16x16x128xf32>
    %9 = arith.addf %7, %8 : vector<16x16x128xf32>
    %c0_4 = arith.constant 0 : index
    %c0_5 = arith.constant 0 : index
    %c0_6 = arith.constant 0 : index
    %10 = vector.load %arg1[%c0_4, %c0_5, %c0_6] : memref<18x18x128xf32, #tpu.memory_space<vmem>>, vector<16x18x128xf32>
    %c2_7 = arith.constant 2 : index
    %c0_8 = arith.constant 0 : index
    %c0_9 = arith.constant 0 : index
    %11 = vector.load %arg1[%c2_7, %c0_8, %c0_9] : memref<18x18x128xf32, #tpu.memory_space<vmem>>, vector<16x18x128xf32>
    %12 = arith.subf %10, %11 : vector<16x18x128xf32>
    %13 = vector.extract_strided_slice %12 {offsets = [0, 0, 0], sizes = [16, 16, 128], strides = [1, 1, 1]} : vector<16x18x128xf32> to vector<16x16x128xf32>
    %14 = vector.extract_strided_slice %12 {offsets = [0, 1, 0], sizes = [16, 16, 128], strides = [1, 1, 1]} : vector<16x18x128xf32> to vector<16x16x128xf32>
    %cst_10 = arith.constant 2.000000e+00 : f32
    %15 = vector.broadcast %cst_10 : f32 to vector<16x16x128xf32>
    %16 = arith.mulf %15, %14 : vector<16x16x128xf32>
    %17 = arith.addf %13, %16 : vector<16x16x128xf32>
    %18 = vector.extract_strided_slice %12 {offsets = [0, 2, 0], sizes = [16, 16, 128], strides = [1, 1, 1]} : vector<16x18x128xf32> to vector<16x16x128xf32>
    %19 = arith.addf %17, %18 : vector<16x16x128xf32>
    %20 = arith.mulf %9, %9 : vector<16x16x128xf32>
    %21 = arith.mulf %19, %19 : vector<16x16x128xf32>
    %22 = arith.addf %20, %21 : vector<16x16x128xf32>
    %23 = math.sqrt %22 : vector<16x16x128xf32>
    %24 = math.absf %9 : vector<16x16x128xf32>
    %25 = math.absf %19 : vector<16x16x128xf32>
    %26 = arith.maximumf %25, %24 : vector<16x16x128xf32>
    %27 = arith.minimumf %25, %24 : vector<16x16x128xf32>
    %cst_11 = arith.constant 1.000000e-30 : f32
    %28 = vector.broadcast %cst_11 : f32 to vector<16x16x128xf32>
    %29 = arith.maximumf %26, %28 : vector<16x16x128xf32>
    %30 = arith.divf %27, %29 : vector<16x16x128xf32>
    %31 = arith.mulf %30, %30 : vector<16x16x128xf32>
    %cst_12 = arith.constant -1.172120e-02 : f32
    %32 = vector.broadcast %cst_12 : f32 to vector<16x16x128xf32>
    %33 = arith.mulf %31, %32 : vector<16x16x128xf32>
    %cst_13 = arith.constant 0.0526533201 : f32
    %34 = vector.broadcast %cst_13 : f32 to vector<16x16x128xf32>
    %35 = arith.addf %34, %33 : vector<16x16x128xf32>
    %36 = arith.mulf %31, %35 : vector<16x16x128xf32>
    %cst_14 = arith.constant -0.116432868 : f32
    %37 = vector.broadcast %cst_14 : f32 to vector<16x16x128xf32>
    %38 = arith.addf %37, %36 : vector<16x16x128xf32>
    %39 = arith.mulf %31, %38 : vector<16x16x128xf32>
    %cst_15 = arith.constant 0.193543464 : f32
    %40 = vector.broadcast %cst_15 : f32 to vector<16x16x128xf32>
    %41 = arith.addf %40, %39 : vector<16x16x128xf32>
    %42 = arith.mulf %31, %41 : vector<16x16x128xf32>
    %cst_16 = arith.constant -0.332623482 : f32
    %43 = vector.broadcast %cst_16 : f32 to vector<16x16x128xf32>
    %44 = arith.addf %43, %42 : vector<16x16x128xf32>
    %45 = arith.mulf %31, %44 : vector<16x16x128xf32>
    %cst_17 = arith.constant 0.999977231 : f32
    %46 = vector.broadcast %cst_17 : f32 to vector<16x16x128xf32>
    %47 = arith.addf %46, %45 : vector<16x16x128xf32>
    %48 = arith.mulf %30, %47 : vector<16x16x128xf32>
    %cst_18 = arith.constant 3.18309879 : f32
    %49 = vector.broadcast %cst_18 : f32 to vector<16x16x128xf32>
    %50 = arith.mulf %48, %49 : vector<16x16x128xf32>
    %51 = arith.cmpf ogt, %24, %25 : vector<16x16x128xf32>
    %cst_19 = arith.constant 5.000000e+00 : f32
    %52 = vector.broadcast %cst_19 : f32 to vector<16x16x128xf32>
    %53 = arith.subf %52, %50 : vector<16x16x128xf32>
    %54 = arith.select %51, %53, %50 : vector<16x16x128xi1>, vector<16x16x128xf32>
    %cst_20 = arith.constant 0.000000e+00 : f32
    %55 = vector.broadcast %cst_20 : f32 to vector<16x16x128xf32>
    %56 = arith.cmpf olt, %19, %55 : vector<16x16x128xf32>
    %cst_21 = arith.constant 1.000000e+01 : f32
    %57 = vector.broadcast %cst_21 : f32 to vector<16x16x128xf32>
    %58 = arith.subf %57, %54 : vector<16x16x128xf32>
    %59 = arith.select %56, %58, %54 : vector<16x16x128xi1>, vector<16x16x128xf32>
    %cst_22 = arith.constant 0.000000e+00 : f32
    %60 = vector.broadcast %cst_22 : f32 to vector<16x16x128xf32>
    %61 = arith.cmpf olt, %9, %60 : vector<16x16x128xf32>
    %cst_23 = arith.constant 0.000000e+00 : f32
    %62 = vector.broadcast %cst_23 : f32 to vector<16x16x128xf32>
    %63 = arith.subf %62, %59 : vector<16x16x128xf32>
    %64 = arith.select %61, %63, %59 : vector<16x16x128xi1>, vector<16x16x128xf32>
    %cst_24 = arith.constant -1.000000e+01 : f32
    %cst_25 = arith.constant 1.000000e+01 : f32
    %65 = vector.broadcast %cst_24 : f32 to vector<16x16x128xf32>
    %66 = arith.maximumf %65, %64 : vector<16x16x128xf32>
    %67 = vector.broadcast %cst_25 : f32 to vector<16x16x128xf32>
    %68 = arith.minimumf %67, %66 : vector<16x16x128xf32>
    %69 = arith.fptosi %68 : vector<16x16x128xf32> to vector<16x16x128xi32>
    %70 = arith.sitofp %69 : vector<16x16x128xi32> to vector<16x16x128xf32>
    %71 = arith.cmpf oeq, %68, %70 : vector<16x16x128xf32>
    %72 = arith.cmpf olt, %68, %70 : vector<16x16x128xf32>
    %73 = arith.extui %72 : vector<16x16x128xi1> to vector<16x16x128xi32>
    %74 = arith.subi %69, %73 : vector<16x16x128xi32>
    %c0_i32 = arith.constant 0 : i32
    %75 = vector.broadcast %c0_i32 : i32 to vector<16x16x128xi32>
    %76 = arith.cmpi slt, %74, %75 : vector<16x16x128xi32>
    %c10_i32 = arith.constant 10 : i32
    %77 = vector.broadcast %c10_i32 : i32 to vector<16x16x128xi32>
    %78 = arith.addi %74, %77 : vector<16x16x128xi32>
    %79 = arith.select %76, %78, %74 : vector<16x16x128xi1>, vector<16x16x128xi32>
    %c10_i32_26 = arith.constant 10 : i32
    %80 = vector.broadcast %c10_i32_26 : i32 to vector<16x16x128xi32>
    %81 = arith.cmpi sge, %79, %80 : vector<16x16x128xi32>
    %c10_i32_27 = arith.constant 10 : i32
    %82 = vector.broadcast %c10_i32_27 : i32 to vector<16x16x128xi32>
    %83 = arith.subi %79, %82 : vector<16x16x128xi32>
    %84 = arith.select %81, %83, %79 : vector<16x16x128xi1>, vector<16x16x128xi32>
    %cst_28 = arith.constant 1.000000e+00 : f32
    %85 = vector.broadcast %cst_28 : f32 to vector<16x16x128xf32>
    %86 = arith.select %71, %85, %23 : vector<16x16x128xi1>, vector<16x16x128xf32>
    %cst_29 = arith.constant 1.000000e+00 : f32
    %87 = vector.broadcast %cst_29 : f32 to vector<16x16x128xf32>
    %88 = arith.subf %87, %23 : vector<16x16x128xf32>
    %cst_30 = arith.constant 0.000000e+00 : f32
    %89 = vector.broadcast %cst_30 : f32 to vector<16x16x128xf32>
    %90 = arith.select %71, %89, %88 : vector<16x16x128xi1>, vector<16x16x128xf32>
    %c0_i32_31 = arith.constant 0 : i32
    %91 = vector.broadcast %c0_i32_31 : i32 to vector<16x16x128xi32>
    %92 = arith.cmpi eq, %84, %91 : vector<16x16x128xi32>
    %c9_i32 = arith.constant 9 : i32
    %93 = vector.broadcast %c9_i32 : i32 to vector<16x16x128xi32>
    %94 = arith.cmpi eq, %84, %93 : vector<16x16x128xi32>
    %cst_32 = arith.constant 0.000000e+00 : f32
    %95 = vector.broadcast %cst_32 : f32 to vector<16x16x128xf32>
    %96 = arith.select %92, %86, %95 : vector<16x16x128xi1>, vector<16x16x128xf32>
    %cst_33 = arith.constant 0.000000e+00 : f32
    %97 = vector.broadcast %cst_33 : f32 to vector<16x16x128xf32>
    %98 = arith.select %94, %90, %97 : vector<16x16x128xi1>, vector<16x16x128xf32>
    %99 = arith.addf %96, %98 : vector<16x16x128xf32>
    %100 = vector.shape_cast %99 : vector<16x16x128xf32> to vector<2x8x16x128xf32>
    %cst_34 = arith.constant dense<0.000000e+00> : vector<2x16x128xf32>
    %101 = vector.multi_reduction <add>, %100, %cst_34 [1] : vector<2x8x16x128xf32> to vector<2x16x128xf32>
    %102 = vector.shape_cast %101 : vector<2x16x128xf32> to vector<4x8x128xf32>
    %cst_35 = arith.constant dense<0.000000e+00> : vector<4x128xf32>
    %103 = vector.multi_reduction <add>, %102, %cst_35 [1] : vector<4x8x128xf32> to vector<4x128xf32>
    %cst_36 = arith.constant 1.562500e-02 : f32
    %104 = vector.broadcast %cst_36 : f32 to vector<4x128xf32>
    %105 = arith.mulf %103, %104 : vector<4x128xf32>
    %c0_37 = arith.constant 0 : index
    %c0_38 = arith.constant 0 : index
    %106 = vector.load %arg2[%c0_37, %c0_38] : memref<40x128xf32, #tpu.memory_space<vmem>>, vector<4x128xf32>
    tpu.vector_store %arg2[%c0_37, %c0_38], %105 {strides = array<i32>} : memref<40x128xf32, #tpu.memory_space<vmem>>, vector<4x128xf32>,
    %c1_i32 = arith.constant 1 : i32
    %107 = vector.broadcast %c1_i32 : i32 to vector<16x16x128xi32>
    %108 = arith.cmpi eq, %84, %107 : vector<16x16x128xi32>
    %c0_i32_39 = arith.constant 0 : i32
    %109 = vector.broadcast %c0_i32_39 : i32 to vector<16x16x128xi32>
    %110 = arith.cmpi eq, %84, %109 : vector<16x16x128xi32>
    %cst_40 = arith.constant 0.000000e+00 : f32
    %111 = vector.broadcast %cst_40 : f32 to vector<16x16x128xf32>
    %112 = arith.select %108, %86, %111 : vector<16x16x128xi1>, vector<16x16x128xf32>
    %cst_41 = arith.constant 0.000000e+00 : f32
    %113 = vector.broadcast %cst_41 : f32 to vector<16x16x128xf32>
    %114 = arith.select %110, %90, %113 : vector<16x16x128xi1>, vector<16x16x128xf32>
    %115 = arith.addf %112, %114 : vector<16x16x128xf32>
    %116 = vector.shape_cast %115 : vector<16x16x128xf32> to vector<2x8x16x128xf32>
    %cst_42 = arith.constant dense<0.000000e+00> : vector<2x16x128xf32>
    %117 = vector.multi_reduction <add>, %116, %cst_42 [1] : vector<2x8x16x128xf32> to vector<2x16x128xf32>
    %118 = vector.shape_cast %117 : vector<2x16x128xf32> to vector<4x8x128xf32>
    %cst_43 = arith.constant dense<0.000000e+00> : vector<4x128xf32>
    %119 = vector.multi_reduction <add>, %118, %cst_43 [1] : vector<4x8x128xf32> to vector<4x128xf32>
    %cst_44 = arith.constant 1.562500e-02 : f32
    %120 = vector.broadcast %cst_44 : f32 to vector<4x128xf32>
    %121 = arith.mulf %119, %120 : vector<4x128xf32>
    %c4 = arith.constant 4 : index
    %c0_45 = arith.constant 0 : index
    %122 = vector.load %arg2[%c4, %c0_45] : memref<40x128xf32, #tpu.memory_space<vmem>>, vector<4x128xf32>
    tpu.vector_store %arg2[%c4, %c0_45], %121 {strides = array<i32>} : memref<40x128xf32, #tpu.memory_space<vmem>>, vector<4x128xf32>,
    %c2_i32 = arith.constant 2 : i32
    %123 = vector.broadcast %c2_i32 : i32 to vector<16x16x128xi32>
    %124 = arith.cmpi eq, %84, %123 : vector<16x16x128xi32>
    %c1_i32_46 = arith.constant 1 : i32
    %125 = vector.broadcast %c1_i32_46 : i32 to vector<16x16x128xi32>
    %126 = arith.cmpi eq, %84, %125 : vector<16x16x128xi32>
    %cst_47 = arith.constant 0.000000e+00 : f32
    %127 = vector.broadcast %cst_47 : f32 to vector<16x16x128xf32>
    %128 = arith.select %124, %86, %127 : vector<16x16x128xi1>, vector<16x16x128xf32>
    %cst_48 = arith.constant 0.000000e+00 : f32
    %129 = vector.broadcast %cst_48 : f32 to vector<16x16x128xf32>
    %130 = arith.select %126, %90, %129 : vector<16x16x128xi1>, vector<16x16x128xf32>
    %131 = arith.addf %128, %130 : vector<16x16x128xf32>
    %132 = vector.shape_cast %131 : vector<16x16x128xf32> to vector<2x8x16x128xf32>
    %cst_49 = arith.constant dense<0.000000e+00> : vector<2x16x128xf32>
    %133 = vector.multi_reduction <add>, %132, %cst_49 [1] : vector<2x8x16x128xf32> to vector<2x16x128xf32>
    %134 = vector.shape_cast %133 : vector<2x16x128xf32> to vector<4x8x128xf32>
    %cst_50 = arith.constant dense<0.000000e+00> : vector<4x128xf32>
    %135 = vector.multi_reduction <add>, %134, %cst_50 [1] : vector<4x8x128xf32> to vector<4x128xf32>
    %cst_51 = arith.constant 1.562500e-02 : f32
    %136 = vector.broadcast %cst_51 : f32 to vector<4x128xf32>
    %137 = arith.mulf %135, %136 : vector<4x128xf32>
    %c8 = arith.constant 8 : index
    %c0_52 = arith.constant 0 : index
    %138 = vector.load %arg2[%c8, %c0_52] : memref<40x128xf32, #tpu.memory_space<vmem>>, vector<4x128xf32>
    tpu.vector_store %arg2[%c8, %c0_52], %137 {strides = array<i32>} : memref<40x128xf32, #tpu.memory_space<vmem>>, vector<4x128xf32>,
    %c3_i32 = arith.constant 3 : i32
    %139 = vector.broadcast %c3_i32 : i32 to vector<16x16x128xi32>
    %140 = arith.cmpi eq, %84, %139 : vector<16x16x128xi32>
    %c2_i32_53 = arith.constant 2 : i32
    %141 = vector.broadcast %c2_i32_53 : i32 to vector<16x16x128xi32>
    %142 = arith.cmpi eq, %84, %141 : vector<16x16x128xi32>
    %cst_54 = arith.constant 0.000000e+00 : f32
    %143 = vector.broadcast %cst_54 : f32 to vector<16x16x128xf32>
    %144 = arith.select %140, %86, %143 : vector<16x16x128xi1>, vector<16x16x128xf32>
    %cst_55 = arith.constant 0.000000e+00 : f32
    %145 = vector.broadcast %cst_55 : f32 to vector<16x16x128xf32>
    %146 = arith.select %142, %90, %145 : vector<16x16x128xi1>, vector<16x16x128xf32>
    %147 = arith.addf %144, %146 : vector<16x16x128xf32>
    %148 = vector.shape_cast %147 : vector<16x16x128xf32> to vector<2x8x16x128xf32>
    %cst_56 = arith.constant dense<0.000000e+00> : vector<2x16x128xf32>
    %149 = vector.multi_reduction <add>, %148, %cst_56 [1] : vector<2x8x16x128xf32> to vector<2x16x128xf32>
    %150 = vector.shape_cast %149 : vector<2x16x128xf32> to vector<4x8x128xf32>
    %cst_57 = arith.constant dense<0.000000e+00> : vector<4x128xf32>
    %151 = vector.multi_reduction <add>, %150, %cst_57 [1] : vector<4x8x128xf32> to vector<4x128xf32>
    %cst_58 = arith.constant 1.562500e-02 : f32
    %152 = vector.broadcast %cst_58 : f32 to vector<4x128xf32>
    %153 = arith.mulf %151, %152 : vector<4x128xf32>
    %c12 = arith.constant 12 : index
    %c0_59 = arith.constant 0 : index
    %154 = vector.load %arg2[%c12, %c0_59] : memref<40x128xf32, #tpu.memory_space<vmem>>, vector<4x128xf32>
    tpu.vector_store %arg2[%c12, %c0_59], %153 {strides = array<i32>} : memref<40x128xf32, #tpu.memory_space<vmem>>, vector<4x128xf32>,
    %c4_i32 = arith.constant 4 : i32
    %155 = vector.broadcast %c4_i32 : i32 to vector<16x16x128xi32>
    %156 = arith.cmpi eq, %84, %155 : vector<16x16x128xi32>
    %c3_i32_60 = arith.constant 3 : i32
    %157 = vector.broadcast %c3_i32_60 : i32 to vector<16x16x128xi32>
    %158 = arith.cmpi eq, %84, %157 : vector<16x16x128xi32>
    %cst_61 = arith.constant 0.000000e+00 : f32
    %159 = vector.broadcast %cst_61 : f32 to vector<16x16x128xf32>
    %160 = arith.select %156, %86, %159 : vector<16x16x128xi1>, vector<16x16x128xf32>
    %cst_62 = arith.constant 0.000000e+00 : f32
    %161 = vector.broadcast %cst_62 : f32 to vector<16x16x128xf32>
    %162 = arith.select %158, %90, %161 : vector<16x16x128xi1>, vector<16x16x128xf32>
    %163 = arith.addf %160, %162 : vector<16x16x128xf32>
    %164 = vector.shape_cast %163 : vector<16x16x128xf32> to vector<2x8x16x128xf32>
    %cst_63 = arith.constant dense<0.000000e+00> : vector<2x16x128xf32>
    %165 = vector.multi_reduction <add>, %164, %cst_63 [1] : vector<2x8x16x128xf32> to vector<2x16x128xf32>
    %166 = vector.shape_cast %165 : vector<2x16x128xf32> to vector<4x8x128xf32>
    %cst_64 = arith.constant dense<0.000000e+00> : vector<4x128xf32>
    %167 = vector.multi_reduction <add>, %166, %cst_64 [1] : vector<4x8x128xf32> to vector<4x128xf32>
    %cst_65 = arith.constant 1.562500e-02 : f32
    %168 = vector.broadcast %cst_65 : f32 to vector<4x128xf32>
    %169 = arith.mulf %167, %168 : vector<4x128xf32>
    %c16 = arith.constant 16 : index
    %c0_66 = arith.constant 0 : index
    %170 = vector.load %arg2[%c16, %c0_66] : memref<40x128xf32, #tpu.memory_space<vmem>>, vector<4x128xf32>
    tpu.vector_store %arg2[%c16, %c0_66], %169 {strides = array<i32>} : memref<40x128xf32, #tpu.memory_space<vmem>>, vector<4x128xf32>,
    %c5_i32 = arith.constant 5 : i32
    %171 = vector.broadcast %c5_i32 : i32 to vector<16x16x128xi32>
    %172 = arith.cmpi eq, %84, %171 : vector<16x16x128xi32>
    %c4_i32_67 = arith.constant 4 : i32
    %173 = vector.broadcast %c4_i32_67 : i32 to vector<16x16x128xi32>
    %174 = arith.cmpi eq, %84, %173 : vector<16x16x128xi32>
    %cst_68 = arith.constant 0.000000e+00 : f32
    %175 = vector.broadcast %cst_68 : f32 to vector<16x16x128xf32>
    %176 = arith.select %172, %86, %175 : vector<16x16x128xi1>, vector<16x16x128xf32>
    %cst_69 = arith.constant 0.000000e+00 : f32
    %177 = vector.broadcast %cst_69 : f32 to vector<16x16x128xf32>
    %178 = arith.select %174, %90, %177 : vector<16x16x128xi1>, vector<16x16x128xf32>
    %179 = arith.addf %176, %178 : vector<16x16x128xf32>
    %180 = vector.shape_cast %179 : vector<16x16x128xf32> to vector<2x8x16x128xf32>
    %cst_70 = arith.constant dense<0.000000e+00> : vector<2x16x128xf32>
    %181 = vector.multi_reduction <add>, %180, %cst_70 [1] : vector<2x8x16x128xf32> to vector<2x16x128xf32>
    %182 = vector.shape_cast %181 : vector<2x16x128xf32> to vector<4x8x128xf32>
    %cst_71 = arith.constant dense<0.000000e+00> : vector<4x128xf32>
    %183 = vector.multi_reduction <add>, %182, %cst_71 [1] : vector<4x8x128xf32> to vector<4x128xf32>
    %cst_72 = arith.constant 1.562500e-02 : f32
    %184 = vector.broadcast %cst_72 : f32 to vector<4x128xf32>
    %185 = arith.mulf %183, %184 : vector<4x128xf32>
    %c20 = arith.constant 20 : index
    %c0_73 = arith.constant 0 : index
    %186 = vector.load %arg2[%c20, %c0_73] : memref<40x128xf32, #tpu.memory_space<vmem>>, vector<4x128xf32>
    tpu.vector_store %arg2[%c20, %c0_73], %185 {strides = array<i32>} : memref<40x128xf32, #tpu.memory_space<vmem>>, vector<4x128xf32>,
    %c6_i32 = arith.constant 6 : i32
    %187 = vector.broadcast %c6_i32 : i32 to vector<16x16x128xi32>
    %188 = arith.cmpi eq, %84, %187 : vector<16x16x128xi32>
    %c5_i32_74 = arith.constant 5 : i32
    %189 = vector.broadcast %c5_i32_74 : i32 to vector<16x16x128xi32>
    %190 = arith.cmpi eq, %84, %189 : vector<16x16x128xi32>
    %cst_75 = arith.constant 0.000000e+00 : f32
    %191 = vector.broadcast %cst_75 : f32 to vector<16x16x128xf32>
    %192 = arith.select %188, %86, %191 : vector<16x16x128xi1>, vector<16x16x128xf32>
    %cst_76 = arith.constant 0.000000e+00 : f32
    %193 = vector.broadcast %cst_76 : f32 to vector<16x16x128xf32>
    %194 = arith.select %190, %90, %193 : vector<16x16x128xi1>, vector<16x16x128xf32>
    %195 = arith.addf %192, %194 : vector<16x16x128xf32>
    %196 = vector.shape_cast %195 : vector<16x16x128xf32> to vector<2x8x16x128xf32>
    %cst_77 = arith.constant dense<0.000000e+00> : vector<2x16x128xf32>
    %197 = vector.multi_reduction <add>, %196, %cst_77 [1] : vector<2x8x16x128xf32> to vector<2x16x128xf32>
    %198 = vector.shape_cast %197 : vector<2x16x128xf32> to vector<4x8x128xf32>
    %cst_78 = arith.constant dense<0.000000e+00> : vector<4x128xf32>
    %199 = vector.multi_reduction <add>, %198, %cst_78 [1] : vector<4x8x128xf32> to vector<4x128xf32>
    %cst_79 = arith.constant 1.562500e-02 : f32
    %200 = vector.broadcast %cst_79 : f32 to vector<4x128xf32>
    %201 = arith.mulf %199, %200 : vector<4x128xf32>
    %c24 = arith.constant 24 : index
    %c0_80 = arith.constant 0 : index
    %202 = vector.load %arg2[%c24, %c0_80] : memref<40x128xf32, #tpu.memory_space<vmem>>, vector<4x128xf32>
    tpu.vector_store %arg2[%c24, %c0_80], %201 {strides = array<i32>} : memref<40x128xf32, #tpu.memory_space<vmem>>, vector<4x128xf32>,
    %c7_i32 = arith.constant 7 : i32
    %203 = vector.broadcast %c7_i32 : i32 to vector<16x16x128xi32>
    %204 = arith.cmpi eq, %84, %203 : vector<16x16x128xi32>
    %c6_i32_81 = arith.constant 6 : i32
    %205 = vector.broadcast %c6_i32_81 : i32 to vector<16x16x128xi32>
    %206 = arith.cmpi eq, %84, %205 : vector<16x16x128xi32>
    %cst_82 = arith.constant 0.000000e+00 : f32
    %207 = vector.broadcast %cst_82 : f32 to vector<16x16x128xf32>
    %208 = arith.select %204, %86, %207 : vector<16x16x128xi1>, vector<16x16x128xf32>
    %cst_83 = arith.constant 0.000000e+00 : f32
    %209 = vector.broadcast %cst_83 : f32 to vector<16x16x128xf32>
    %210 = arith.select %206, %90, %209 : vector<16x16x128xi1>, vector<16x16x128xf32>
    %211 = arith.addf %208, %210 : vector<16x16x128xf32>
    %212 = vector.shape_cast %211 : vector<16x16x128xf32> to vector<2x8x16x128xf32>
    %cst_84 = arith.constant dense<0.000000e+00> : vector<2x16x128xf32>
    %213 = vector.multi_reduction <add>, %212, %cst_84 [1] : vector<2x8x16x128xf32> to vector<2x16x128xf32>
    %214 = vector.shape_cast %213 : vector<2x16x128xf32> to vector<4x8x128xf32>
    %cst_85 = arith.constant dense<0.000000e+00> : vector<4x128xf32>
    %215 = vector.multi_reduction <add>, %214, %cst_85 [1] : vector<4x8x128xf32> to vector<4x128xf32>
    %cst_86 = arith.constant 1.562500e-02 : f32
    %216 = vector.broadcast %cst_86 : f32 to vector<4x128xf32>
    %217 = arith.mulf %215, %216 : vector<4x128xf32>
    %c28 = arith.constant 28 : index
    %c0_87 = arith.constant 0 : index
    %218 = vector.load %arg2[%c28, %c0_87] : memref<40x128xf32, #tpu.memory_space<vmem>>, vector<4x128xf32>
    tpu.vector_store %arg2[%c28, %c0_87], %217 {strides = array<i32>} : memref<40x128xf32, #tpu.memory_space<vmem>>, vector<4x128xf32>,
    %c8_i32 = arith.constant 8 : i32
    %219 = vector.broadcast %c8_i32 : i32 to vector<16x16x128xi32>
    %220 = arith.cmpi eq, %84, %219 : vector<16x16x128xi32>
    %c7_i32_88 = arith.constant 7 : i32
    %221 = vector.broadcast %c7_i32_88 : i32 to vector<16x16x128xi32>
    %222 = arith.cmpi eq, %84, %221 : vector<16x16x128xi32>
    %cst_89 = arith.constant 0.000000e+00 : f32
    %223 = vector.broadcast %cst_89 : f32 to vector<16x16x128xf32>
    %224 = arith.select %220, %86, %223 : vector<16x16x128xi1>, vector<16x16x128xf32>
    %cst_90 = arith.constant 0.000000e+00 : f32
    %225 = vector.broadcast %cst_90 : f32 to vector<16x16x128xf32>
    %226 = arith.select %222, %90, %225 : vector<16x16x128xi1>, vector<16x16x128xf32>
    %227 = arith.addf %224, %226 : vector<16x16x128xf32>
    %228 = vector.shape_cast %227 : vector<16x16x128xf32> to vector<2x8x16x128xf32>
    %cst_91 = arith.constant dense<0.000000e+00> : vector<2x16x128xf32>
    %229 = vector.multi_reduction <add>, %228, %cst_91 [1] : vector<2x8x16x128xf32> to vector<2x16x128xf32>
    %230 = vector.shape_cast %229 : vector<2x16x128xf32> to vector<4x8x128xf32>
    %cst_92 = arith.constant dense<0.000000e+00> : vector<4x128xf32>
    %231 = vector.multi_reduction <add>, %230, %cst_92 [1] : vector<4x8x128xf32> to vector<4x128xf32>
    %cst_93 = arith.constant 1.562500e-02 : f32
    %232 = vector.broadcast %cst_93 : f32 to vector<4x128xf32>
    %233 = arith.mulf %231, %232 : vector<4x128xf32>
    %c32 = arith.constant 32 : index
    %c0_94 = arith.constant 0 : index
    %234 = vector.load %arg2[%c32, %c0_94] : memref<40x128xf32, #tpu.memory_space<vmem>>, vector<4x128xf32>
    tpu.vector_store %arg2[%c32, %c0_94], %233 {strides = array<i32>} : memref<40x128xf32, #tpu.memory_space<vmem>>, vector<4x128xf32>,
    %c9_i32_95 = arith.constant 9 : i32
    %235 = vector.broadcast %c9_i32_95 : i32 to vector<16x16x128xi32>
    %236 = arith.cmpi eq, %84, %235 : vector<16x16x128xi32>
    %c8_i32_96 = arith.constant 8 : i32
    %237 = vector.broadcast %c8_i32_96 : i32 to vector<16x16x128xi32>
    %238 = arith.cmpi eq, %84, %237 : vector<16x16x128xi32>
    %cst_97 = arith.constant 0.000000e+00 : f32
    %239 = vector.broadcast %cst_97 : f32 to vector<16x16x128xf32>
    %240 = arith.select %236, %86, %239 : vector<16x16x128xi1>, vector<16x16x128xf32>
    %cst_98 = arith.constant 0.000000e+00 : f32
    %241 = vector.broadcast %cst_98 : f32 to vector<16x16x128xf32>
    %242 = arith.select %238, %90, %241 : vector<16x16x128xi1>, vector<16x16x128xf32>
    %243 = arith.addf %240, %242 : vector<16x16x128xf32>
    %244 = vector.shape_cast %243 : vector<16x16x128xf32> to vector<2x8x16x128xf32>
    %cst_99 = arith.constant dense<0.000000e+00> : vector<2x16x128xf32>
    %245 = vector.multi_reduction <add>, %244, %cst_99 [1] : vector<2x8x16x128xf32> to vector<2x16x128xf32>
    %246 = vector.shape_cast %245 : vector<2x16x128xf32> to vector<4x8x128xf32>
    %cst_100 = arith.constant dense<0.000000e+00> : vector<4x128xf32>
    %247 = vector.multi_reduction <add>, %246, %cst_100 [1] : vector<4x8x128xf32> to vector<4x128xf32>
    %cst_101 = arith.constant 1.562500e-02 : f32
    %248 = vector.broadcast %cst_101 : f32 to vector<4x128xf32>
    %249 = arith.mulf %247, %248 : vector<4x128xf32>
    %c36 = arith.constant 36 : index
    %c0_102 = arith.constant 0 : index
    %250 = vector.load %arg2[%c36, %c0_102] : memref<40x128xf32, #tpu.memory_space<vmem>>, vector<4x128xf32>
    tpu.vector_store %arg2[%c36, %c0_102], %249 {strides = array<i32>} : memref<40x128xf32, #tpu.memory_space<vmem>>, vector<4x128xf32>,
    return
  }
  func.func @transform_0(%arg0: i32) -> (i32, i32, i32) {
    %c0_i32 = arith.constant 0 : i32
    %c0_i32_0 = arith.constant 0 : i32
    %c0_i32_1 = arith.constant 0 : i32
    return %c0_i32, %c0_i32_0, %arg0 : i32, i32, i32
  }
  func.func @transform_1(%arg0: i32) -> (i32, i32) {
    %c0_i32 = arith.constant 0 : i32
    %c0_i32_0 = arith.constant 0 : i32
    return %c0_i32, %arg0 : i32, i32
  }
}

</mosaic_0001>

<llo_original>
// kernel: hog_layer.1
$region0: #{hog_layer.1}
  #allocation0 [shape = 'u32[]', space=smem, size = 0x4, offset = 0x4, fixed_abs, tag = 'smem constant byte address 0x4 - core index']
  #allocation1 [shape = 'u32[144,128]{1,0:T(1,128)}', space=vmem, size = 0x12000, scoped, tag = 'internal scratch']
  %s0 = inlined_call_operand.vmem [shape: f32[18,18,128], index: 0, kind: input, shape index: {}]
  %s1 = inlined_call_operand.vmem [shape: f32[40,128], index: 1, kind: output, shape index: {}]
  %s2 = sld [smem:[#allocation0]]
  $region14: #{hog_layer.1} parent=0
    _
  %s4 = ssub.s32 1, %s2
  %s5 = scalar_select 0, %s4, %s2
  // Predicated region
  $region2: #{hog_layer.1} parent=0 // pred_check
    _
  $region3: #{hog_layer.1} parent=0 // pred_check_branch
    %7 = sbr.rel (0) target = $region5
  $region4: #{hog_layer.1} parent=0 // pred_region
    _
  $region5: #{hog_layer.1} parent=0 // pred_fallthru
    _
  %v8 = vld [vmem:[%s0] sm:$0xff]
  %v9 = vld [vmem:[%s0 + $0x8] sm:$0xff]
  %v10 = vld [vmem:[%s0 + $0x18] sm:$0xff]
  %v11 = vld [vmem:[%s0 + $0x20] sm:$0xff]
  %v12 = vld [vmem:[%s0 + $0x30] sm:$0xff]
  %v13 = vld [vmem:[%s0 + $0x38] sm:$0xff]
  %v14 = vld [vmem:[%s0 + $0x48] sm:$0xff]
  %v15 = vld [vmem:[%s0 + $0x50] sm:$0xff]
  %v16 = vld [vmem:[%s0 + $0x60] sm:$0xff]
  %v17 = vld [vmem:[%s0 + $0x68] sm:$0xff]
  %v18 = vld [vmem:[%s0 + $0x78] sm:$0xff]
  %v19 = vld [vmem:[%s0 + $0x80] sm:$0xff]
  %v20 = vld [vmem:[%s0 + $0x90] sm:$0xff]
  %v21 = vld [vmem:[%s0 + $0x98] sm:$0xff]
  %v22 = vld [vmem:[%s0 + $0xa8] sm:$0xff]
  %v23 = vld [vmem:[%s0 + $0xb0] sm:$0xff]
  %v24 = vld [vmem:[%s0 + $0xc0] sm:$0xff]
  %v25 = vld [vmem:[%s0 + $0xc8] sm:$0xff]
  %v26 = vld [vmem:[%s0 + $0xd8] sm:$0xff]
  %v27 = vld [vmem:[%s0 + $0xe0] sm:$0xff]
  %v28 = vld [vmem:[%s0 + $0xf0] sm:$0xff]
  %v29 = vld [vmem:[%s0 + $0xf8] sm:$0xff]
  %v30 = vld [vmem:[%s0 + $0x108] sm:$0xff]
  %v31 = vld [vmem:[%s0 + $0x110] sm:$0xff]
  %v32 = vld [vmem:[%s0 + $0x120] sm:$0xff]
  %v33 = vld [vmem:[%s0 + $0x128] sm:$0xff]
  %v34 = vld [vmem:[%s0 + $0x138] sm:$0xff]
  %v35 = vld [vmem:[%s0 + $0x140] sm:$0xff]
  %v36 = vld [vmem:[%s0 + $0x150] sm:$0xff]
  %v37 = vld [vmem:[%s0 + $0x158] sm:$0xff]
  %v38 = vld [vmem:[%s0 + $0x168] sm:$0xff]
  %v39 = vld [vmem:[%s0 + $0x170] sm:$0xff]
  %v40 = vld [vmem:[%s0 + $0x180] sm:$0xff]
  %v41 = vld [vmem:[%s0 + $0x188] sm:$0xff]
  %v42 = vld [vmem:[%s0 + $0x198] sm:$0xff]
  %v43 = vld [vmem:[%s0 + $0x1a0] sm:$0xff]
  %v44 = vld [vmem:[%s0 + $0x2] sm:$0xff]
  %v45 = vld [vmem:[%s0 + $0xa] sm:$0xff]
  %v46 = vld [vmem:[%s0 + $0x1a] sm:$0xff]
  %v47 = vld [vmem:[%s0 + $0x22] sm:$0xff]
  %v48 = vld [vmem:[%s0 + $0x32] sm:$0xff]
  %v49 = vld [vmem:[%s0 + $0x3a] sm:$0xff]
  %v50 = vld [vmem:[%s0 + $0x4a] sm:$0xff]
  %v51 = vld [vmem:[%s0 + $0x52] sm:$0xff]
  %v52 = vld [vmem:[%s0 + $0x62] sm:$0xff]
  %v53 = vld [vmem:[%s0 + $0x6a] sm:$0xff]
  %v54 = vld [vmem:[%s0 + $0x7a] sm:$0xff]
  %v55 = vld [vmem:[%s0 + $0x82] sm:$0xff]
  %v56 = vld [vmem:[%s0 + $0x92] sm:$0xff]
  %v57 = vld [vmem:[%s0 + $0x9a] sm:$0xff]
  %v58 = vld [vmem:[%s0 + $0xaa] sm:$0xff]
  %v59 = vld [vmem:[%s0 + $0xb2] sm:$0xff]
  %v60 = vld [vmem:[%s0 + $0xc2] sm:$0xff]
  %v61 = vld [vmem:[%s0 + $0xca] sm:$0xff]
  %v62 = vld [vmem:[%s0 + $0xda] sm:$0xff]
  %v63 = vld [vmem:[%s0 + $0xe2] sm:$0xff]
  %v64 = vld [vmem:[%s0 + $0xf2] sm:$0xff]
  %v65 = vld [vmem:[%s0 + $0xfa] sm:$0xff]
  %v66 = vld [vmem:[%s0 + $0x10a] sm:$0xff]
  %v67 = vld [vmem:[%s0 + $0x112] sm:$0xff]
  %v68 = vld [vmem:[%s0 + $0x122] sm:$0xff]
  %v69 = vld [vmem:[%s0 + $0x12a] sm:$0xff]
  %v70 = vld [vmem:[%s0 + $0x13a] sm:$0xff]
  %v71 = vld [vmem:[%s0 + $0x142] sm:$0xff]
  %v72 = vld [vmem:[%s0 + $0x152] sm:$0xff]
  %v73 = vld [vmem:[%s0 + $0x15a] sm:$0xff]
  %v74 = vld [vmem:[%s0 + $0x16a] sm:$0xff]
  %v75 = vld [vmem:[%s0 + $0x172] sm:$0xff]
  %v76 = vld [vmem:[%s0 + $0x182] sm:$0xff]
  %v77 = vld [vmem:[%s0 + $0x18a] sm:$0xff]
  %v78 = vld [vmem:[%s0 + $0x19a] sm:$0xff]
  %v79 = vld [vmem:[%s0 + $0x1a2] sm:$0xff]
  %v80 = vsub.f32 %v8, %v44
  %v81 = vsub.f32 %v9, %v45
  %v82 = vsub.f32 %v10, %v46
  %v83 = vsub.f32 %v11, %v47
  %v84 = vsub.f32 %v12, %v48
  %v85 = vsub.f32 %v13, %v49
  %v86 = vsub.f32 %v14, %v50
  %v87 = vsub.f32 %v15, %v51
  %v88 = vsub.f32 %v16, %v52
  %v89 = vsub.f32 %v17, %v53
  %v90 = vsub.f32 %v18, %v54
  %v91 = vsub.f32 %v19, %v55
  %v92 = vsub.f32 %v20, %v56
  %v93 = vsub.f32 %v21, %v57
  %v94 = vsub.f32 %v22, %v58
  %v95 = vsub.f32 %v23, %v59
  %v96 = vsub.f32 %v24, %v60
  %v97 = vsub.f32 %v25, %v61
  %v98 = vsub.f32 %v26, %v62
  %v99 = vsub.f32 %v27, %v63
  %v100 = vsub.f32 %v28, %v64
  %v101 = vsub.f32 %v29, %v65
  %v102 = vsub.f32 %v30, %v66
  %v103 = vsub.f32 %v31, %v67
  %v104 = vsub.f32 %v32, %v68
  %v105 = vsub.f32 %v33, %v69
  %v106 = vsub.f32 %v34, %v70
  %v107 = vsub.f32 %v35, %v71
  %v108 = vsub.f32 %v36, %v72
  %v109 = vsub.f32 %v37, %v73
  %v110 = vsub.f32 %v38, %v74
  %v111 = vsub.f32 %v39, %v75
  %v112 = vsub.f32 %v40, %v76
  %v113 = vsub.f32 %v41, %v77
  %v114 = vsub.f32 %v42, %v78
  %v115 = vsub.f32 %v43, %v79
  %v116 = vmul.f32 %v82, 2.0
  %v117 = vmul.f32 %v83, 2.0
  %v118 = vmul.f32 %v84, 2.0
  %v119 = vmul.f32 %v85, 2.0
  %v120 = vmul.f32 %v86, 2.0
  %v121 = vmul.f32 %v87, 2.0
  %v122 = vmul.f32 %v88, 2.0
  %v123 = vmul.f32 %v89, 2.0
  %v124 = vmul.f32 %v90, 2.0
  %v125 = vmul.f32 %v91, 2.0
  %v126 = vmul.f32 %v92, 2.0
  %v127 = vmul.f32 %v93, 2.0
  %v128 = vmul.f32 %v94, 2.0
  %v129 = vmul.f32 %v95, 2.0
  %v130 = vmul.f32 %v96, 2.0
  %v131 = vmul.f32 %v97, 2.0
  %v132 = vmul.f32 %v98, 2.0
  %v133 = vmul.f32 %v99, 2.0
  %v134 = vmul.f32 %v100, 2.0
  %v135 = vmul.f32 %v101, 2.0
  %v136 = vmul.f32 %v102, 2.0
  %v137 = vmul.f32 %v103, 2.0
  %v138 = vmul.f32 %v104, 2.0
  %v139 = vmul.f32 %v105, 2.0
  %v140 = vmul.f32 %v106, 2.0
  %v141 = vmul.f32 %v107, 2.0
  %v142 = vmul.f32 %v108, 2.0
  %v143 = vmul.f32 %v109, 2.0
  %v144 = vmul.f32 %v110, 2.0
  %v145 = vmul.f32 %v111, 2.0
  %v146 = vmul.f32 %v112, 2.0
  %v147 = vmul.f32 %v113, 2.0
  %v148 = vadd.f32 %v80, %v116
  %v149 = vadd.f32 %v81, %v117
  %v150 = vadd.f32 %v82, %v118
  %v151 = vadd.f32 %v83, %v119
  %v152 = vadd.f32 %v84, %v120
  %v153 = vadd.f32 %v85, %v121
  %v154 = vadd.f32 %v86, %v122
  %v155 = vadd.f32 %v87, %v123
  %v156 = vadd.f32 %v88, %v124
  %v157 = vadd.f32 %v89, %v125
  %v158 = vadd.f32 %v90, %v126
  %v159 = vadd.f32 %v91, %v127
  %v160 = vadd.f32 %v92, %v128
  %v161 = vadd.f32 %v93, %v129
  %v162 = vadd.f32 %v94, %v130
  %v163 = vadd.f32 %v95, %v131
  %v164 = vadd.f32 %v96, %v132
  %v165 = vadd.f32 %v97, %v133
  %v166 = vadd.f32 %v98, %v134
  %v167 = vadd.f32 %v99, %v135
  %v168 = vadd.f32 %v100, %v136
  %v169 = vadd.f32 %v101, %v137
  %v170 = vadd.f32 %v102, %v138
  %v171 = vadd.f32 %v103, %v139
  %v172 = vadd.f32 %v104, %v140
  %v173 = vadd.f32 %v105, %v141
  %v174 = vadd.f32 %v106, %v142
  %v175 = vadd.f32 %v107, %v143
  %v176 = vadd.f32 %v108, %v144
  %v177 = vadd.f32 %v109, %v145
  %v178 = vadd.f32 %v110, %v146
  %v179 = vadd.f32 %v111, %v147
  %v180 = vadd.f32 %v148, %v84
  %v181 = vadd.f32 %v149, %v85
  %v182 = vadd.f32 %v150, %v86
  %v183 = vadd.f32 %v151, %v87
  %v184 = vadd.f32 %v152, %v88
  %v185 = vadd.f32 %v153, %v89
  %v186 = vadd.f32 %v154, %v90
  %v187 = vadd.f32 %v155, %v91
  %v188 = vadd.f32 %v156, %v92
  %v189 = vadd.f32 %v157, %v93
  %v190 = vadd.f32 %v158, %v94
  %v191 = vadd.f32 %v159, %v95
  %v192 = vadd.f32 %v160, %v96
  %v193 = vadd.f32 %v161, %v97
  %v194 = vadd.f32 %v162, %v98
  %v195 = vadd.f32 %v163, %v99
  %v196 = vadd.f32 %v164, %v100
  %v197 = vadd.f32 %v165, %v101
  %v198 = vadd.f32 %v166, %v102
  %v199 = vadd.f32 %v167, %v103
  %v200 = vadd.f32 %v168, %v104
  %v201 = vadd.f32 %v169, %v105
  %v202 = vadd.f32 %v170, %v106
  %v203 = vadd.f32 %v171, %v107
  %v204 = vadd.f32 %v172, %v108
  %v205 = vadd.f32 %v173, %v109
  %v206 = vadd.f32 %v174, %v110
  %v207 = vadd.f32 %v175, %v111
  %v208 = vadd.f32 %v176, %v112
  %v209 = vadd.f32 %v177, %v113
  %v210 = vadd.f32 %v178, %v114
  %v211 = vadd.f32 %v179, %v115
  %v212 = vld [vmem:[%s0 + $0x10] sm:$0x3]
  %v213 = vld [vmem:[%s0 + $0x28] sm:$0x3]
  %v214 = vld [vmem:[%s0 + $0x40] sm:$0x3]
  %v215 = vld [vmem:[%s0 + $0x58] sm:$0x3]
  %v216 = vld [vmem:[%s0 + $0x70] sm:$0x3]
  %v217 = vld [vmem:[%s0 + $0x88] sm:$0x3]
  %v218 = vld [vmem:[%s0 + $0xa0] sm:$0x3]
  %v219 = vld [vmem:[%s0 + $0xb8] sm:$0x3]
  %v220 = vld [vmem:[%s0 + $0xd0] sm:$0x3]
  %v221 = vld [vmem:[%s0 + $0xe8] sm:$0x3]
  %v222 = vld [vmem:[%s0 + $0x100] sm:$0x3]
  %v223 = vld [vmem:[%s0 + $0x118] sm:$0x3]
  %v224 = vld [vmem:[%s0 + $0x130] sm:$0x3]
  %v225 = vld [vmem:[%s0 + $0x148] sm:$0x3]
  %v226 = vld [vmem:[%s0 + $0x160] sm:$0x3]
  %v227 = vld [vmem:[%s0 + $0x178] sm:$0x3]
  %s228 = scalar_lea.vmem %s0, 48
  %v229 = vld [vmem:[%s228] sm:$0xff]
  %v230 = vld [vmem:[%s228 + $0x8] sm:$0xff]
  %v231 = vld [vmem:[%s228 + $0x10] sm:$0x3]
  %v232 = vld [vmem:[%s228 + $0x18] sm:$0xff]
  %v233 = vld [vmem:[%s228 + $0x20] sm:$0xff]
  %v234 = vld [vmem:[%s228 + $0x28] sm:$0x3]
  %v235 = vld [vmem:[%s228 + $0x30] sm:$0xff]
  %v236 = vld [vmem:[%s228 + $0x38] sm:$0xff]
  %v237 = vld [vmem:[%s228 + $0x40] sm:$0x3]
  %v238 = vld [vmem:[%s228 + $0x48] sm:$0xff]
  %v239 = vld [vmem:[%s228 + $0x50] sm:$0xff]
  %v240 = vld [vmem:[%s228 + $0x58] sm:$0x3]
  %v241 = vld [vmem:[%s228 + $0x60] sm:$0xff]
  %v242 = vld [vmem:[%s228 + $0x68] sm:$0xff]
  %v243 = vld [vmem:[%s228 + $0x70] sm:$0x3]
  %v244 = vld [vmem:[%s228 + $0x78] sm:$0xff]
  %v245 = vld [vmem:[%s228 + $0x80] sm:$0xff]
  %v246 = vld [vmem:[%s228 + $0x88] sm:$0x3]
  %v247 = vld [vmem:[%s228 + $0x90] sm:$0xff]
  %v248 = vld [vmem:[%s228 + $0x98] sm:$0xff]
  %v249 = vld [vmem:[%s228 + $0xa0] sm:$0x3]
  %v250 = vld [vmem:[%s228 + $0xa8] sm:$0xff]
  %v251 = vld [vmem:[%s228 + $0xb0] sm:$0xff]
  %v252 = vld [vmem:[%s228 + $0xb8] sm:$0x3]
  %v253 = vld [vmem:[%s228 + $0xc0] sm:$0xff]
  %v254 = vld [vmem:[%s228 + $0xc8] sm:$0xff]
  %v255 = vld [vmem:[%s228 + $0xd0] sm:$0x3]
  %v256 = vld [vmem:[%s228 + $0xd8] sm:$0xff]
  %v257 = vld [vmem:[%s228 + $0xe0] sm:$0xff]
  %v258 = vld [vmem:[%s228 + $0xe8] sm:$0x3]
  %v259 = vld [vmem:[%s228 + $0xf0] sm:$0xff]
  %v260 = vld [vmem:[%s228 + $0xf8] sm:$0xff]
  %v261 = vld [vmem:[%s228 + $0x100] sm:$0x3]
  %v262 = vld [vmem:[%s228 + $0x108] sm:$0xff]
  %v263 = vld [vmem:[%s228 + $0x110] sm:$0xff]
  %v264 = vld [vmem:[%s228 + $0x118] sm:$0x3]
  %v265 = vld [vmem:[%s228 + $0x120] sm:$0xff]
  %v266 = vld [vmem:[%s228 + $0x128] sm:$0xff]
  %v267 = vld [vmem:[%s228 + $0x130] sm:$0x3]
  %v268 = vld [vmem:[%s228 + $0x138] sm:$0xff]
  %v269 = vld [vmem:[%s228 + $0x140] sm:$0xff]
  %v270 = vld [vmem:[%s228 + $0x148] sm:$0x3]
  %v271 = vld [vmem:[%s228 + $0x150] sm:$0xff]
  %v272 = vld [vmem:[%s228 + $0x158] sm:$0xff]
  %v273 = vld [vmem:[%s228 + $0x160] sm:$0x3]
  %v274 = vld [vmem:[%s228 + $0x168] sm:$0xff]
  %v275 = vld [vmem:[%s228 + $0x170] sm:$0xff]
  %v276 = vld [vmem:[%s228 + $0x178] sm:$0x3]
  %v277 = vsub.f32 %v8, %v229
  %v278 = vsub.f32 %v9, %v230
  %v279 = vsub.f32 %v212, %v231
  %v280 = vsub.f32 %v10, %v232
  %v281 = vsub.f32 %v11, %v233
  %v282 = vsub.f32 %v213, %v234
  %v283 = vsub.f32 %v12, %v235
  %v284 = vsub.f32 %v13, %v236
  %v285 = vsub.f32 %v214, %v237
  %v286 = vsub.f32 %v14, %v238
  %v287 = vsub.f32 %v15, %v239
  %v288 = vsub.f32 %v215, %v240
  %v289 = vsub.f32 %v16, %v241
  %v290 = vsub.f32 %v17, %v242
  %v291 = vsub.f32 %v216, %v243
  %v292 = vsub.f32 %v18, %v244
  %v293 = vsub.f32 %v19, %v245
  %v294 = vsub.f32 %v217, %v246
  %v295 = vsub.f32 %v20, %v247
  %v296 = vsub.f32 %v21, %v248
  %v297 = vsub.f32 %v218, %v249
  %v298 = vsub.f32 %v22, %v250
  %v299 = vsub.f32 %v23, %v251
  %v300 = vsub.f32 %v219, %v252
  %v301 = vsub.f32 %v24, %v253
  %v302 = vsub.f32 %v25, %v254
  %v303 = vsub.f32 %v220, %v255
  %v304 = vsub.f32 %v26, %v256
  %v305 = vsub.f32 %v27, %v257
  %v306 = vsub.f32 %v221, %v258
  %v307 = vsub.f32 %v28, %v259
  %v308 = vsub.f32 %v29, %v260
  %v309 = vsub.f32 %v222, %v261
  %v310 = vsub.f32 %v30, %v262
  %v311 = vsub.f32 %v31, %v263
  %v312 = vsub.f32 %v223, %v264
  %v313 = vsub.f32 %v32, %v265
  %v314 = vsub.f32 %v33, %v266
  %v315 = vsub.f32 %v224, %v267
  %v316 = vsub.f32 %v34, %v268
  %v317 = vsub.f32 %v35, %v269
  %v318 = vsub.f32 %v225, %v270
  %v319 = vsub.f32 %v36, %v271
  %v320 = vsub.f32 %v37, %v272
  %v321 = vsub.f32 %v226, %v273
  %v322 = vsub.f32 %v38, %v274
  %v323 = vsub.f32 %v39, %v275
  %v324 = vsub.f32 %v227, %v276
  %v325 = vmul.f32 %v277, 2.0
  %v326 = vmul.f32 %v278, 2.0
  %v327 = vmul.f32 %v279, 2.0
  %v328 = vmul.f32 %v280, 2.0
  %v329 = vmul.f32 %v281, 2.0
  %v330 = vmul.f32 %v282, 2.0
  %v331 = vmul.f32 %v283, 2.0
  %v332 = vmul.f32 %v284, 2.0
  %v333 = vmul.f32 %v285, 2.0
  %v334 = vmul.f32 %v286, 2.0
  %v335 = vmul.f32 %v287, 2.0
  %v336 = vmul.f32 %v288, 2.0
  %v337 = vmul.f32 %v289, 2.0
  %v338 = vmul.f32 %v290, 2.0
  %v339 = vmul.f32 %v291, 2.0
  %v340 = vmul.f32 %v292, 2.0
  %v341 = vmul.f32 %v293, 2.0
  %v342 = vmul.f32 %v294, 2.0
  %v343 = vmul.f32 %v295, 2.0
  %v344 = vmul.f32 %v296, 2.0
  %v345 = vmul.f32 %v297, 2.0
  %v346 = vmul.f32 %v298, 2.0
  %v347 = vmul.f32 %v299, 2.0
  %v348 = vmul.f32 %v300, 2.0
  %v349 = vmul.f32 %v301, 2.0
  %v350 = vmul.f32 %v302, 2.0
  %v351 = vmul.f32 %v303, 2.0
  %v352 = vmul.f32 %v304, 2.0
  %v353 = vmul.f32 %v305, 2.0
  %v354 = vmul.f32 %v306, 2.0
  %v355 = vmul.f32 %v307, 2.0
  %v356 = vmul.f32 %v308, 2.0
  %v357 = vmul.f32 %v309, 2.0
  %v358 = vmul.f32 %v310, 2.0
  %v359 = vmul.f32 %v311, 2.0
  %v360 = vmul.f32 %v312, 2.0
  %v361 = vmul.f32 %v313, 2.0
  %v362 = vmul.f32 %v314, 2.0
  %v363 = vmul.f32 %v315, 2.0
  %v364 = vmul.f32 %v316, 2.0
  %v365 = vmul.f32 %v317, 2.0
  %v366 = vmul.f32 %v318, 2.0
  %v367 = vmul.f32 %v319, 2.0
  %v368 = vmul.f32 %v320, 2.0
  %v369 = vmul.f32 %v321, 2.0
  %v370 = vmul.f32 %v322, 2.0
  %v371 = vmul.f32 %v323, 2.0
  %v372 = vmul.f32 %v324, 2.0
  %vm421 = vcmask 1046528
  %v422 = vrot.slane %v325, 1
  %v423 = vrot.slane %v326, 1
  %v424 = vsel %vm421, %v422, %v423
  %v425 = vrot.slane %v327, 1
  %v426 = vsel %vm421, %v423, %v425
  %v427 = vrot.slane %v328, 1
  %v428 = vrot.slane %v329, 1
  %v429 = vsel %vm421, %v427, %v428
  %v430 = vrot.slane %v330, 1
  %v431 = vsel %vm421, %v428, %v430
  %v432 = vrot.slane %v331, 1
  %v433 = vrot.slane %v332, 1
  %v434 = vsel %vm421, %v432, %v433
  %v435 = vrot.slane %v333, 1
  %v436 = vsel %vm421, %v433, %v435
  %v437 = vrot.slane %v334, 1
  %v438 = vrot.slane %v335, 1
  %v439 = vsel %vm421, %v437, %v438
  %v440 = vrot.slane %v336, 1
  %v441 = vsel %vm421, %v438, %v440
  %v442 = vrot.slane %v337, 1
  %v443 = vrot.slane %v338, 1
  %v444 = vsel %vm421, %v442, %v443
  %v445 = vrot.slane %v339, 1
  %v446 = vsel %vm421, %v443, %v445
  %v447 = vrot.slane %v340, 1
  %v448 = vrot.slane %v341, 1
  %v449 = vsel %vm421, %v447, %v448
  %v450 = vrot.slane %v342, 1
  %v451 = vsel %vm421, %v448, %v450
  %v452 = vrot.slane %v343, 1
  %v453 = vrot.slane %v344, 1
  %v454 = vsel %vm421, %v452, %v453
  %v455 = vrot.slane %v345, 1
  %v456 = vsel %vm421, %v453, %v455
  %v457 = vrot.slane %v346, 1
  %v458 = vrot.slane %v347, 1
  %v459 = vsel %vm421, %v457, %v458
  %v460 = vrot.slane %v348, 1
  %v461 = vsel %vm421, %v458, %v460
  %v462 = vrot.slane %v349, 1
  %v463 = vrot.slane %v350, 1
  %v464 = vsel %vm421, %v462, %v463
  %v465 = vrot.slane %v351, 1
  %v466 = vsel %vm421, %v463, %v465
  %v467 = vrot.slane %v352, 1
  %v468 = vrot.slane %v353, 1
  %v469 = vsel %vm421, %v467, %v468
  %v470 = vrot.slane %v354, 1
  %v471 = vsel %vm421, %v468, %v470
  %v472 = vrot.slane %v355, 1
  %v473 = vrot.slane %v356, 1
  %v474 = vsel %vm421, %v472, %v473
  %v475 = vrot.slane %v357, 1
  %v476 = vsel %vm421, %v473, %v475
  %v477 = vrot.slane %v358, 1
  %v478 = vrot.slane %v359, 1
  %v479 = vsel %vm421, %v477, %v478
  %v480 = vrot.slane %v360, 1
  %v481 = vsel %vm421, %v478, %v480
  %v482 = vrot.slane %v361, 1
  %v483 = vrot.slane %v362, 1
  %v484 = vsel %vm421, %v482, %v483
  %v485 = vrot.slane %v363, 1
  %v486 = vsel %vm421, %v483, %v485
  %v487 = vrot.slane %v364, 1
  %v488 = vrot.slane %v365, 1
  %v489 = vsel %vm421, %v487, %v488
  %v490 = vrot.slane %v366, 1
  %v491 = vsel %vm421, %v488, %v490
  %v492 = vrot.slane %v367, 1
  %v493 = vrot.slane %v368, 1
  %v494 = vsel %vm421, %v492, %v493
  %v495 = vrot.slane %v369, 1
  %v496 = vsel %vm421, %v493, %v495
  %v497 = vrot.slane %v370, 1
  %v498 = vrot.slane %v371, 1
  %v499 = vsel %vm421, %v497, %v498
  %v500 = vrot.slane %v372, 1
  %v501 = vsel %vm421, %v498, %v500
  %v534 = vadd.f32 %v277, %v424
  %v535 = vadd.f32 %v278, %v426
  %v536 = vadd.f32 %v280, %v429
  %v537 = vadd.f32 %v281, %v431
  %v538 = vadd.f32 %v283, %v434
  %v539 = vadd.f32 %v284, %v436
  %v540 = vadd.f32 %v286, %v439
  %v541 = vadd.f32 %v287, %v441
  %v542 = vadd.f32 %v289, %v444
  %v543 = vadd.f32 %v290, %v446
  %v544 = vadd.f32 %v292, %v449
  %v545 = vadd.f32 %v293, %v451
  %v546 = vadd.f32 %v295, %v454
  %v547 = vadd.f32 %v296, %v456
  %v548 = vadd.f32 %v298, %v459
  %v549 = vadd.f32 %v299, %v461
  %v550 = vadd.f32 %v301, %v464
  %v551 = vadd.f32 %v302, %v466
  %v552 = vadd.f32 %v304, %v469
  %v553 = vadd.f32 %v305, %v471
  %v554 = vadd.f32 %v307, %v474
  %v555 = vadd.f32 %v308, %v476
  %v556 = vadd.f32 %v310, %v479
  %v557 = vadd.f32 %v311, %v481
  %v558 = vadd.f32 %v313, %v484
  %v559 = vadd.f32 %v314, %v486
  %v560 = vadd.f32 %v316, %v489
  %v561 = vadd.f32 %v317, %v491
  %v562 = vadd.f32 %v319, %v494
  %v563 = vadd.f32 %v320, %v496
  %v564 = vadd.f32 %v322, %v499
  %v565 = vadd.f32 %v323, %v501
  %vm614 = vcmask 1045504
  %v615 = vrot.slane %v277, 2
  %v616 = vrot.slane %v278, 2
  %v617 = vsel %vm614, %v615, %v616
  %v618 = vrot.slane %v279, 2
  %v619 = vsel %vm614, %v616, %v618
  %v620 = vrot.slane %v280, 2
  %v621 = vrot.slane %v281, 2
  %v622 = vsel %vm614, %v620, %v621
  %v623 = vrot.slane %v282, 2
  %v624 = vsel %vm614, %v621, %v623
  %v625 = vrot.slane %v283, 2
  %v626 = vrot.slane %v284, 2
  %v627 = vsel %vm614, %v625, %v626
  %v628 = vrot.slane %v285, 2
  %v629 = vsel %vm614, %v626, %v628
  %v630 = vrot.slane %v286, 2
  %v631 = vrot.slane %v287, 2
  %v632 = vsel %vm614, %v630, %v631
  %v633 = vrot.slane %v288, 2
  %v634 = vsel %vm614, %v631, %v633
  %v635 = vrot.slane %v289, 2
  %v636 = vrot.slane %v290, 2
  %v637 = vsel %vm614, %v635, %v636
  %v638 = vrot.slane %v291, 2
  %v639 = vsel %vm614, %v636, %v638
  %v640 = vrot.slane %v292, 2
  %v641 = vrot.slane %v293, 2
  %v642 = vsel %vm614, %v640, %v641
  %v643 = vrot.slane %v294, 2
  %v644 = vsel %vm614, %v641, %v643
  %v645 = vrot.slane %v295, 2
  %v646 = vrot.slane %v296, 2
  %v647 = vsel %vm614, %v645, %v646
  %v648 = vrot.slane %v297, 2
  %v649 = vsel %vm614, %v646, %v648
  %v650 = vrot.slane %v298, 2
  %v651 = vrot.slane %v299, 2
  %v652 = vsel %vm614, %v650, %v651
  %v653 = vrot.slane %v300, 2
  %v654 = vsel %vm614, %v651, %v653
  %v655 = vrot.slane %v301, 2
  %v656 = vrot.slane %v302, 2
  %v657 = vsel %vm614, %v655, %v656
  %v658 = vrot.slane %v303, 2
  %v659 = vsel %vm614, %v656, %v658
  %v660 = vrot.slane %v304, 2
  %v661 = vrot.slane %v305, 2
  %v662 = vsel %vm614, %v660, %v661
  %v663 = vrot.slane %v306, 2
  %v664 = vsel %vm614, %v661, %v663
  %v665 = vrot.slane %v307, 2
  %v666 = vrot.slane %v308, 2
  %v667 = vsel %vm614, %v665, %v666
  %v668 = vrot.slane %v309, 2
  %v669 = vsel %vm614, %v666, %v668
  %v670 = vrot.slane %v310, 2
  %v671 = vrot.slane %v311, 2
  %v672 = vsel %vm614, %v670, %v671
  %v673 = vrot.slane %v312, 2
  %v674 = vsel %vm614, %v671, %v673
  %v675 = vrot.slane %v313, 2
  %v676 = vrot.slane %v314, 2
  %v677 = vsel %vm614, %v675, %v676
  %v678 = vrot.slane %v315, 2
  %v679 = vsel %vm614, %v676, %v678
  %v680 = vrot.slane %v316, 2
  %v681 = vrot.slane %v317, 2
  %v682 = vsel %vm614, %v680, %v681
  %v683 = vrot.slane %v318, 2
  %v684 = vsel %vm614, %v681, %v683
  %v685 = vrot.slane %v319, 2
  %v686 = vrot.slane %v320, 2
  %v687 = vsel %vm614, %v685, %v686
  %v688 = vrot.slane %v321, 2
  %v689 = vsel %vm614, %v686, %v688
  %v690 = vrot.slane %v322, 2
  %v691 = vrot.slane %v323, 2
  %v692 = vsel %vm614, %v690, %v691
  %v693 = vrot.slane %v324, 2
  %v694 = vsel %vm614, %v691, %v693
  %v727 = vadd.f32 %v534, %v617
  %v728 = vadd.f32 %v535, %v619
  %v729 = vadd.f32 %v536, %v622
  %v730 = vadd.f32 %v537, %v624
  %v731 = vadd.f32 %v538, %v627
  %v732 = vadd.f32 %v539, %v629
  %v733 = vadd.f32 %v540, %v632
  %v734 = vadd.f32 %v541, %v634
  %v735 = vadd.f32 %v542, %v637
  %v736 = vadd.f32 %v543, %v639
  %v737 = vadd.f32 %v544, %v642
  %v738 = vadd.f32 %v545, %v644
  %v739 = vadd.f32 %v546, %v647
  %v740 = vadd.f32 %v547, %v649
  %v741 = vadd.f32 %v548, %v652
  %v742 = vadd.f32 %v549, %v654
  %v743 = vadd.f32 %v550, %v657
  %v744 = vadd.f32 %v551, %v659
  %v745 = vadd.f32 %v552, %v662
  %v746 = vadd.f32 %v553, %v664
  %v747 = vadd.f32 %v554, %v667
  %v748 = vadd.f32 %v555, %v669
  %v749 = vadd.f32 %v556, %v672
  %v750 = vadd.f32 %v557, %v674
  %v751 = vadd.f32 %v558, %v677
  %v752 = vadd.f32 %v559, %v679
  %v753 = vadd.f32 %v560, %v682
  %v754 = vadd.f32 %v561, %v684
  %v755 = vadd.f32 %v562, %v687
  %v756 = vadd.f32 %v563, %v689
  %v757 = vadd.f32 %v564, %v692
  %v758 = vadd.f32 %v565, %v694
  %v759 = vmul.f32 %v180, %v180
  %v760 = vmul.f32 %v181, %v181
  %v761 = vmul.f32 %v182, %v182
  %v762 = vmul.f32 %v183, %v183
  %v763 = vmul.f32 %v184, %v184
  %v764 = vmul.f32 %v185, %v185
  %v765 = vmul.f32 %v186, %v186
  %v766 = vmul.f32 %v187, %v187
  %v767 = vmul.f32 %v188, %v188
  %v768 = vmul.f32 %v189, %v189
  %v769 = vmul.f32 %v190, %v190
  %v770 = vmul.f32 %v191, %v191
  %v771 = vmul.f32 %v192, %v192
  %v772 = vmul.f32 %v193, %v193
  %v773 = vmul.f32 %v194, %v194
  %v774 = vmul.f32 %v195, %v195
  %v775 = vmul.f32 %v196, %v196
  %v776 = vmul.f32 %v197, %v197
  %v777 = vmul.f32 %v198, %v198
  %v778 = vmul.f32 %v199, %v199
  %v779 = vmul.f32 %v200, %v200
  %v780 = vmul.f32 %v201, %v201
  %v781 = vmul.f32 %v202, %v202
  %v782 = vmul.f32 %v203, %v203
  %v783 = vmul.f32 %v204, %v204
  %v784 = vmul.f32 %v205, %v205
  %v785 = vmul.f32 %v206, %v206
  %v786 = vmul.f32 %v207, %v207
  %v787 = vmul.f32 %v208, %v208
  %v788 = vmul.f32 %v209, %v209
  %v789 = vmul.f32 %v210, %v210
  %v790 = vmul.f32 %v211, %v211
  %v791 = vmul.f32 %v727, %v727
  %v792 = vmul.f32 %v728, %v728
  %v793 = vmul.f32 %v729, %v729
  %v794 = vmul.f32 %v730, %v730
  %v795 = vmul.f32 %v731, %v731
  %v796 = vmul.f32 %v732, %v732
  %v797 = vmul.f32 %v733, %v733
  %v798 = vmul.f32 %v734, %v734
  %v799 = vmul.f32 %v735, %v735
  %v800 = vmul.f32 %v736, %v736
  %v801 = vmul.f32 %v737, %v737
  %v802 = vmul.f32 %v738, %v738
  %v803 = vmul.f32 %v739, %v739
  %v804 = vmul.f32 %v740, %v740
  %v805 = vmul.f32 %v741, %v741
  %v806 = vmul.f32 %v742, %v742
  %v807 = vmul.f32 %v743, %v743
  %v808 = vmul.f32 %v744, %v744
  %v809 = vmul.f32 %v745, %v745
  %v810 = vmul.f32 %v746, %v746
  %v811 = vmul.f32 %v747, %v747
  %v812 = vmul.f32 %v748, %v748
  %v813 = vmul.f32 %v749, %v749
  %v814 = vmul.f32 %v750, %v750
  %v815 = vmul.f32 %v751, %v751
  %v816 = vmul.f32 %v752, %v752
  %v817 = vmul.f32 %v753, %v753
  %v818 = vmul.f32 %v754, %v754
  %v819 = vmul.f32 %v755, %v755
  %v820 = vmul.f32 %v756, %v756
  %v821 = vmul.f32 %v757, %v757
  %v822 = vmul.f32 %v758, %v758
  %v823 = vadd.f32 %v759, %v791
  %v824 = vadd.f32 %v760, %v792
  %v825 = vadd.f32 %v761, %v793
  %v826 = vadd.f32 %v762, %v794
  %v827 = vadd.f32 %v763, %v795
  %v828 = vadd.f32 %v764, %v796
  %v829 = vadd.f32 %v765, %v797
  %v830 = vadd.f32 %v766, %v798
  %v831 = vadd.f32 %v767, %v799
  %v832 = vadd.f32 %v768, %v800
  %v833 = vadd.f32 %v769, %v801
  %v834 = vadd.f32 %v770, %v802
  %v835 = vadd.f32 %v771, %v803
  %v836 = vadd.f32 %v772, %v804
  %v837 = vadd.f32 %v773, %v805
  %v838 = vadd.f32 %v774, %v806
  %v839 = vadd.f32 %v775, %v807
  %v840 = vadd.f32 %v776, %v808
  %v841 = vadd.f32 %v777, %v809
  %v842 = vadd.f32 %v778, %v810
  %v843 = vadd.f32 %v779, %v811
  %v844 = vadd.f32 %v780, %v812
  %v845 = vadd.f32 %v781, %v813
  %v846 = vadd.f32 %v782, %v814
  %v847 = vadd.f32 %v783, %v815
  %v848 = vadd.f32 %v784, %v816
  %v849 = vadd.f32 %v785, %v817
  %v850 = vadd.f32 %v786, %v818
  %v851 = vadd.f32 %v787, %v819
  %v852 = vadd.f32 %v788, %v820
  %v853 = vadd.f32 %v789, %v821
  %v854 = vadd.f32 %v790, %v822
  %v855 = vrsqrt.pop %v823
  %v856 = vmul.f32 %v823, %v855
  %vm857 = vcmp.eq.f32.partialorder %v823, inf
  %v858 = vsel %vm857, %v823, %v856
  %vm859 = vcmp.eq.f32.partialorder %v823, 0.0
  %v860 = vand.u32 %v823, 2147483648
  %v861 = vsel %vm859, %v860, %v858
  %v862 = vrsqrt.pop %v824
  %v863 = vmul.f32 %v824, %v862
  %vm864 = vcmp.eq.f32.partialorder %v824, inf
  %v865 = vsel %vm864, %v824, %v863
  %vm866 = vcmp.eq.f32.partialorder %v824, 0.0
  %v867 = vand.u32 %v824, 2147483648
  %v868 = vsel %vm866, %v867, %v865
  %v869 = vrsqrt.pop %v825
  %v870 = vmul.f32 %v825, %v869
  %vm871 = vcmp.eq.f32.partialorder %v825, inf
  %v872 = vsel %vm871, %v825, %v870
  %vm873 = vcmp.eq.f32.partialorder %v825, 0.0
  %v874 = vand.u32 %v825, 2147483648
  %v875 = vsel %vm873, %v874, %v872
  %v876 = vrsqrt.pop %v826
  %v877 = vmul.f32 %v826, %v876
  %vm878 = vcmp.eq.f32.partialorder %v826, inf
  %v879 = vsel %vm878, %v826, %v877
  %vm880 = vcmp.eq.f32.partialorder %v826, 0.0
  %v881 = vand.u32 %v826, 2147483648
  %v882 = vsel %vm880, %v881, %v879
  %v883 = vrsqrt.pop %v827
  %v884 = vmul.f32 %v827, %v883
  %vm885 = vcmp.eq.f32.partialorder %v827, inf
  %v886 = vsel %vm885, %v827, %v884
  %vm887 = vcmp.eq.f32.partialorder %v827, 0.0
  %v888 = vand.u32 %v827, 2147483648
  %v889 = vsel %vm887, %v888, %v886
  %v890 = vrsqrt.pop %v828
  %v891 = vmul.f32 %v828, %v890
  %vm892 = vcmp.eq.f32.partialorder %v828, inf
  %v893 = vsel %vm892, %v828, %v891
  %vm894 = vcmp.eq.f32.partialorder %v828, 0.0
  %v895 = vand.u32 %v828, 2147483648
  %v896 = vsel %vm894, %v895, %v893
  %v897 = vrsqrt.pop %v829
  %v898 = vmul.f32 %v829, %v897
  %vm899 = vcmp.eq.f32.partialorder %v829, inf
  %v900 = vsel %vm899, %v829, %v898
  %vm901 = vcmp.eq.f32.partialorder %v829, 0.0
  %v902 = vand.u32 %v829, 2147483648
  %v903 = vsel %vm901, %v902, %v900
  %v904 = vrsqrt.pop %v830
  %v905 = vmul.f32 %v830, %v904
  %vm906 = vcmp.eq.f32.partialorder %v830, inf
  %v907 = vsel %vm906, %v830, %v905
  %vm908 = vcmp.eq.f32.partialorder %v830, 0.0
  %v909 = vand.u32 %v830, 2147483648
  %v910 = vsel %vm908, %v909, %v907
  %v911 = vrsqrt.pop %v831
  %v912 = vmul.f32 %v831, %v911
  %vm913 = vcmp.eq.f32.partialorder %v831, inf
  %v914 = vsel %vm913, %v831, %v912
  %vm915 = vcmp.eq.f32.partialorder %v831, 0.0
  %v916 = vand.u32 %v831, 2147483648
  %v917 = vsel %vm915, %v916, %v914
  %v918 = vrsqrt.pop %v832
  %v919 = vmul.f32 %v832, %v918
  %vm920 = vcmp.eq.f32.partialorder %v832, inf
  %v921 = vsel %vm920, %v832, %v919
  %vm922 = vcmp.eq.f32.partialorder %v832, 0.0
  %v923 = vand.u32 %v832, 2147483648
  %v924 = vsel %vm922, %v923, %v921
  %v925 = vrsqrt.pop %v833
  %v926 = vmul.f32 %v833, %v925
  %vm927 = vcmp.eq.f32.partialorder %v833, inf
  %v928 = vsel %vm927, %v833, %v926
  %vm929 = vcmp.eq.f32.partialorder %v833, 0.0
  %v930 = vand.u32 %v833, 2147483648
  %v931 = vsel %vm929, %v930, %v928
  %v932 = vrsqrt.pop %v834
  %v933 = vmul.f32 %v834, %v932
  %vm934 = vcmp.eq.f32.partialorder %v834, inf
  %v935 = vsel %vm934, %v834, %v933
  %vm936 = vcmp.eq.f32.partialorder %v834, 0.0
  %v937 = vand.u32 %v834, 2147483648
  %v938 = vsel %vm936, %v937, %v935
  %v939 = vrsqrt.pop %v835
  %v940 = vmul.f32 %v835, %v939
  %vm941 = vcmp.eq.f32.partialorder %v835, inf
  %v942 = vsel %vm941, %v835, %v940
  %vm943 = vcmp.eq.f32.partialorder %v835, 0.0
  %v944 = vand.u32 %v835, 2147483648
  %v945 = vsel %vm943, %v944, %v942
  %v946 = vrsqrt.pop %v836
  %v947 = vmul.f32 %v836, %v946
  %vm948 = vcmp.eq.f32.partialorder %v836, inf
  %v949 = vsel %vm948, %v836, %v947
  %vm950 = vcmp.eq.f32.partialorder %v836, 0.0
  %v951 = vand.u32 %v836, 2147483648
  %v952 = vsel %vm950, %v951, %v949
  %v953 = vrsqrt.pop %v837
  %v954 = vmul.f32 %v837, %v953
  %vm955 = vcmp.eq.f32.partialorder %v837, inf
  %v956 = vsel %vm955, %v837, %v954
  %vm957 = vcmp.eq.f32.partialorder %v837, 0.0
  %v958 = vand.u32 %v837, 2147483648
  %v959 = vsel %vm957, %v958, %v956
  %v960 = vrsqrt.pop %v838
  %v961 = vmul.f32 %v838, %v960
  %vm962 = vcmp.eq.f32.partialorder %v838, inf
  %v963 = vsel %vm962, %v838, %v961
  %vm964 = vcmp.eq.f32.partialorder %v838, 0.0
  %v965 = vand.u32 %v838, 2147483648
  %v966 = vsel %vm964, %v965, %v963
  %v967 = vrsqrt.pop %v839
  %v968 = vmul.f32 %v839, %v967
  %vm969 = vcmp.eq.f32.partialorder %v839, inf
  %v970 = vsel %vm969, %v839, %v968
  %vm971 = vcmp.eq.f32.partialorder %v839, 0.0
  %v972 = vand.u32 %v839, 2147483648
  %v973 = vsel %vm971, %v972, %v970
  %v974 = vrsqrt.pop %v840
  %v975 = vmul.f32 %v840, %v974
  %vm976 = vcmp.eq.f32.partialorder %v840, inf
  %v977 = vsel %vm976, %v840, %v975
  %vm978 = vcmp.eq.f32.partialorder %v840, 0.0
  %v979 = vand.u32 %v840, 2147483648
  %v980 = vsel %vm978, %v979, %v977
  %v981 = vrsqrt.pop %v841
  %v982 = vmul.f32 %v841, %v981
  %vm983 = vcmp.eq.f32.partialorder %v841, inf
  %v984 = vsel %vm983, %v841, %v982
  %vm985 = vcmp.eq.f32.partialorder %v841, 0.0
  %v986 = vand.u32 %v841, 2147483648
  %v987 = vsel %vm985, %v986, %v984
  %v988 = vrsqrt.pop %v842
  %v989 = vmul.f32 %v842, %v988
  %vm990 = vcmp.eq.f32.partialorder %v842, inf
  %v991 = vsel %vm990, %v842, %v989
  %vm992 = vcmp.eq.f32.partialorder %v842, 0.0
  %v993 = vand.u32 %v842, 2147483648
  %v994 = vsel %vm992, %v993, %v991
  %v995 = vrsqrt.pop %v843
  %v996 = vmul.f32 %v843, %v995
  %vm997 = vcmp.eq.f32.partialorder %v843, inf
  %v998 = vsel %vm997, %v843, %v996
  %vm999 = vcmp.eq.f32.partialorder %v843, 0.0
  %v1000 = vand.u32 %v843, 2147483648
  %v1001 = vsel %vm999, %v1000, %v998
  %v1002 = vrsqrt.pop %v844
  %v1003 = vmul.f32 %v844, %v1002
  %vm1004 = vcmp.eq.f32.partialorder %v844, inf
  %v1005 = vsel %vm1004, %v844, %v1003
  %vm1006 = vcmp.eq.f32.partialorder %v844, 0.0
  %v1007 = vand.u32 %v844, 2147483648
  %v1008 = vsel %vm1006, %v1007, %v1005
  %v1009 = vrsqrt.pop %v845
  %v1010 = vmul.f32 %v845, %v1009
  %vm1011 = vcmp.eq.f32.partialorder %v845, inf
  %v1012 = vsel %vm1011, %v845, %v1010
  %vm1013 = vcmp.eq.f32.partialorder %v845, 0.0
  %v1014 = vand.u32 %v845, 2147483648
  %v1015 = vsel %vm1013, %v1014, %v1012
  %v1016 = vrsqrt.pop %v846
  %v1017 = vmul.f32 %v846, %v1016
  %vm1018 = vcmp.eq.f32.partialorder %v846, inf
  %v1019 = vsel %vm1018, %v846, %v1017
  %vm1020 = vcmp.eq.f32.partialorder %v846, 0.0
  %v1021 = vand.u32 %v846, 2147483648
  %v1022 = vsel %vm1020, %v1021, %v1019
  %v1023 = vrsqrt.pop %v847
  %v1024 = vmul.f32 %v847, %v1023
  %vm1025 = vcmp.eq.f32.partialorder %v847, inf
  %v1026 = vsel %vm1025, %v847, %v1024
  %vm1027 = vcmp.eq.f32.partialorder %v847, 0.0
  %v1028 = vand.u32 %v847, 2147483648
  %v1029 = vsel %vm1027, %v1028, %v1026
  %v1030 = vrsqrt.pop %v848
  %v1031 = vmul.f32 %v848, %v1030
  %vm1032 = vcmp.eq.f32.partialorder %v848, inf
  %v1033 = vsel %vm1032, %v848, %v1031
  %vm1034 = vcmp.eq.f32.partialorder %v848, 0.0
  %v1035 = vand.u32 %v848, 2147483648
  %v1036 = vsel %vm1034, %v1035, %v1033
  %v1037 = vrsqrt.pop %v849
  %v1038 = vmul.f32 %v849, %v1037
  %vm1039 = vcmp.eq.f32.partialorder %v849, inf
  %v1040 = vsel %vm1039, %v849, %v1038
  %vm1041 = vcmp.eq.f32.partialorder %v849, 0.0
  %v1042 = vand.u32 %v849, 2147483648
  %v1043 = vsel %vm1041, %v1042, %v1040
  %v1044 = vrsqrt.pop %v850
  %v1045 = vmul.f32 %v850, %v1044
  %vm1046 = vcmp.eq.f32.partialorder %v850, inf
  %v1047 = vsel %vm1046, %v850, %v1045
  %vm1048 = vcmp.eq.f32.partialorder %v850, 0.0
  %v1049 = vand.u32 %v850, 2147483648
  %v1050 = vsel %vm1048, %v1049, %v1047
  %v1051 = vrsqrt.pop %v851
  %v1052 = vmul.f32 %v851, %v1051
  %vm1053 = vcmp.eq.f32.partialorder %v851, inf
  %v1054 = vsel %vm1053, %v851, %v1052
  %vm1055 = vcmp.eq.f32.partialorder %v851, 0.0
  %v1056 = vand.u32 %v851, 2147483648
  %v1057 = vsel %vm1055, %v1056, %v1054
  %v1058 = vrsqrt.pop %v852
  %v1059 = vmul.f32 %v852, %v1058
  %vm1060 = vcmp.eq.f32.partialorder %v852, inf
  %v1061 = vsel %vm1060, %v852, %v1059
  %vm1062 = vcmp.eq.f32.partialorder %v852, 0.0
  %v1063 = vand.u32 %v852, 2147483648
  %v1064 = vsel %vm1062, %v1063, %v1061
  %v1065 = vrsqrt.pop %v853
  %v1066 = vmul.f32 %v853, %v1065
  %vm1067 = vcmp.eq.f32.partialorder %v853, inf
  %v1068 = vsel %vm1067, %v853, %v1066
  %vm1069 = vcmp.eq.f32.partialorder %v853, 0.0
  %v1070 = vand.u32 %v853, 2147483648
  %v1071 = vsel %vm1069, %v1070, %v1068
  %v1072 = vrsqrt.pop %v854
  %v1073 = vmul.f32 %v854, %v1072
  %vm1074 = vcmp.eq.f32.partialorder %v854, inf
  %v1075 = vsel %vm1074, %v854, %v1073
  %vm1076 = vcmp.eq.f32.partialorder %v854, 0.0
  %v1077 = vand.u32 %v854, 2147483648
  %v1078 = vsel %vm1076, %v1077, %v1075
  %v1079 = vand.u32 2147483647, %v180
  %v1080 = vand.u32 2147483647, %v181
  %v1081 = vand.u32 2147483647, %v182
  %v1082 = vand.u32 2147483647, %v183
  %v1083 = vand.u32 2147483647, %v184
  %v1084 = vand.u32 2147483647, %v185
  %v1085 = vand.u32 2147483647, %v186
  %v1086 = vand.u32 2147483647, %v187
  %v1087 = vand.u32 2147483647, %v188
  %v1088 = vand.u32 2147483647, %v189
  %v1089 = vand.u32 2147483647, %v190
  %v1090 = vand.u32 2147483647, %v191
  %v1091 = vand.u32 2147483647, %v192
  %v1092 = vand.u32 2147483647, %v193
  %v1093 = vand.u32 2147483647, %v194
  %v1094 = vand.u32 2147483647, %v195
  %v1095 = vand.u32 2147483647, %v196
  %v1096 = vand.u32 2147483647, %v197
  %v1097 = vand.u32 2147483647, %v198
  %v1098 = vand.u32 2147483647, %v199
  %v1099 = vand.u32 2147483647, %v200
  %v1100 = vand.u32 2147483647, %v201
  %v1101 = vand.u32 2147483647, %v202
  %v1102 = vand.u32 2147483647, %v203
  %v1103 = vand.u32 2147483647, %v204
  %v1104 = vand.u32 2147483647, %v205
  %v1105 = vand.u32 2147483647, %v206
  %v1106 = vand.u32 2147483647, %v207
  %v1107 = vand.u32 2147483647, %v208
  %v1108 = vand.u32 2147483647, %v209
  %v1109 = vand.u32 2147483647, %v210
  %v1110 = vand.u32 2147483647, %v211
  %v1111 = vand.u32 2147483647, %v727
  %v1112 = vand.u32 2147483647, %v728
  %v1113 = vand.u32 2147483647, %v729
  %v1114 = vand.u32 2147483647, %v730
  %v1115 = vand.u32 2147483647, %v731
  %v1116 = vand.u32 2147483647, %v732
  %v1117 = vand.u32 2147483647, %v733
  %v1118 = vand.u32 2147483647, %v734
  %v1119 = vand.u32 2147483647, %v735
  %v1120 = vand.u32 2147483647, %v736
  %v1121 = vand.u32 2147483647, %v737
  %v1122 = vand.u32 2147483647, %v738
  %v1123 = vand.u32 2147483647, %v739
  %v1124 = vand.u32 2147483647, %v740
  %v1125 = vand.u32 2147483647, %v741
  %v1126 = vand.u32 2147483647, %v742
  %v1127 = vand.u32 2147483647, %v743
  %v1128 = vand.u32 2147483647, %v744
  %v1129 = vand.u32 2147483647, %v745
  %v1130 = vand.u32 2147483647, %v746
  %v1131 = vand.u32 2147483647, %v747
  %v1132 = vand.u32 2147483647, %v748
  %v1133 = vand.u32 2147483647, %v749
  %v1134 = vand.u32 2147483647, %v750
  %v1135 = vand.u32 2147483647, %v751
  %v1136 = vand.u32 2147483647, %v752
  %v1137 = vand.u32 2147483647, %v753
  %v1138 = vand.u32 2147483647, %v754
  %v1139 = vand.u32 2147483647, %v755
  %v1140 = vand.u32 2147483647, %v756
  %v1141 = vand.u32 2147483647, %v757
  %v1142 = vand.u32 2147483647, %v758
  %v1143 = vmax.f32 %v1111, %v1079
  %v1144 = vmax.f32 %v1112, %v1080
  %v1145 = vmax.f32 %v1113, %v1081
  %v1146 = vmax.f32 %v1114, %v1082
  %v1147 = vmax.f32 %v1115, %v1083
  %v1148 = vmax.f32 %v1116, %v1084
  %v1149 = vmax.f32 %v1117, %v1085
  %v1150 = vmax.f32 %v1118, %v1086
  %v1151 = vmax.f32 %v1119, %v1087
  %v1152 = vmax.f32 %v1120, %v1088
  %v1153 = vmax.f32 %v1121, %v1089
  %v1154 = vmax.f32 %v1122, %v1090
  %v1155 = vmax.f32 %v1123, %v1091
  %v1156 = vmax.f32 %v1124, %v1092
  %v1157 = vmax.f32 %v1125, %v1093
  %v1158 = vmax.f32 %v1126, %v1094
  %v1159 = vmax.f32 %v1127, %v1095
  %v1160 = vmax.f32 %v1128, %v1096
  %v1161 = vmax.f32 %v1129, %v1097
  %v1162 = vmax.f32 %v1130, %v1098
  %v1163 = vmax.f32 %v1131, %v1099
  %v1164 = vmax.f32 %v1132, %v1100
  %v1165 = vmax.f32 %v1133, %v1101
  %v1166 = vmax.f32 %v1134, %v1102
  %v1167 = vmax.f32 %v1135, %v1103
  %v1168 = vmax.f32 %v1136, %v1104
  %v1169 = vmax.f32 %v1137, %v1105
  %v1170 = vmax.f32 %v1138, %v1106
  %v1171 = vmax.f32 %v1139, %v1107
  %v1172 = vmax.f32 %v1140, %v1108
  %v1173 = vmax.f32 %v1141, %v1109
  %v1174 = vmax.f32 %v1142, %v1110
  %v1175 = vmin.f32 %v1111, %v1079
  %v1176 = vmin.f32 %v1112, %v1080
  %v1177 = vmin.f32 %v1113, %v1081
  %v1178 = vmin.f32 %v1114, %v1082
  %v1179 = vmin.f32 %v1115, %v1083
  %v1180 = vmin.f32 %v1116, %v1084
  %v1181 = vmin.f32 %v1117, %v1085
  %v1182 = vmin.f32 %v1118, %v1086
  %v1183 = vmin.f32 %v1119, %v1087
  %v1184 = vmin.f32 %v1120, %v1088
  %v1185 = vmin.f32 %v1121, %v1089
  %v1186 = vmin.f32 %v1122, %v1090
  %v1187 = vmin.f32 %v1123, %v1091
  %v1188 = vmin.f32 %v1124, %v1092
  %v1189 = vmin.f32 %v1125, %v1093
  %v1190 = vmin.f32 %v1126, %v1094
  %v1191 = vmin.f32 %v1127, %v1095
  %v1192 = vmin.f32 %v1128, %v1096
  %v1193 = vmin.f32 %v1129, %v1097
  %v1194 = vmin.f32 %v1130, %v1098
  %v1195 = vmin.f32 %v1131, %v1099
  %v1196 = vmin.f32 %v1132, %v1100
  %v1197 = vmin.f32 %v1133, %v1101
  %v1198 = vmin.f32 %v1134, %v1102
  %v1199 = vmin.f32 %v1135, %v1103
  %v1200 = vmin.f32 %v1136, %v1104
  %v1201 = vmin.f32 %v1137, %v1105
  %v1202 = vmin.f32 %v1138, %v1106
  %v1203 = vmin.f32 %v1139, %v1107
  %v1204 = vmin.f32 %v1140, %v1108
  %v1205 = vmin.f32 %v1141, %v1109
  %v1206 = vmin.f32 %v1142, %v1110
  %v1207 = vmax.f32 %v1143, 1e-30
  %v1208 = vmax.f32 %v1144, 1e-30
  %v1209 = vmax.f32 %v1145, 1e-30
  %v1210 = vmax.f32 %v1146, 1e-30
  %v1211 = vmax.f32 %v1147, 1e-30
  %v1212 = vmax.f32 %v1148, 1e-30
  %v1213 = vmax.f32 %v1149, 1e-30
  %v1214 = vmax.f32 %v1150, 1e-30
  %v1215 = vmax.f32 %v1151, 1e-30
  %v1216 = vmax.f32 %v1152, 1e-30
  %v1217 = vmax.f32 %v1153, 1e-30
  %v1218 = vmax.f32 %v1154, 1e-30
  %v1219 = vmax.f32 %v1155, 1e-30
  %v1220 = vmax.f32 %v1156, 1e-30
  %v1221 = vmax.f32 %v1157, 1e-30
  %v1222 = vmax.f32 %v1158, 1e-30
  %v1223 = vmax.f32 %v1159, 1e-30
  %v1224 = vmax.f32 %v1160, 1e-30
  %v1225 = vmax.f32 %v1161, 1e-30
  %v1226 = vmax.f32 %v1162, 1e-30
  %v1227 = vmax.f32 %v1163, 1e-30
  %v1228 = vmax.f32 %v1164, 1e-30
  %v1229 = vmax.f32 %v1165, 1e-30
  %v1230 = vmax.f32 %v1166, 1e-30
  %v1231 = vmax.f32 %v1167, 1e-30
  %v1232 = vmax.f32 %v1168, 1e-30
  %v1233 = vmax.f32 %v1169, 1e-30
  %v1234 = vmax.f32 %v1170, 1e-30
  %v1235 = vmax.f32 %v1171, 1e-30
  %v1236 = vmax.f32 %v1172, 1e-30
  %v1237 = vmax.f32 %v1173, 1e-30
  %v1238 = vmax.f32 %v1174, 1e-30
  %v1239 = vrcp.pop %v1207
  %v1240 = vmul.f32 %v1175, %v1239
  %v1241 = vrcp.pop %v1208
  %v1242 = vmul.f32 %v1176, %v1241
  %v1243 = vrcp.pop %v1209
  %v1244 = vmul.f32 %v1177, %v1243
  %v1245 = vrcp.pop %v1210
  %v1246 = vmul.f32 %v1178, %v1245
  %v1247 = vrcp.pop %v1211
  %v1248 = vmul.f32 %v1179, %v1247
  %v1249 = vrcp.pop %v1212
  %v1250 = vmul.f32 %v1180, %v1249
  %v1251 = vrcp.pop %v1213
  %v1252 = vmul.f32 %v1181, %v1251
  %v1253 = vrcp.pop %v1214
  %v1254 = vmul.f32 %v1182, %v1253
  %v1255 = vrcp.pop %v1215
  %v1256 = vmul.f32 %v1183, %v1255
  %v1257 = vrcp.pop %v1216
  %v1258 = vmul.f32 %v1184, %v1257
  %v1259 = vrcp.pop %v1217
  %v1260 = vmul.f32 %v1185, %v1259
  %v1261 = vrcp.pop %v1218
  %v1262 = vmul.f32 %v1186, %v1261
  %v1263 = vrcp.pop %v1219
  %v1264 = vmul.f32 %v1187, %v1263
  %v1265 = vrcp.pop %v1220
  %v1266 = vmul.f32 %v1188, %v1265
  %v1267 = vrcp.pop %v1221
  %v1268 = vmul.f32 %v1189, %v1267
  %v1269 = vrcp.pop %v1222
  %v1270 = vmul.f32 %v1190, %v1269
  %v1271 = vrcp.pop %v1223
  %v1272 = vmul.f32 %v1191, %v1271
  %v1273 = vrcp.pop %v1224
  %v1274 = vmul.f32 %v1192, %v1273
  %v1275 = vrcp.pop %v1225
  %v1276 = vmul.f32 %v1193, %v1275
  %v1277 = vrcp.pop %v1226
  %v1278 = vmul.f32 %v1194, %v1277
  %v1279 = vrcp.pop %v1227
  %v1280 = vmul.f32 %v1195, %v1279
  %v1281 = vrcp.pop %v1228
  %v1282 = vmul.f32 %v1196, %v1281
  %v1283 = vrcp.pop %v1229
  %v1284 = vmul.f32 %v1197, %v1283
  %v1285 = vrcp.pop %v1230
  %v1286 = vmul.f32 %v1198, %v1285
  %v1287 = vrcp.pop %v1231
  %v1288 = vmul.f32 %v1199, %v1287
  %v1289 = vrcp.pop %v1232
  %v1290 = vmul.f32 %v1200, %v1289
  %v1291 = vrcp.pop %v1233
  %v1292 = vmul.f32 %v1201, %v1291
  %v1293 = vrcp.pop %v1234
  %v1294 = vmul.f32 %v1202, %v1293
  %v1295 = vrcp.pop %v1235
  %v1296 = vmul.f32 %v1203, %v1295
  %v1297 = vrcp.pop %v1236
  %v1298 = vmul.f32 %v1204, %v1297
  %v1299 = vrcp.pop %v1237
  %v1300 = vmul.f32 %v1205, %v1299
  %v1301 = vrcp.pop %v1238
  %v1302 = vmul.f32 %v1206, %v1301
  %v1303 = vmul.f32 %v1240, %v1240
  %v1304 = vmul.f32 %v1242, %v1242
  %v1305 = vmul.f32 %v1244, %v1244
  %v1306 = vmul.f32 %v1246, %v1246
  %v1307 = vmul.f32 %v1248, %v1248
  %v1308 = vmul.f32 %v1250, %v1250
  %v1309 = vmul.f32 %v1252, %v1252
  %v1310 = vmul.f32 %v1254, %v1254
  %v1311 = vmul.f32 %v1256, %v1256
  %v1312 = vmul.f32 %v1258, %v1258
  %v1313 = vmul.f32 %v1260, %v1260
  %v1314 = vmul.f32 %v1262, %v1262
  %v1315 = vmul.f32 %v1264, %v1264
  %v1316 = vmul.f32 %v1266, %v1266
  %v1317 = vmul.f32 %v1268, %v1268
  %v1318 = vmul.f32 %v1270, %v1270
  %v1319 = vmul.f32 %v1272, %v1272
  %v1320 = vmul.f32 %v1274, %v1274
  %v1321 = vmul.f32 %v1276, %v1276
  %v1322 = vmul.f32 %v1278, %v1278
  %v1323 = vmul.f32 %v1280, %v1280
  %v1324 = vmul.f32 %v1282, %v1282
  %v1325 = vmul.f32 %v1284, %v1284
  %v1326 = vmul.f32 %v1286, %v1286
  %v1327 = vmul.f32 %v1288, %v1288
  %v1328 = vmul.f32 %v1290, %v1290
  %v1329 = vmul.f32 %v1292, %v1292
  %v1330 = vmul.f32 %v1294, %v1294
  %v1331 = vmul.f32 %v1296, %v1296
  %v1332 = vmul.f32 %v1298, %v1298
  %v1333 = vmul.f32 %v1300, %v1300
  %v1334 = vmul.f32 %v1302, %v1302
  %v1335 = vmul.f32 %v1303, -0.0117212
  %v1336 = vmul.f32 %v1304, -0.0117212
  %v1337 = vmul.f32 %v1305, -0.0117212
  %v1338 = vmul.f32 %v1306, -0.0117212
  %v1339 = vmul.f32 %v1307, -0.0117212
  %v1340 = vmul.f32 %v1308, -0.0117212
  %v1341 = vmul.f32 %v1309, -0.0117212
  %v1342 = vmul.f32 %v1310, -0.0117212
  %v1343 = vmul.f32 %v1311, -0.0117212
  %v1344 = vmul.f32 %v1312, -0.0117212
  %v1345 = vmul.f32 %v1313, -0.0117212
  %v1346 = vmul.f32 %v1314, -0.0117212
  %v1347 = vmul.f32 %v1315, -0.0117212
  %v1348 = vmul.f32 %v1316, -0.0117212
  %v1349 = vmul.f32 %v1317, -0.0117212
  %v1350 = vmul.f32 %v1318, -0.0117212
  %v1351 = vmul.f32 %v1319, -0.0117212
  %v1352 = vmul.f32 %v1320, -0.0117212
  %v1353 = vmul.f32 %v1321, -0.0117212
  %v1354 = vmul.f32 %v1322, -0.0117212
  %v1355 = vmul.f32 %v1323, -0.0117212
  %v1356 = vmul.f32 %v1324, -0.0117212
  %v1357 = vmul.f32 %v1325, -0.0117212
  %v1358 = vmul.f32 %v1326, -0.0117212
  %v1359 = vmul.f32 %v1327, -0.0117212
  %v1360 = vmul.f32 %v1328, -0.0117212
  %v1361 = vmul.f32 %v1329, -0.0117212
  %v1362 = vmul.f32 %v1330, -0.0117212
  %v1363 = vmul.f32 %v1331, -0.0117212
  %v1364 = vmul.f32 %v1332, -0.0117212
  %v1365 = vmul.f32 %v1333, -0.0117212
  %v1366 = vmul.f32 %v1334, -0.0117212
  %v1367 = vadd.f32 %v1335, 0.05265332
  %v1368 = vadd.f32 %v1336, 0.05265332
  %v1369 = vadd.f32 %v1337, 0.05265332
  %v1370 = vadd.f32 %v1338, 0.05265332
  %v1371 = vadd.f32 %v1339, 0.05265332
  %v1372 = vadd.f32 %v1340, 0.05265332
  %v1373 = vadd.f32 %v1341, 0.05265332
  %v1374 = vadd.f32 %v1342, 0.05265332
  %v1375 = vadd.f32 %v1343, 0.05265332
  %v1376 = vadd.f32 %v1344, 0.05265332
  %v1377 = vadd.f32 %v1345, 0.05265332
  %v1378 = vadd.f32 %v1346, 0.05265332
  %v1379 = vadd.f32 %v1347, 0.05265332
  %v1380 = vadd.f32 %v1348, 0.05265332
  %v1381 = vadd.f32 %v1349, 0.05265332
  %v1382 = vadd.f32 %v1350, 0.05265332
  %v1383 = vadd.f32 %v1351, 0.05265332
  %v1384 = vadd.f32 %v1352, 0.05265332
  %v1385 = vadd.f32 %v1353, 0.05265332
  %v1386 = vadd.f32 %v1354, 0.05265332
  %v1387 = vadd.f32 %v1355, 0.05265332
  %v1388 = vadd.f32 %v1356, 0.05265332
  %v1389 = vadd.f32 %v1357, 0.05265332
  %v1390 = vadd.f32 %v1358, 0.05265332
  %v1391 = vadd.f32 %v1359, 0.05265332
  %v1392 = vadd.f32 %v1360, 0.05265332
  %v1393 = vadd.f32 %v1361, 0.05265332
  %v1394 = vadd.f32 %v1362, 0.05265332
  %v1395 = vadd.f32 %v1363, 0.05265332
  %v1396 = vadd.f32 %v1364, 0.05265332
  %v1397 = vadd.f32 %v1365, 0.05265332
  %v1398 = vadd.f32 %v1366, 0.05265332
  %v1399 = vmul.f32 %v1303, %v1367
  %v1400 = vmul.f32 %v1304, %v1368
  %v1401 = vmul.f32 %v1305, %v1369
  %v1402 = vmul.f32 %v1306, %v1370
  %v1403 = vmul.f32 %v1307, %v1371
  %v1404 = vmul.f32 %v1308, %v1372
  %v1405 = vmul.f32 %v1309, %v1373
  %v1406 = vmul.f32 %v1310, %v1374
  %v1407 = vmul.f32 %v1311, %v1375
  %v1408 = vmul.f32 %v1312, %v1376
  %v1409 = vmul.f32 %v1313, %v1377
  %v1410 = vmul.f32 %v1314, %v1378
  %v1411 = vmul.f32 %v1315, %v1379
  %v1412 = vmul.f32 %v1316, %v1380
  %v1413 = vmul.f32 %v1317, %v1381
  %v1414 = vmul.f32 %v1318, %v1382
  %v1415 = vmul.f32 %v1319, %v1383
  %v1416 = vmul.f32 %v1320, %v1384
  %v1417 = vmul.f32 %v1321, %v1385
  %v1418 = vmul.f32 %v1322, %v1386
  %v1419 = vmul.f32 %v1323, %v1387
  %v1420 = vmul.f32 %v1324, %v1388
  %v1421 = vmul.f32 %v1325, %v1389
  %v1422 = vmul.f32 %v1326, %v1390
  %v1423 = vmul.f32 %v1327, %v1391
  %v1424 = vmul.f32 %v1328, %v1392
  %v1425 = vmul.f32 %v1329, %v1393
  %v1426 = vmul.f32 %v1330, %v1394
  %v1427 = vmul.f32 %v1331, %v1395
  %v1428 = vmul.f32 %v1332, %v1396
  %v1429 = vmul.f32 %v1333, %v1397
  %v1430 = vmul.f32 %v1334, %v1398
  %v1431 = vadd.f32 %v1399, -0.11643287
  %v1432 = vadd.f32 %v1400, -0.11643287
  %v1433 = vadd.f32 %v1401, -0.11643287
  %v1434 = vadd.f32 %v1402, -0.11643287
  %v1435 = vadd.f32 %v1403, -0.11643287
  %v1436 = vadd.f32 %v1404, -0.11643287
  %v1437 = vadd.f32 %v1405, -0.11643287
  %v1438 = vadd.f32 %v1406, -0.11643287
  %v1439 = vadd.f32 %v1407, -0.11643287
  %v1440 = vadd.f32 %v1408, -0.11643287
  %v1441 = vadd.f32 %v1409, -0.11643287
  %v1442 = vadd.f32 %v1410, -0.11643287
  %v1443 = vadd.f32 %v1411, -0.11643287
  %v1444 = vadd.f32 %v1412, -0.11643287
  %v1445 = vadd.f32 %v1413, -0.11643287
  %v1446 = vadd.f32 %v1414, -0.11643287
  %v1447 = vadd.f32 %v1415, -0.11643287
  %v1448 = vadd.f32 %v1416, -0.11643287
  %v1449 = vadd.f32 %v1417, -0.11643287
  %v1450 = vadd.f32 %v1418, -0.11643287
  %v1451 = vadd.f32 %v1419, -0.11643287
  %v1452 = vadd.f32 %v1420, -0.11643287
  %v1453 = vadd.f32 %v1421, -0.11643287
  %v1454 = vadd.f32 %v1422, -0.11643287
  %v1455 = vadd.f32 %v1423, -0.11643287
  %v1456 = vadd.f32 %v1424, -0.11643287
  %v1457 = vadd.f32 %v1425, -0.11643287
  %v1458 = vadd.f32 %v1426, -0.11643287
  %v1459 = vadd.f32 %v1427, -0.11643287
  %v1460 = vadd.f32 %v1428, -0.11643287
  %v1461 = vadd.f32 %v1429, -0.11643287
  %v1462 = vadd.f32 %v1430, -0.11643287
  %v1463 = vmul.f32 %v1303, %v1431
  %v1464 = vmul.f32 %v1304, %v1432
  %v1465 = vmul.f32 %v1305, %v1433
  %v1466 = vmul.f32 %v1306, %v1434
  %v1467 = vmul.f32 %v1307, %v1435
  %v1468 = vmul.f32 %v1308, %v1436
  %v1469 = vmul.f32 %v1309, %v1437
  %v1470 = vmul.f32 %v1310, %v1438
  %v1471 = vmul.f32 %v1311, %v1439
  %v1472 = vmul.f32 %v1312, %v1440
  %v1473 = vmul.f32 %v1313, %v1441
  %v1474 = vmul.f32 %v1314, %v1442
  %v1475 = vmul.f32 %v1315, %v1443
  %v1476 = vmul.f32 %v1316, %v1444
  %v1477 = vmul.f32 %v1317, %v1445
  %v1478 = vmul.f32 %v1318, %v1446
  %v1479 = vmul.f32 %v1319, %v1447
  %v1480 = vmul.f32 %v1320, %v1448
  %v1481 = vmul.f32 %v1321, %v1449
  %v1482 = vmul.f32 %v1322, %v1450
  %v1483 = vmul.f32 %v1323, %v1451
  %v1484 = vmul.f32 %v1324, %v1452
  %v1485 = vmul.f32 %v1325, %v1453
  %v1486 = vmul.f32 %v1326, %v1454
  %v1487 = vmul.f32 %v1327, %v1455
  %v1488 = vmul.f32 %v1328, %v1456
  %v1489 = vmul.f32 %v1329, %v1457
  %v1490 = vmul.f32 %v1330, %v1458
  %v1491 = vmul.f32 %v1331, %v1459
  %v1492 = vmul.f32 %v1332, %v1460
  %v1493 = vmul.f32 %v1333, %v1461
  %v1494 = vmul.f32 %v1334, %v1462
  %v1495 = vadd.f32 %v1463, 0.19354346
  %v1496 = vadd.f32 %v1464, 0.19354346
  %v1497 = vadd.f32 %v1465, 0.19354346
  %v1498 = vadd.f32 %v1466, 0.19354346
  %v1499 = vadd.f32 %v1467, 0.19354346
  %v1500 = vadd.f32 %v1468, 0.19354346
  %v1501 = vadd.f32 %v1469, 0.19354346
  %v1502 = vadd.f32 %v1470, 0.19354346
  %v1503 = vadd.f32 %v1471, 0.19354346
  %v1504 = vadd.f32 %v1472, 0.19354346
  %v1505 = vadd.f32 %v1473, 0.19354346
  %v1506 = vadd.f32 %v1474, 0.19354346
  %v1507 = vadd.f32 %v1475, 0.19354346
  %v1508 = vadd.f32 %v1476, 0.19354346
  %v1509 = vadd.f32 %v1477, 0.19354346
  %v1510 = vadd.f32 %v1478, 0.19354346
  %v1511 = vadd.f32 %v1479, 0.19354346
  %v1512 = vadd.f32 %v1480, 0.19354346
  %v1513 = vadd.f32 %v1481, 0.19354346
  %v1514 = vadd.f32 %v1482, 0.19354346
  %v1515 = vadd.f32 %v1483, 0.19354346
  %v1516 = vadd.f32 %v1484, 0.19354346
  %v1517 = vadd.f32 %v1485, 0.19354346
  %v1518 = vadd.f32 %v1486, 0.19354346
  %v1519 = vadd.f32 %v1487, 0.19354346
  %v1520 = vadd.f32 %v1488, 0.19354346
  %v1521 = vadd.f32 %v1489, 0.19354346
  %v1522 = vadd.f32 %v1490, 0.19354346
  %v1523 = vadd.f32 %v1491, 0.19354346
  %v1524 = vadd.f32 %v1492, 0.19354346
  %v1525 = vadd.f32 %v1493, 0.19354346
  %v1526 = vadd.f32 %v1494, 0.19354346
  %v1527 = vmul.f32 %v1303, %v1495
  %v1528 = vmul.f32 %v1304, %v1496
  %v1529 = vmul.f32 %v1305, %v1497
  %v1530 = vmul.f32 %v1306, %v1498
  %v1531 = vmul.f32 %v1307, %v1499
  %v1532 = vmul.f32 %v1308, %v1500
  %v1533 = vmul.f32 %v1309, %v1501
  %v1534 = vmul.f32 %v1310, %v1502
  %v1535 = vmul.f32 %v1311, %v1503
  %v1536 = vmul.f32 %v1312, %v1504
  %v1537 = vmul.f32 %v1313, %v1505
  %v1538 = vmul.f32 %v1314, %v1506
  %v1539 = vmul.f32 %v1315, %v1507
  %v1540 = vmul.f32 %v1316, %v1508
  %v1541 = vmul.f32 %v1317, %v1509
  %v1542 = vmul.f32 %v1318, %v1510
  %v1543 = vmul.f32 %v1319, %v1511
  %v1544 = vmul.f32 %v1320, %v1512
  %v1545 = vmul.f32 %v1321, %v1513
  %v1546 = vmul.f32 %v1322, %v1514
  %v1547 = vmul.f32 %v1323, %v1515
  %v1548 = vmul.f32 %v1324, %v1516
  %v1549 = vmul.f32 %v1325, %v1517
  %v1550 = vmul.f32 %v1326, %v1518
  %v1551 = vmul.f32 %v1327, %v1519
  %v1552 = vmul.f32 %v1328, %v1520
  %v1553 = vmul.f32 %v1329, %v1521
  %v1554 = vmul.f32 %v1330, %v1522
  %v1555 = vmul.f32 %v1331, %v1523
  %v1556 = vmul.f32 %v1332, %v1524
  %v1557 = vmul.f32 %v1333, %v1525
  %v1558 = vmul.f32 %v1334, %v1526
  %v1559 = vadd.f32 %v1527, -0.33262348
  %v1560 = vadd.f32 %v1528, -0.33262348
  %v1561 = vadd.f32 %v1529, -0.33262348
  %v1562 = vadd.f32 %v1530, -0.33262348
  %v1563 = vadd.f32 %v1531, -0.33262348
  %v1564 = vadd.f32 %v1532, -0.33262348
  %v1565 = vadd.f32 %v1533, -0.33262348
  %v1566 = vadd.f32 %v1534, -0.33262348
  %v1567 = vadd.f32 %v1535, -0.33262348
  %v1568 = vadd.f32 %v1536, -0.33262348
  %v1569 = vadd.f32 %v1537, -0.33262348
  %v1570 = vadd.f32 %v1538, -0.33262348
  %v1571 = vadd.f32 %v1539, -0.33262348
  %v1572 = vadd.f32 %v1540, -0.33262348
  %v1573 = vadd.f32 %v1541, -0.33262348
  %v1574 = vadd.f32 %v1542, -0.33262348
  %v1575 = vadd.f32 %v1543, -0.33262348
  %v1576 = vadd.f32 %v1544, -0.33262348
  %v1577 = vadd.f32 %v1545, -0.33262348
  %v1578 = vadd.f32 %v1546, -0.33262348
  %v1579 = vadd.f32 %v1547, -0.33262348
  %v1580 = vadd.f32 %v1548, -0.33262348
  %v1581 = vadd.f32 %v1549, -0.33262348
  %v1582 = vadd.f32 %v1550, -0.33262348
  %v1583 = vadd.f32 %v1551, -0.33262348
  %v1584 = vadd.f32 %v1552, -0.33262348
  %v1585 = vadd.f32 %v1553, -0.33262348
  %v1586 = vadd.f32 %v1554, -0.33262348
  %v1587 = vadd.f32 %v1555, -0.33262348
  %v1588 = vadd.f32 %v1556, -0.33262348
  %v1589 = vadd.f32 %v1557, -0.33262348
  %v1590 = vadd.f32 %v1558, -0.33262348
  %v1591 = vmul.f32 %v1303, %v1559
  %v1592 = vmul.f32 %v1304, %v1560
  %v1593 = vmul.f32 %v1305, %v1561
  %v1594 = vmul.f32 %v1306, %v1562
  %v1595 = vmul.f32 %v1307, %v1563
  %v1596 = vmul.f32 %v1308, %v1564
  %v1597 = vmul.f32 %v1309, %v1565
  %v1598 = vmul.f32 %v1310, %v1566
  %v1599 = vmul.f32 %v1311, %v1567
  %v1600 = vmul.f32 %v1312, %v1568
  %v1601 = vmul.f32 %v1313, %v1569
  %v1602 = vmul.f32 %v1314, %v1570
  %v1603 = vmul.f32 %v1315, %v1571
  %v1604 = vmul.f32 %v1316, %v1572
  %v1605 = vmul.f32 %v1317, %v1573
  %v1606 = vmul.f32 %v1318, %v1574
  %v1607 = vmul.f32 %v1319, %v1575
  %v1608 = vmul.f32 %v1320, %v1576
  %v1609 = vmul.f32 %v1321, %v1577
  %v1610 = vmul.f32 %v1322, %v1578
  %v1611 = vmul.f32 %v1323, %v1579
  %v1612 = vmul.f32 %v1324, %v1580
  %v1613 = vmul.f32 %v1325, %v1581
  %v1614 = vmul.f32 %v1326, %v1582
  %v1615 = vmul.f32 %v1327, %v1583
  %v1616 = vmul.f32 %v1328, %v1584
  %v1617 = vmul.f32 %v1329, %v1585
  %v1618 = vmul.f32 %v1330, %v1586
  %v1619 = vmul.f32 %v1331, %v1587
  %v1620 = vmul.f32 %v1332, %v1588
  %v1621 = vmul.f32 %v1333, %v1589
  %v1622 = vmul.f32 %v1334, %v1590
  %v1623 = vadd.f32 %v1591, 0.99997723
  %v1624 = vadd.f32 %v1592, 0.99997723
  %v1625 = vadd.f32 %v1593, 0.99997723
  %v1626 = vadd.f32 %v1594, 0.99997723
  %v1627 = vadd.f32 %v1595, 0.99997723
  %v1628 = vadd.f32 %v1596, 0.99997723
  %v1629 = vadd.f32 %v1597, 0.99997723
  %v1630 = vadd.f32 %v1598, 0.99997723
  %v1631 = vadd.f32 %v1599, 0.99997723
  %v1632 = vadd.f32 %v1600, 0.99997723
  %v1633 = vadd.f32 %v1601, 0.99997723
  %v1634 = vadd.f32 %v1602, 0.99997723
  %v1635 = vadd.f32 %v1603, 0.99997723
  %v1636 = vadd.f32 %v1604, 0.99997723
  %v1637 = vadd.f32 %v1605, 0.99997723
  %v1638 = vadd.f32 %v1606, 0.99997723
  %v1639 = vadd.f32 %v1607, 0.99997723
  %v1640 = vadd.f32 %v1608, 0.99997723
  %v1641 = vadd.f32 %v1609, 0.99997723
  %v1642 = vadd.f32 %v1610, 0.99997723
  %v1643 = vadd.f32 %v1611, 0.99997723
  %v1644 = vadd.f32 %v1612, 0.99997723
  %v1645 = vadd.f32 %v1613, 0.99997723
  %v1646 = vadd.f32 %v1614, 0.99997723
  %v1647 = vadd.f32 %v1615, 0.99997723
  %v1648 = vadd.f32 %v1616, 0.99997723
  %v1649 = vadd.f32 %v1617, 0.99997723
  %v1650 = vadd.f32 %v1618, 0.99997723
  %v1651 = vadd.f32 %v1619, 0.99997723
  %v1652 = vadd.f32 %v1620, 0.99997723
  %v1653 = vadd.f32 %v1621, 0.99997723
  %v1654 = vadd.f32 %v1622, 0.99997723
  %v1655 = vmul.f32 %v1240, %v1623
  %v1656 = vmul.f32 %v1242, %v1624
  %v1657 = vmul.f32 %v1244, %v1625
  %v1658 = vmul.f32 %v1246, %v1626
  %v1659 = vmul.f32 %v1248, %v1627
  %v1660 = vmul.f32 %v1250, %v1628
  %v1661 = vmul.f32 %v1252, %v1629
  %v1662 = vmul.f32 %v1254, %v1630
  %v1663 = vmul.f32 %v1256, %v1631
  %v1664 = vmul.f32 %v1258, %v1632
  %v1665 = vmul.f32 %v1260, %v1633
  %v1666 = vmul.f32 %v1262, %v1634
  %v1667 = vmul.f32 %v1264, %v1635
  %v1668 = vmul.f32 %v1266, %v1636
  %v1669 = vmul.f32 %v1268, %v1637
  %v1670 = vmul.f32 %v1270, %v1638
  %v1671 = vmul.f32 %v1272, %v1639
  %v1672 = vmul.f32 %v1274, %v1640
  %v1673 = vmul.f32 %v1276, %v1641
  %v1674 = vmul.f32 %v1278, %v1642
  %v1675 = vmul.f32 %v1280, %v1643
  %v1676 = vmul.f32 %v1282, %v1644
  %v1677 = vmul.f32 %v1284, %v1645
  %v1678 = vmul.f32 %v1286, %v1646
  %v1679 = vmul.f32 %v1288, %v1647
  %v1680 = vmul.f32 %v1290, %v1648
  %v1681 = vmul.f32 %v1292, %v1649
  %v1682 = vmul.f32 %v1294, %v1650
  %v1683 = vmul.f32 %v1296, %v1651
  %v1684 = vmul.f32 %v1298, %v1652
  %v1685 = vmul.f32 %v1300, %v1653
  %v1686 = vmul.f32 %v1302, %v1654
  %v1687 = vmul.f32 %v1655, 3.1830988
  %v1688 = vmul.f32 %v1656, 3.1830988
  %v1689 = vmul.f32 %v1657, 3.1830988
  %v1690 = vmul.f32 %v1658, 3.1830988
  %v1691 = vmul.f32 %v1659, 3.1830988
  %v1692 = vmul.f32 %v1660, 3.1830988
  %v1693 = vmul.f32 %v1661, 3.1830988
  %v1694 = vmul.f32 %v1662, 3.1830988
  %v1695 = vmul.f32 %v1663, 3.1830988
  %v1696 = vmul.f32 %v1664, 3.1830988
  %v1697 = vmul.f32 %v1665, 3.1830988
  %v1698 = vmul.f32 %v1666, 3.1830988
  %v1699 = vmul.f32 %v1667, 3.1830988
  %v1700 = vmul.f32 %v1668, 3.1830988
  %v1701 = vmul.f32 %v1669, 3.1830988
  %v1702 = vmul.f32 %v1670, 3.1830988
  %v1703 = vmul.f32 %v1671, 3.1830988
  %v1704 = vmul.f32 %v1672, 3.1830988
  %v1705 = vmul.f32 %v1673, 3.1830988
  %v1706 = vmul.f32 %v1674, 3.1830988
  %v1707 = vmul.f32 %v1675, 3.1830988
  %v1708 = vmul.f32 %v1676, 3.1830988
  %v1709 = vmul.f32 %v1677, 3.1830988
  %v1710 = vmul.f32 %v1678, 3.1830988
  %v1711 = vmul.f32 %v1679, 3.1830988
  %v1712 = vmul.f32 %v1680, 3.1830988
  %v1713 = vmul.f32 %v1681, 3.1830988
  %v1714 = vmul.f32 %v1682, 3.1830988
  %v1715 = vmul.f32 %v1683, 3.1830988
  %v1716 = vmul.f32 %v1684, 3.1830988
  %v1717 = vmul.f32 %v1685, 3.1830988
  %v1718 = vmul.f32 %v1686, 3.1830988
  %vm1719 = vcmp.gt.f32.partialorder %v1079, %v1111
  %vm1720 = vcmp.gt.f32.partialorder %v1080, %v1112
  %vm1721 = vcmp.gt.f32.partialorder %v1081, %v1113
  %vm1722 = vcmp.gt.f32.partialorder %v1082, %v1114
  %vm1723 = vcmp.gt.f32.partialorder %v1083, %v1115
  %vm1724 = vcmp.gt.f32.partialorder %v1084, %v1116
  %vm1725 = vcmp.gt.f32.partialorder %v1085, %v1117
  %vm1726 = vcmp.gt.f32.partialorder %v1086, %v1118
  %vm1727 = vcmp.gt.f32.partialorder %v1087, %v1119
  %vm1728 = vcmp.gt.f32.partialorder %v1088, %v1120
  %vm1729 = vcmp.gt.f32.partialorder %v1089, %v1121
  %vm1730 = vcmp.gt.f32.partialorder %v1090, %v1122
  %vm1731 = vcmp.gt.f32.partialorder %v1091, %v1123
  %vm1732 = vcmp.gt.f32.partialorder %v1092, %v1124
  %vm1733 = vcmp.gt.f32.partialorder %v1093, %v1125
  %vm1734 = vcmp.gt.f32.partialorder %v1094, %v1126
  %vm1735 = vcmp.gt.f32.partialorder %v1095, %v1127
  %vm1736 = vcmp.gt.f32.partialorder %v1096, %v1128
  %vm1737 = vcmp.gt.f32.partialorder %v1097, %v1129
  %vm1738 = vcmp.gt.f32.partialorder %v1098, %v1130
  %vm1739 = vcmp.gt.f32.partialorder %v1099, %v1131
  %vm1740 = vcmp.gt.f32.partialorder %v1100, %v1132
  %vm1741 = vcmp.gt.f32.partialorder %v1101, %v1133
  %vm1742 = vcmp.gt.f32.partialorder %v1102, %v1134
  %vm1743 = vcmp.gt.f32.partialorder %v1103, %v1135
  %vm1744 = vcmp.gt.f32.partialorder %v1104, %v1136
  %vm1745 = vcmp.gt.f32.partialorder %v1105, %v1137
  %vm1746 = vcmp.gt.f32.partialorder %v1106, %v1138
  %vm1747 = vcmp.gt.f32.partialorder %v1107, %v1139
  %vm1748 = vcmp.gt.f32.partialorder %v1108, %v1140
  %vm1749 = vcmp.gt.f32.partialorder %v1109, %v1141
  %vm1750 = vcmp.gt.f32.partialorder %v1110, %v1142
  %v1751 = vsub.f32 5.0, %v1687
  %v1752 = vsub.f32 5.0, %v1688
  %v1753 = vsub.f32 5.0, %v1689
  %v1754 = vsub.f32 5.0, %v1690
  %v1755 = vsub.f32 5.0, %v1691
  %v1756 = vsub.f32 5.0, %v1692
  %v1757 = vsub.f32 5.0, %v1693
  %v1758 = vsub.f32 5.0, %v1694
  %v1759 = vsub.f32 5.0, %v1695
  %v1760 = vsub.f32 5.0, %v1696
  %v1761 = vsub.f32 5.0, %v1697
  %v1762 = vsub.f32 5.0, %v1698
  %v1763 = vsub.f32 5.0, %v1699
  %v1764 = vsub.f32 5.0, %v1700
  %v1765 = vsub.f32 5.0, %v1701
  %v1766 = vsub.f32 5.0, %v1702
  %v1767 = vsub.f32 5.0, %v1703
  %v1768 = vsub.f32 5.0, %v1704
  %v1769 = vsub.f32 5.0, %v1705
  %v1770 = vsub.f32 5.0, %v1706
  %v1771 = vsub.f32 5.0, %v1707
  %v1772 = vsub.f32 5.0, %v1708
  %v1773 = vsub.f32 5.0, %v1709
  %v1774 = vsub.f32 5.0, %v1710
  %v1775 = vsub.f32 5.0, %v1711
  %v1776 = vsub.f32 5.0, %v1712
  %v1777 = vsub.f32 5.0, %v1713
  %v1778 = vsub.f32 5.0, %v1714
  %v1779 = vsub.f32 5.0, %v1715
  %v1780 = vsub.f32 5.0, %v1716
  %v1781 = vsub.f32 5.0, %v1717
  %v1782 = vsub.f32 5.0, %v1718
  %v1783 = vsel %vm1719, %v1751, %v1687
  %v1784 = vsel %vm1720, %v1752, %v1688
  %v1785 = vsel %vm1721, %v1753, %v1689
  %v1786 = vsel %vm1722, %v1754, %v1690
  %v1787 = vsel %vm1723, %v1755, %v1691
  %v1788 = vsel %vm1724, %v1756, %v1692
  %v1789 = vsel %vm1725, %v1757, %v1693
  %v1790 = vsel %vm1726, %v1758, %v1694
  %v1791 = vsel %vm1727, %v1759, %v1695
  %v1792 = vsel %vm1728, %v1760, %v1696
  %v1793 = vsel %vm1729, %v1761, %v1697
  %v1794 = vsel %vm1730, %v1762, %v1698
  %v1795 = vsel %vm1731, %v1763, %v1699
  %v1796 = vsel %vm1732, %v1764, %v1700
  %v1797 = vsel %vm1733, %v1765, %v1701
  %v1798 = vsel %vm1734, %v1766, %v1702
  %v1799 = vsel %vm1735, %v1767, %v1703
  %v1800 = vsel %vm1736, %v1768, %v1704
  %v1801 = vsel %vm1737, %v1769, %v1705
  %v1802 = vsel %vm1738, %v1770, %v1706
  %v1803 = vsel %vm1739, %v1771, %v1707
  %v1804 = vsel %vm1740, %v1772, %v1708
  %v1805 = vsel %vm1741, %v1773, %v1709
  %v1806 = vsel %vm1742, %v1774, %v1710
  %v1807 = vsel %vm1743, %v1775, %v1711
  %v1808 = vsel %vm1744, %v1776, %v1712
  %v1809 = vsel %vm1745, %v1777, %v1713
  %v1810 = vsel %vm1746, %v1778, %v1714
  %v1811 = vsel %vm1747, %v1779, %v1715
  %v1812 = vsel %vm1748, %v1780, %v1716
  %v1813 = vsel %vm1749, %v1781, %v1717
  %v1814 = vsel %vm1750, %v1782, %v1718
  %vm1815 = vcmp.lt.f32.partialorder %v727, 0.0
  %vm1816 = vcmp.lt.f32.partialorder %v728, 0.0
  %vm1817 = vcmp.lt.f32.partialorder %v729, 0.0
  %vm1818 = vcmp.lt.f32.partialorder %v730, 0.0
  %vm1819 = vcmp.lt.f32.partialorder %v731, 0.0
  %vm1820 = vcmp.lt.f32.partialorder %v732, 0.0
  %vm1821 = vcmp.lt.f32.partialorder %v733, 0.0
  %vm1822 = vcmp.lt.f32.partialorder %v734, 0.0
  %vm1823 = vcmp.lt.f32.partialorder %v735, 0.0
  %vm1824 = vcmp.lt.f32.partialorder %v736, 0.0
  %vm1825 = vcmp.lt.f32.partialorder %v737, 0.0
  %vm1826 = vcmp.lt.f32.partialorder %v738, 0.0
  %vm1827 = vcmp.lt.f32.partialorder %v739, 0.0
  %vm1828 = vcmp.lt.f32.partialorder %v740, 0.0
  %vm1829 = vcmp.lt.f32.partialorder %v741, 0.0
  %vm1830 = vcmp.lt.f32.partialorder %v742, 0.0
  %vm1831 = vcmp.lt.f32.partialorder %v743, 0.0
  %vm1832 = vcmp.lt.f32.partialorder %v744, 0.0
  %vm1833 = vcmp.lt.f32.partialorder %v745, 0.0
  %vm1834 = vcmp.lt.f32.partialorder %v746, 0.0
  %vm1835 = vcmp.lt.f32.partialorder %v747, 0.0
  %vm1836 = vcmp.lt.f32.partialorder %v748, 0.0
  %vm1837 = vcmp.lt.f32.partialorder %v749, 0.0
  %vm1838 = vcmp.lt.f32.partialorder %v750, 0.0
  %vm1839 = vcmp.lt.f32.partialorder %v751, 0.0
  %vm1840 = vcmp.lt.f32.partialorder %v752, 0.0
  %vm1841 = vcmp.lt.f32.partialorder %v753, 0.0
  %vm1842 = vcmp.lt.f32.partialorder %v754, 0.0
  %vm1843 = vcmp.lt.f32.partialorder %v755, 0.0
  %vm1844 = vcmp.lt.f32.partialorder %v756, 0.0
  %vm1845 = vcmp.lt.f32.partialorder %v757, 0.0
  %vm1846 = vcmp.lt.f32.partialorder %v758, 0.0
  %v1847 = vsub.f32 10.0, %v1783
  %v1848 = vsub.f32 10.0, %v1784
  %v1849 = vsub.f32 10.0, %v1785
  %v1850 = vsub.f32 10.0, %v1786
  %v1851 = vsub.f32 10.0, %v1787
  %v1852 = vsub.f32 10.0, %v1788
  %v1853 = vsub.f32 10.0, %v1789
  %v1854 = vsub.f32 10.0, %v1790
  %v1855 = vsub.f32 10.0, %v1791
  %v1856 = vsub.f32 10.0, %v1792
  %v1857 = vsub.f32 10.0, %v1793
  %v1858 = vsub.f32 10.0, %v1794
  %v1859 = vsub.f32 10.0, %v1795
  %v1860 = vsub.f32 10.0, %v1796
  %v1861 = vsub.f32 10.0, %v1797
  %v1862 = vsub.f32 10.0, %v1798
  %v1863 = vsub.f32 10.0, %v1799
  %v1864 = vsub.f32 10.0, %v1800
  %v1865 = vsub.f32 10.0, %v1801
  %v1866 = vsub.f32 10.0, %v1802
  %v1867 = vsub.f32 10.0, %v1803
  %v1868 = vsub.f32 10.0, %v1804
  %v1869 = vsub.f32 10.0, %v1805
  %v1870 = vsub.f32 10.0, %v1806
  %v1871 = vsub.f32 10.0, %v1807
  %v1872 = vsub.f32 10.0, %v1808
  %v1873 = vsub.f32 10.0, %v1809
  %v1874 = vsub.f32 10.0, %v1810
  %v1875 = vsub.f32 10.0, %v1811
  %v1876 = vsub.f32 10.0, %v1812
  %v1877 = vsub.f32 10.0, %v1813
  %v1878 = vsub.f32 10.0, %v1814
  %v1879 = vsel %vm1815, %v1847, %v1783
  %v1880 = vsel %vm1816, %v1848, %v1784
  %v1881 = vsel %vm1817, %v1849, %v1785
  %v1882 = vsel %vm1818, %v1850, %v1786
  %v1883 = vsel %vm1819, %v1851, %v1787
  %v1884 = vsel %vm1820, %v1852, %v1788
  %v1885 = vsel %vm1821, %v1853, %v1789
  %v1886 = vsel %vm1822, %v1854, %v1790
  %v1887 = vsel %vm1823, %v1855, %v1791
  %v1888 = vsel %vm1824, %v1856, %v1792
  %v1889 = vsel %vm1825, %v1857, %v1793
  %v1890 = vsel %vm1826, %v1858, %v1794
  %v1891 = vsel %vm1827, %v1859, %v1795
  %v1892 = vsel %vm1828, %v1860, %v1796
  %v1893 = vsel %vm1829, %v1861, %v1797
  %v1894 = vsel %vm1830, %v1862, %v1798
  %v1895 = vsel %vm1831, %v1863, %v1799
  %v1896 = vsel %vm1832, %v1864, %v1800
  %v1897 = vsel %vm1833, %v1865, %v1801
  %v1898 = vsel %vm1834, %v1866, %v1802
  %v1899 = vsel %vm1835, %v1867, %v1803
  %v1900 = vsel %vm1836, %v1868, %v1804
  %v1901 = vsel %vm1837, %v1869, %v1805
  %v1902 = vsel %vm1838, %v1870, %v1806
  %v1903 = vsel %vm1839, %v1871, %v1807
  %v1904 = vsel %vm1840, %v1872, %v1808
  %v1905 = vsel %vm1841, %v1873, %v1809
  %v1906 = vsel %vm1842, %v1874, %v1810
  %v1907 = vsel %vm1843, %v1875, %v1811
  %v1908 = vsel %vm1844, %v1876, %v1812
  %v1909 = vsel %vm1845, %v1877, %v1813
  %v1910 = vsel %vm1846, %v1878, %v1814
  %vm1911 = vcmp.lt.f32.partialorder %v180, 0.0
  %vm1912 = vcmp.lt.f32.partialorder %v181, 0.0
  %vm1913 = vcmp.lt.f32.partialorder %v182, 0.0
  %vm1914 = vcmp.lt.f32.partialorder %v183, 0.0
  %vm1915 = vcmp.lt.f32.partialorder %v184, 0.0
  %vm1916 = vcmp.lt.f32.partialorder %v185, 0.0
  %vm1917 = vcmp.lt.f32.partialorder %v186, 0.0
  %vm1918 = vcmp.lt.f32.partialorder %v187, 0.0
  %vm1919 = vcmp.lt.f32.partialorder %v188, 0.0
  %vm1920 = vcmp.lt.f32.partialorder %v189, 0.0
  %vm1921 = vcmp.lt.f32.partialorder %v190, 0.0
  %vm1922 = vcmp.lt.f32.partialorder %v191, 0.0
  %vm1923 = vcmp.lt.f32.partialorder %v192, 0.0
  %vm1924 = vcmp.lt.f32.partialorder %v193, 0.0
  %vm1925 = vcmp.lt.f32.partialorder %v194, 0.0
  %vm1926 = vcmp.lt.f32.partialorder %v195, 0.0
  %vm1927 = vcmp.lt.f32.partialorder %v196, 0.0
  %vm1928 = vcmp.lt.f32.partialorder %v197, 0.0
  %vm1929 = vcmp.lt.f32.partialorder %v198, 0.0
  %vm1930 = vcmp.lt.f32.partialorder %v199, 0.0
  %vm1931 = vcmp.lt.f32.partialorder %v200, 0.0
  %vm1932 = vcmp.lt.f32.partialorder %v201, 0.0
  %vm1933 = vcmp.lt.f32.partialorder %v202, 0.0
  %vm1934 = vcmp.lt.f32.partialorder %v203, 0.0
  %vm1935 = vcmp.lt.f32.partialorder %v204, 0.0
  %vm1936 = vcmp.lt.f32.partialorder %v205, 0.0
  %vm1937 = vcmp.lt.f32.partialorder %v206, 0.0
  %vm1938 = vcmp.lt.f32.partialorder %v207, 0.0
  %vm1939 = vcmp.lt.f32.partialorder %v208, 0.0
  %vm1940 = vcmp.lt.f32.partialorder %v209, 0.0
  %vm1941 = vcmp.lt.f32.partialorder %v210, 0.0
  %vm1942 = vcmp.lt.f32.partialorder %v211, 0.0
  %v1943 = vsub.f32 0.0, %v1879
  %v1944 = vsub.f32 0.0, %v1880
  %v1945 = vsub.f32 0.0, %v1881
  %v1946 = vsub.f32 0.0, %v1882
  %v1947 = vsub.f32 0.0, %v1883
  %v1948 = vsub.f32 0.0, %v1884
  %v1949 = vsub.f32 0.0, %v1885
  %v1950 = vsub.f32 0.0, %v1886
  %v1951 = vsub.f32 0.0, %v1887
  %v1952 = vsub.f32 0.0, %v1888
  %v1953 = vsub.f32 0.0, %v1889
  %v1954 = vsub.f32 0.0, %v1890
  %v1955 = vsub.f32 0.0, %v1891
  %v1956 = vsub.f32 0.0, %v1892
  %v1957 = vsub.f32 0.0, %v1893
  %v1958 = vsub.f32 0.0, %v1894
  %v1959 = vsub.f32 0.0, %v1895
  %v1960 = vsub.f32 0.0, %v1896
  %v1961 = vsub.f32 0.0, %v1897
  %v1962 = vsub.f32 0.0, %v1898
  %v1963 = vsub.f32 0.0, %v1899
  %v1964 = vsub.f32 0.0, %v1900
  %v1965 = vsub.f32 0.0, %v1901
  %v1966 = vsub.f32 0.0, %v1902
  %v1967 = vsub.f32 0.0, %v1903
  %v1968 = vsub.f32 0.0, %v1904
  %v1969 = vsub.f32 0.0, %v1905
  %v1970 = vsub.f32 0.0, %v1906
  %v1971 = vsub.f32 0.0, %v1907
  %v1972 = vsub.f32 0.0, %v1908
  %v1973 = vsub.f32 0.0, %v1909
  %v1974 = vsub.f32 0.0, %v1910
  %v1975 = vsel %vm1911, %v1943, %v1879
  %v1976 = vsel %vm1912, %v1944, %v1880
  %v1977 = vsel %vm1913, %v1945, %v1881
  %v1978 = vsel %vm1914, %v1946, %v1882
  %v1979 = vsel %vm1915, %v1947, %v1883
  %v1980 = vsel %vm1916, %v1948, %v1884
  %v1981 = vsel %vm1917, %v1949, %v1885
  %v1982 = vsel %vm1918, %v1950, %v1886
  %v1983 = vsel %vm1919, %v1951, %v1887
  %v1984 = vsel %vm1920, %v1952, %v1888
  %v1985 = vsel %vm1921, %v1953, %v1889
  %v1986 = vsel %vm1922, %v1954, %v1890
  %v1987 = vsel %vm1923, %v1955, %v1891
  %v1988 = vsel %vm1924, %v1956, %v1892
  %v1989 = vsel %vm1925, %v1957, %v1893
  %v1990 = vsel %vm1926, %v1958, %v1894
  %v1991 = vsel %vm1927, %v1959, %v1895
  %v1992 = vsel %vm1928, %v1960, %v1896
  %v1993 = vsel %vm1929, %v1961, %v1897
  %v1994 = vsel %vm1930, %v1962, %v1898
  %v1995 = vsel %vm1931, %v1963, %v1899
  %v1996 = vsel %vm1932, %v1964, %v1900
  %v1997 = vsel %vm1933, %v1965, %v1901
  %v1998 = vsel %vm1934, %v1966, %v1902
  %v1999 = vsel %vm1935, %v1967, %v1903
  %v2000 = vsel %vm1936, %v1968, %v1904
  %v2001 = vsel %vm1937, %v1969, %v1905
  %v2002 = vsel %vm1938, %v1970, %v1906
  %v2003 = vsel %vm1939, %v1971, %v1907
  %v2004 = vsel %vm1940, %v1972, %v1908
  %v2005 = vsel %vm1941, %v1973, %v1909
  %v2006 = vsel %vm1942, %v1974, %v1910
  %v2007 = vmax.f32 %v1975, -10.0
  %v2008 = vmax.f32 %v1976, -10.0
  %v2009 = vmax.f32 %v1977, -10.0
  %v2010 = vmax.f32 %v1978, -10.0
  %v2011 = vmax.f32 %v1979, -10.0
  %v2012 = vmax.f32 %v1980, -10.0
  %v2013 = vmax.f32 %v1981, -10.0
  %v2014 = vmax.f32 %v1982, -10.0
  %v2015 = vmax.f32 %v1983, -10.0
  %v2016 = vmax.f32 %v1984, -10.0
  %v2017 = vmax.f32 %v1985, -10.0
  %v2018 = vmax.f32 %v1986, -10.0
  %v2019 = vmax.f32 %v1987, -10.0
  %v2020 = vmax.f32 %v1988, -10.0
  %v2021 = vmax.f32 %v1989, -10.0
  %v2022 = vmax.f32 %v1990, -10.0
  %v2023 = vmax.f32 %v1991, -10.0
  %v2024 = vmax.f32 %v1992, -10.0
  %v2025 = vmax.f32 %v1993, -10.0
  %v2026 = vmax.f32 %v1994, -10.0
  %v2027 = vmax.f32 %v1995, -10.0
  %v2028 = vmax.f32 %v1996, -10.0
  %v2029 = vmax.f32 %v1997, -10.0
  %v2030 = vmax.f32 %v1998, -10.0
  %v2031 = vmax.f32 %v1999, -10.0
  %v2032 = vmax.f32 %v2000, -10.0
  %v2033 = vmax.f32 %v2001, -10.0
  %v2034 = vmax.f32 %v2002, -10.0
  %v2035 = vmax.f32 %v2003, -10.0
  %v2036 = vmax.f32 %v2004, -10.0
  %v2037 = vmax.f32 %v2005, -10.0
  %v2038 = vmax.f32 %v2006, -10.0
  %v2039 = vmin.f32 %v2007, 10.0
  %v2040 = vmin.f32 %v2008, 10.0
  %v2041 = vmin.f32 %v2009, 10.0
  %v2042 = vmin.f32 %v2010, 10.0
  %v2043 = vmin.f32 %v2011, 10.0
  %v2044 = vmin.f32 %v2012, 10.0
  %v2045 = vmin.f32 %v2013, 10.0
  %v2046 = vmin.f32 %v2014, 10.0
  %v2047 = vmin.f32 %v2015, 10.0
  %v2048 = vmin.f32 %v2016, 10.0
  %v2049 = vmin.f32 %v2017, 10.0
  %v2050 = vmin.f32 %v2018, 10.0
  %v2051 = vmin.f32 %v2019, 10.0
  %v2052 = vmin.f32 %v2020, 10.0
  %v2053 = vmin.f32 %v2021, 10.0
  %v2054 = vmin.f32 %v2022, 10.0
  %v2055 = vmin.f32 %v2023, 10.0
  %v2056 = vmin.f32 %v2024, 10.0
  %v2057 = vmin.f32 %v2025, 10.0
  %v2058 = vmin.f32 %v2026, 10.0
  %v2059 = vmin.f32 %v2027, 10.0
  %v2060 = vmin.f32 %v2028, 10.0
  %v2061 = vmin.f32 %v2029, 10.0
  %v2062 = vmin.f32 %v2030, 10.0
  %v2063 = vmin.f32 %v2031, 10.0
  %v2064 = vmin.f32 %v2032, 10.0
  %v2065 = vmin.f32 %v2033, 10.0
  %v2066 = vmin.f32 %v2034, 10.0
  %v2067 = vmin.f32 %v2035, 10.0
  %v2068 = vmin.f32 %v2036, 10.0
  %v2069 = vmin.f32 %v2037, 10.0
  %v2070 = vmin.f32 %v2038, 10.0
  %v2071 = vcvt.f32.s32.to.zero.pseudo %v2039
  %v2072 = vcvt.f32.s32.to.zero.pseudo %v2040
  %v2073 = vcvt.f32.s32.to.zero.pseudo %v2041
  %v2074 = vcvt.f32.s32.to.zero.pseudo %v2042
  %v2075 = vcvt.f32.s32.to.zero.pseudo %v2043
  %v2076 = vcvt.f32.s32.to.zero.pseudo %v2044
  %v2077 = vcvt.f32.s32.to.zero.pseudo %v2045
  %v2078 = vcvt.f32.s32.to.zero.pseudo %v2046
  %v2079 = vcvt.f32.s32.to.zero.pseudo %v2047
  %v2080 = vcvt.f32.s32.to.zero.pseudo %v2048
  %v2081 = vcvt.f32.s32.to.zero.pseudo %v2049
  %v2082 = vcvt.f32.s32.to.zero.pseudo %v2050
  %v2083 = vcvt.f32.s32.to.zero.pseudo %v2051
  %v2084 = vcvt.f32.s32.to.zero.pseudo %v2052
  %v2085 = vcvt.f32.s32.to.zero.pseudo %v2053
  %v2086 = vcvt.f32.s32.to.zero.pseudo %v2054
  %v2087 = vcvt.f32.s32.to.zero.pseudo %v2055
  %v2088 = vcvt.f32.s32.to.zero.pseudo %v2056
  %v2089 = vcvt.f32.s32.to.zero.pseudo %v2057
  %v2090 = vcvt.f32.s32.to.zero.pseudo %v2058
  %v2091 = vcvt.f32.s32.to.zero.pseudo %v2059
  %v2092 = vcvt.f32.s32.to.zero.pseudo %v2060
  %v2093 = vcvt.f32.s32.to.zero.pseudo %v2061
  %v2094 = vcvt.f32.s32.to.zero.pseudo %v2062
  %v2095 = vcvt.f32.s32.to.zero.pseudo %v2063
  %v2096 = vcvt.f32.s32.to.zero.pseudo %v2064
  %v2097 = vcvt.f32.s32.to.zero.pseudo %v2065
  %v2098 = vcvt.f32.s32.to.zero.pseudo %v2066
  %v2099 = vcvt.f32.s32.to.zero.pseudo %v2067
  %v2100 = vcvt.f32.s32.to.zero.pseudo %v2068
  %v2101 = vcvt.f32.s32.to.zero.pseudo %v2069
  %v2102 = vcvt.f32.s32.to.zero.pseudo %v2070
  %v2103 = vcvt.s32.f32 %v2071
  %v2104 = vcvt.s32.f32 %v2072
  %v2105 = vcvt.s32.f32 %v2073
  %v2106 = vcvt.s32.f32 %v2074
  %v2107 = vcvt.s32.f32 %v2075
  %v2108 = vcvt.s32.f32 %v2076
  %v2109 = vcvt.s32.f32 %v2077
  %v2110 = vcvt.s32.f32 %v2078
  %v2111 = vcvt.s32.f32 %v2079
  %v2112 = vcvt.s32.f32 %v2080
  %v2113 = vcvt.s32.f32 %v2081
  %v2114 = vcvt.s32.f32 %v2082
  %v2115 = vcvt.s32.f32 %v2083
  %v2116 = vcvt.s32.f32 %v2084
  %v2117 = vcvt.s32.f32 %v2085
  %v2118 = vcvt.s32.f32 %v2086
  %v2119 = vcvt.s32.f32 %v2087
  %v2120 = vcvt.s32.f32 %v2088
  %v2121 = vcvt.s32.f32 %v2089
  %v2122 = vcvt.s32.f32 %v2090
  %v2123 = vcvt.s32.f32 %v2091
  %v2124 = vcvt.s32.f32 %v2092
  %v2125 = vcvt.s32.f32 %v2093
  %v2126 = vcvt.s32.f32 %v2094
  %v2127 = vcvt.s32.f32 %v2095
  %v2128 = vcvt.s32.f32 %v2096
  %v2129 = vcvt.s32.f32 %v2097
  %v2130 = vcvt.s32.f32 %v2098
  %v2131 = vcvt.s32.f32 %v2099
  %v2132 = vcvt.s32.f32 %v2100
  %v2133 = vcvt.s32.f32 %v2101
  %v2134 = vcvt.s32.f32 %v2102
  %vm2135 = vcmp.eq.f32.partialorder %v2039, %v2103
  %vm2136 = vcmp.eq.f32.partialorder %v2040, %v2104
  %vm2137 = vcmp.eq.f32.partialorder %v2041, %v2105
  %vm2138 = vcmp.eq.f32.partialorder %v2042, %v2106
  %vm2139 = vcmp.eq.f32.partialorder %v2043, %v2107
  %vm2140 = vcmp.eq.f32.partialorder %v2044, %v2108
  %vm2141 = vcmp.eq.f32.partialorder %v2045, %v2109
  %vm2142 = vcmp.eq.f32.partialorder %v2046, %v2110
  %vm2143 = vcmp.eq.f32.partialorder %v2047, %v2111
  %vm2144 = vcmp.eq.f32.partialorder %v2048, %v2112
  %vm2145 = vcmp.eq.f32.partialorder %v2049, %v2113
  %vm2146 = vcmp.eq.f32.partialorder %v2050, %v2114
  %vm2147 = vcmp.eq.f32.partialorder %v2051, %v2115
  %vm2148 = vcmp.eq.f32.partialorder %v2052, %v2116
  %vm2149 = vcmp.eq.f32.partialorder %v2053, %v2117
  %vm2150 = vcmp.eq.f32.partialorder %v2054, %v2118
  %vm2151 = vcmp.eq.f32.partialorder %v2055, %v2119
  %vm2152 = vcmp.eq.f32.partialorder %v2056, %v2120
  %vm2153 = vcmp.eq.f32.partialorder %v2057, %v2121
  %vm2154 = vcmp.eq.f32.partialorder %v2058, %v2122
  %vm2155 = vcmp.eq.f32.partialorder %v2059, %v2123
  %vm2156 = vcmp.eq.f32.partialorder %v2060, %v2124
  %vm2157 = vcmp.eq.f32.partialorder %v2061, %v2125
  %vm2158 = vcmp.eq.f32.partialorder %v2062, %v2126
  %vm2159 = vcmp.eq.f32.partialorder %v2063, %v2127
  %vm2160 = vcmp.eq.f32.partialorder %v2064, %v2128
  %vm2161 = vcmp.eq.f32.partialorder %v2065, %v2129
  %vm2162 = vcmp.eq.f32.partialorder %v2066, %v2130
  %vm2163 = vcmp.eq.f32.partialorder %v2067, %v2131
  %vm2164 = vcmp.eq.f32.partialorder %v2068, %v2132
  %vm2165 = vcmp.eq.f32.partialorder %v2069, %v2133
  %vm2166 = vcmp.eq.f32.partialorder %v2070, %v2134
  %vm2167 = vcmp.lt.f32.partialorder %v2039, %v2103
  %vm2168 = vcmp.lt.f32.partialorder %v2040, %v2104
  %vm2169 = vcmp.lt.f32.partialorder %v2041, %v2105
  %vm2170 = vcmp.lt.f32.partialorder %v2042, %v2106
  %vm2171 = vcmp.lt.f32.partialorder %v2043, %v2107
  %vm2172 = vcmp.lt.f32.partialorder %v2044, %v2108
  %vm2173 = vcmp.lt.f32.partialorder %v2045, %v2109
  %vm2174 = vcmp.lt.f32.partialorder %v2046, %v2110
  %vm2175 = vcmp.lt.f32.partialorder %v2047, %v2111
  %vm2176 = vcmp.lt.f32.partialorder %v2048, %v2112
  %vm2177 = vcmp.lt.f32.partialorder %v2049, %v2113
  %vm2178 = vcmp.lt.f32.partialorder %v2050, %v2114
  %vm2179 = vcmp.lt.f32.partialorder %v2051, %v2115
  %vm2180 = vcmp.lt.f32.partialorder %v2052, %v2116
  %vm2181 = vcmp.lt.f32.partialorder %v2053, %v2117
  %vm2182 = vcmp.lt.f32.partialorder %v2054, %v2118
  %vm2183 = vcmp.lt.f32.partialorder %v2055, %v2119
  %vm2184 = vcmp.lt.f32.partialorder %v2056, %v2120
  %vm2185 = vcmp.lt.f32.partialorder %v2057, %v2121
  %vm2186 = vcmp.lt.f32.partialorder %v2058, %v2122
  %vm2187 = vcmp.lt.f32.partialorder %v2059, %v2123
  %vm2188 = vcmp.lt.f32.partialorder %v2060, %v2124
  %vm2189 = vcmp.lt.f32.partialorder %v2061, %v2125
  %vm2190 = vcmp.lt.f32.partialorder %v2062, %v2126
  %vm2191 = vcmp.lt.f32.partialorder %v2063, %v2127
  %vm2192 = vcmp.lt.f32.partialorder %v2064, %v2128
  %vm2193 = vcmp.lt.f32.partialorder %v2065, %v2129
  %vm2194 = vcmp.lt.f32.partialorder %v2066, %v2130
  %vm2195 = vcmp.lt.f32.partialorder %v2067, %v2131
  %vm2196 = vcmp.lt.f32.partialorder %v2068, %v2132
  %vm2197 = vcmp.lt.f32.partialorder %v2069, %v2133
  %vm2198 = vcmp.lt.f32.partialorder %v2070, %v2134
  %v2199 = vsel %vm2167, 1, 0
  %v2200 = vsel %vm2168, 1, 0
  %v2201 = vsel %vm2169, 1, 0
  %v2202 = vsel %vm2170, 1, 0
  %v2203 = vsel %vm2171, 1, 0
  %v2204 = vsel %vm2172, 1, 0
  %v2205 = vsel %vm2173, 1, 0
  %v2206 = vsel %vm2174, 1, 0
  %v2207 = vsel %vm2175, 1, 0
  %v2208 = vsel %vm2176, 1, 0
  %v2209 = vsel %vm2177, 1, 0
  %v2210 = vsel %vm2178, 1, 0
  %v2211 = vsel %vm2179, 1, 0
  %v2212 = vsel %vm2180, 1, 0
  %v2213 = vsel %vm2181, 1, 0
  %v2214 = vsel %vm2182, 1, 0
  %v2215 = vsel %vm2183, 1, 0
  %v2216 = vsel %vm2184, 1, 0
  %v2217 = vsel %vm2185, 1, 0
  %v2218 = vsel %vm2186, 1, 0
  %v2219 = vsel %vm2187, 1, 0
  %v2220 = vsel %vm2188, 1, 0
  %v2221 = vsel %vm2189, 1, 0
  %v2222 = vsel %vm2190, 1, 0
  %v2223 = vsel %vm2191, 1, 0
  %v2224 = vsel %vm2192, 1, 0
  %v2225 = vsel %vm2193, 1, 0
  %v2226 = vsel %vm2194, 1, 0
  %v2227 = vsel %vm2195, 1, 0
  %v2228 = vsel %vm2196, 1, 0
  %v2229 = vsel %vm2197, 1, 0
  %v2230 = vsel %vm2198, 1, 0
  %v2231 = vsub.s32 %v2071, %v2199
  %v2232 = vsub.s32 %v2072, %v2200
  %v2233 = vsub.s32 %v2073, %v2201
  %v2234 = vsub.s32 %v2074, %v2202
  %v2235 = vsub.s32 %v2075, %v2203
  %v2236 = vsub.s32 %v2076, %v2204
  %v2237 = vsub.s32 %v2077, %v2205
  %v2238 = vsub.s32 %v2078, %v2206
  %v2239 = vsub.s32 %v2079, %v2207
  %v2240 = vsub.s32 %v2080, %v2208
  %v2241 = vsub.s32 %v2081, %v2209
  %v2242 = vsub.s32 %v2082, %v2210
  %v2243 = vsub.s32 %v2083, %v2211
  %v2244 = vsub.s32 %v2084, %v2212
  %v2245 = vsub.s32 %v2085, %v2213
  %v2246 = vsub.s32 %v2086, %v2214
  %v2247 = vsub.s32 %v2087, %v2215
  %v2248 = vsub.s32 %v2088, %v2216
  %v2249 = vsub.s32 %v2089, %v2217
  %v2250 = vsub.s32 %v2090, %v2218
  %v2251 = vsub.s32 %v2091, %v2219
  %v2252 = vsub.s32 %v2092, %v2220
  %v2253 = vsub.s32 %v2093, %v2221
  %v2254 = vsub.s32 %v2094, %v2222
  %v2255 = vsub.s32 %v2095, %v2223
  %v2256 = vsub.s32 %v2096, %v2224
  %v2257 = vsub.s32 %v2097, %v2225
  %v2258 = vsub.s32 %v2098, %v2226
  %v2259 = vsub.s32 %v2099, %v2227
  %v2260 = vsub.s32 %v2100, %v2228
  %v2261 = vsub.s32 %v2101, %v2229
  %v2262 = vsub.s32 %v2102, %v2230
  %vm2263 = vcmp.lt.s32.totalorder %v2231, 0
  %vm2264 = vcmp.lt.s32.totalorder %v2232, 0
  %vm2265 = vcmp.lt.s32.totalorder %v2233, 0
  %vm2266 = vcmp.lt.s32.totalorder %v2234, 0
  %vm2267 = vcmp.lt.s32.totalorder %v2235, 0
  %vm2268 = vcmp.lt.s32.totalorder %v2236, 0
  %vm2269 = vcmp.lt.s32.totalorder %v2237, 0
  %vm2270 = vcmp.lt.s32.totalorder %v2238, 0
  %vm2271 = vcmp.lt.s32.totalorder %v2239, 0
  %vm2272 = vcmp.lt.s32.totalorder %v2240, 0
  %vm2273 = vcmp.lt.s32.totalorder %v2241, 0
  %vm2274 = vcmp.lt.s32.totalorder %v2242, 0
  %vm2275 = vcmp.lt.s32.totalorder %v2243, 0
  %vm2276 = vcmp.lt.s32.totalorder %v2244, 0
  %vm2277 = vcmp.lt.s32.totalorder %v2245, 0
  %vm2278 = vcmp.lt.s32.totalorder %v2246, 0
  %vm2279 = vcmp.lt.s32.totalorder %v2247, 0
  %vm2280 = vcmp.lt.s32.totalorder %v2248, 0
  %vm2281 = vcmp.lt.s32.totalorder %v2249, 0
  %vm2282 = vcmp.lt.s32.totalorder %v2250, 0
  %vm2283 = vcmp.lt.s32.totalorder %v2251, 0
  %vm2284 = vcmp.lt.s32.totalorder %v2252, 0
  %vm2285 = vcmp.lt.s32.totalorder %v2253, 0
  %vm2286 = vcmp.lt.s32.totalorder %v2254, 0
  %vm2287 = vcmp.lt.s32.totalorder %v2255, 0
  %vm2288 = vcmp.lt.s32.totalorder %v2256, 0
  %vm2289 = vcmp.lt.s32.totalorder %v2257, 0
  %vm2290 = vcmp.lt.s32.totalorder %v2258, 0
  %vm2291 = vcmp.lt.s32.totalorder %v2259, 0
  %vm2292 = vcmp.lt.s32.totalorder %v2260, 0
  %vm2293 = vcmp.lt.s32.totalorder %v2261, 0
  %vm2294 = vcmp.lt.s32.totalorder %v2262, 0
  %v2295 = vadd.s32 %v2231, 10
  %v2296 = vadd.s32 %v2232, 10
  %v2297 = vadd.s32 %v2233, 10
  %v2298 = vadd.s32 %v2234, 10
  %v2299 = vadd.s32 %v2235, 10
  %v2300 = vadd.s32 %v2236, 10
  %v2301 = vadd.s32 %v2237, 10
  %v2302 = vadd.s32 %v2238, 10
  %v2303 = vadd.s32 %v2239, 10
  %v2304 = vadd.s32 %v2240, 10
  %v2305 = vadd.s32 %v2241, 10
  %v2306 = vadd.s32 %v2242, 10
  %v2307 = vadd.s32 %v2243, 10
  %v2308 = vadd.s32 %v2244, 10
  %v2309 = vadd.s32 %v2245, 10
  %v2310 = vadd.s32 %v2246, 10
  %v2311 = vadd.s32 %v2247, 10
  %v2312 = vadd.s32 %v2248, 10
  %v2313 = vadd.s32 %v2249, 10
  %v2314 = vadd.s32 %v2250, 10
  %v2315 = vadd.s32 %v2251, 10
  %v2316 = vadd.s32 %v2252, 10
  %v2317 = vadd.s32 %v2253, 10
  %v2318 = vadd.s32 %v2254, 10
  %v2319 = vadd.s32 %v2255, 10
  %v2320 = vadd.s32 %v2256, 10
  %v2321 = vadd.s32 %v2257, 10
  %v2322 = vadd.s32 %v2258, 10
  %v2323 = vadd.s32 %v2259, 10
  %v2324 = vadd.s32 %v2260, 10
  %v2325 = vadd.s32 %v2261, 10
  %v2326 = vadd.s32 %v2262, 10
  %v2327 = vsel %vm2263, %v2295, %v2231
  %v2328 = vsel %vm2264, %v2296, %v2232
  %v2329 = vsel %vm2265, %v2297, %v2233
  %v2330 = vsel %vm2266, %v2298, %v2234
  %v2331 = vsel %vm2267, %v2299, %v2235
  %v2332 = vsel %vm2268, %v2300, %v2236
  %v2333 = vsel %vm2269, %v2301, %v2237
  %v2334 = vsel %vm2270, %v2302, %v2238
  %v2335 = vsel %vm2271, %v2303, %v2239
  %v2336 = vsel %vm2272, %v2304, %v2240
  %v2337 = vsel %vm2273, %v2305, %v2241
  %v2338 = vsel %vm2274, %v2306, %v2242
  %v2339 = vsel %vm2275, %v2307, %v2243
  %v2340 = vsel %vm2276, %v2308, %v2244
  %v2341 = vsel %vm2277, %v2309, %v2245
  %v2342 = vsel %vm2278, %v2310, %v2246
  %v2343 = vsel %vm2279, %v2311, %v2247
  %v2344 = vsel %vm2280, %v2312, %v2248
  %v2345 = vsel %vm2281, %v2313, %v2249
  %v2346 = vsel %vm2282, %v2314, %v2250
  %v2347 = vsel %vm2283, %v2315, %v2251
  %v2348 = vsel %vm2284, %v2316, %v2252
  %v2349 = vsel %vm2285, %v2317, %v2253
  %v2350 = vsel %vm2286, %v2318, %v2254
  %v2351 = vsel %vm2287, %v2319, %v2255
  %v2352 = vsel %vm2288, %v2320, %v2256
  %v2353 = vsel %vm2289, %v2321, %v2257
  %v2354 = vsel %vm2290, %v2322, %v2258
  %v2355 = vsel %vm2291, %v2323, %v2259
  %v2356 = vsel %vm2292, %v2324, %v2260
  %v2357 = vsel %vm2293, %v2325, %v2261
  %v2358 = vsel %vm2294, %v2326, %v2262
  %vm2359 = vcmp.ge.s32.totalorder %v2327, 10
  %vm2360 = vcmp.ge.s32.totalorder %v2328, 10
  %vm2361 = vcmp.ge.s32.totalorder %v2329, 10
  %vm2362 = vcmp.ge.s32.totalorder %v2330, 10
  %vm2363 = vcmp.ge.s32.totalorder %v2331, 10
  %vm2364 = vcmp.ge.s32.totalorder %v2332, 10
  %vm2365 = vcmp.ge.s32.totalorder %v2333, 10
  %vm2366 = vcmp.ge.s32.totalorder %v2334, 10
  %vm2367 = vcmp.ge.s32.totalorder %v2335, 10
  %vm2368 = vcmp.ge.s32.totalorder %v2336, 10
  %vm2369 = vcmp.ge.s32.totalorder %v2337, 10
  %vm2370 = vcmp.ge.s32.totalorder %v2338, 10
  %vm2371 = vcmp.ge.s32.totalorder %v2339, 10
  %vm2372 = vcmp.ge.s32.totalorder %v2340, 10
  %vm2373 = vcmp.ge.s32.totalorder %v2341, 10
  %vm2374 = vcmp.ge.s32.totalorder %v2342, 10
  %vm2375 = vcmp.ge.s32.totalorder %v2343, 10
  %vm2376 = vcmp.ge.s32.totalorder %v2344, 10
  %vm2377 = vcmp.ge.s32.totalorder %v2345, 10
  %vm2378 = vcmp.ge.s32.totalorder %v2346, 10
  %vm2379 = vcmp.ge.s32.totalorder %v2347, 10
  %vm2380 = vcmp.ge.s32.totalorder %v2348, 10
  %vm2381 = vcmp.ge.s32.totalorder %v2349, 10
  %vm2382 = vcmp.ge.s32.totalorder %v2350, 10
  %vm2383 = vcmp.ge.s32.totalorder %v2351, 10
  %vm2384 = vcmp.ge.s32.totalorder %v2352, 10
  %vm2385 = vcmp.ge.s32.totalorder %v2353, 10
  %vm2386 = vcmp.ge.s32.totalorder %v2354, 10
  %vm2387 = vcmp.ge.s32.totalorder %v2355, 10
  %vm2388 = vcmp.ge.s32.totalorder %v2356, 10
  %vm2389 = vcmp.ge.s32.totalorder %v2357, 10
  %vm2390 = vcmp.ge.s32.totalorder %v2358, 10
  %v2391 = vsub.s32 %v2327, 10
  %v2392 = vsub.s32 %v2328, 10
  %v2393 = vsub.s32 %v2329, 10
  %v2394 = vsub.s32 %v2330, 10
  %v2395 = vsub.s32 %v2331, 10
  %v2396 = vsub.s32 %v2332, 10
  %v2397 = vsub.s32 %v2333, 10
  %v2398 = vsub.s32 %v2334, 10
  %v2399 = vsub.s32 %v2335, 10
  %v2400 = vsub.s32 %v2336, 10
  %v2401 = vsub.s32 %v2337, 10
  %v2402 = vsub.s32 %v2338, 10
  %v2403 = vsub.s32 %v2339, 10
  %v2404 = vsub.s32 %v2340, 10
  %v2405 = vsub.s32 %v2341, 10
  %v2406 = vsub.s32 %v2342, 10
  %v2407 = vsub.s32 %v2343, 10
  %v2408 = vsub.s32 %v2344, 10
  %v2409 = vsub.s32 %v2345, 10
  %v2410 = vsub.s32 %v2346, 10
  %v2411 = vsub.s32 %v2347, 10
  %v2412 = vsub.s32 %v2348, 10
  %v2413 = vsub.s32 %v2349, 10
  %v2414 = vsub.s32 %v2350, 10
  %v2415 = vsub.s32 %v2351, 10
  %v2416 = vsub.s32 %v2352, 10
  %v2417 = vsub.s32 %v2353, 10
  %v2418 = vsub.s32 %v2354, 10
  %v2419 = vsub.s32 %v2355, 10
  %v2420 = vsub.s32 %v2356, 10
  %v2421 = vsub.s32 %v2357, 10
  %v2422 = vsub.s32 %v2358, 10
  %v2423 = vsel %vm2359, %v2391, %v2327
  %v2424 = vsel %vm2360, %v2392, %v2328
  %v2425 = vsel %vm2361, %v2393, %v2329
  %v2426 = vsel %vm2362, %v2394, %v2330
  %v2427 = vsel %vm2363, %v2395, %v2331
  %v2428 = vsel %vm2364, %v2396, %v2332
  %v2429 = vsel %vm2365, %v2397, %v2333
  %v2430 = vsel %vm2366, %v2398, %v2334
  %v2431 = vsel %vm2367, %v2399, %v2335
  %v2432 = vsel %vm2368, %v2400, %v2336
  %v2433 = vsel %vm2369, %v2401, %v2337
  %v2434 = vsel %vm2370, %v2402, %v2338
  %v2435 = vsel %vm2371, %v2403, %v2339
  %v2436 = vsel %vm2372, %v2404, %v2340
  %v2437 = vsel %vm2373, %v2405, %v2341
  %v2438 = vsel %vm2374, %v2406, %v2342
  %v2439 = vsel %vm2375, %v2407, %v2343
  %v2440 = vsel %vm2376, %v2408, %v2344
  %v2441 = vsel %vm2377, %v2409, %v2345
  %v2442 = vsel %vm2378, %v2410, %v2346
  %v2443 = vsel %vm2379, %v2411, %v2347
  %v2444 = vsel %vm2380, %v2412, %v2348
  %v2445 = vsel %vm2381, %v2413, %v2349
  %v2446 = vsel %vm2382, %v2414, %v2350
  %v2447 = vsel %vm2383, %v2415, %v2351
  %v2448 = vsel %vm2384, %v2416, %v2352
  %v2449 = vsel %vm2385, %v2417, %v2353
  %v2450 = vsel %vm2386, %v2418, %v2354
  %v2451 = vsel %vm2387, %v2419, %v2355
  %v2452 = vsel %vm2388, %v2420, %v2356
  %v2453 = vsel %vm2389, %v2421, %v2357
  %v2454 = vsel %vm2390, %v2422, %v2358
  %v2455 = vsel %vm2135, 1.0, %v861
  %v2456 = vsel %vm2136, 1.0, %v868
  %v2457 = vsel %vm2137, 1.0, %v875
  %v2458 = vsel %vm2138, 1.0, %v882
  %v2459 = vsel %vm2139, 1.0, %v889
  %v2460 = vsel %vm2140, 1.0, %v896
  %v2461 = vsel %vm2141, 1.0, %v903
  %v2462 = vsel %vm2142, 1.0, %v910
  %v2463 = vsel %vm2143, 1.0, %v917
  %v2464 = vsel %vm2144, 1.0, %v924
  %v2465 = vsel %vm2145, 1.0, %v931
  %v2466 = vsel %vm2146, 1.0, %v938
  %v2467 = vsel %vm2147, 1.0, %v945
  %v2468 = vsel %vm2148, 1.0, %v952
  %v2469 = vsel %vm2149, 1.0, %v959
  %v2470 = vsel %vm2150, 1.0, %v966
  %v2471 = vsel %vm2151, 1.0, %v973
  %v2472 = vsel %vm2152, 1.0, %v980
  %v2473 = vsel %vm2153, 1.0, %v987
  %v2474 = vsel %vm2154, 1.0, %v994
  %v2475 = vsel %vm2155, 1.0, %v1001
  %v2476 = vsel %vm2156, 1.0, %v1008
  %v2477 = vsel %vm2157, 1.0, %v1015
  %v2478 = vsel %vm2158, 1.0, %v1022
  %v2479 = vsel %vm2159, 1.0, %v1029
  %v2480 = vsel %vm2160, 1.0, %v1036
  %v2481 = vsel %vm2161, 1.0, %v1043
  %v2482 = vsel %vm2162, 1.0, %v1050
  %v2483 = vsel %vm2163, 1.0, %v1057
  %v2484 = vsel %vm2164, 1.0, %v1064
  %v2485 = vsel %vm2165, 1.0, %v1071
  %v2486 = vsel %vm2166, 1.0, %v1078
  %v2487 = vsub.f32 1.0, %v861
  %v2488 = vsub.f32 1.0, %v868
  %v2489 = vsub.f32 1.0, %v875
  %v2490 = vsub.f32 1.0, %v882
  %v2491 = vsub.f32 1.0, %v889
  %v2492 = vsub.f32 1.0, %v896
  %v2493 = vsub.f32 1.0, %v903
  %v2494 = vsub.f32 1.0, %v910
  %v2495 = vsub.f32 1.0, %v917
  %v2496 = vsub.f32 1.0, %v924
  %v2497 = vsub.f32 1.0, %v931
  %v2498 = vsub.f32 1.0, %v938
  %v2499 = vsub.f32 1.0, %v945
  %v2500 = vsub.f32 1.0, %v952
  %v2501 = vsub.f32 1.0, %v959
  %v2502 = vsub.f32 1.0, %v966
  %v2503 = vsub.f32 1.0, %v973
  %v2504 = vsub.f32 1.0, %v980
  %v2505 = vsub.f32 1.0, %v987
  %v2506 = vsub.f32 1.0, %v994
  %v2507 = vsub.f32 1.0, %v1001
  %v2508 = vsub.f32 1.0, %v1008
  %v2509 = vsub.f32 1.0, %v1015
  %v2510 = vsub.f32 1.0, %v1022
  %v2511 = vsub.f32 1.0, %v1029
  %v2512 = vsub.f32 1.0, %v1036
  %v2513 = vsub.f32 1.0, %v1043
  %v2514 = vsub.f32 1.0, %v1050
  %v2515 = vsub.f32 1.0, %v1057
  %v2516 = vsub.f32 1.0, %v1064
  %v2517 = vsub.f32 1.0, %v1071
  %v2518 = vsub.f32 1.0, %v1078
  %v2519 = vsel %vm2135, 0.0, %v2487
  %v2520 = vsel %vm2136, 0.0, %v2488
  %v2521 = vsel %vm2137, 0.0, %v2489
  %v2522 = vsel %vm2138, 0.0, %v2490
  %v2523 = vsel %vm2139, 0.0, %v2491
  %v2524 = vsel %vm2140, 0.0, %v2492
  %v2525 = vsel %vm2141, 0.0, %v2493
  %v2526 = vsel %vm2142, 0.0, %v2494
  %v2527 = vsel %vm2143, 0.0, %v2495
  %v2528 = vsel %vm2144, 0.0, %v2496
  %v2529 = vsel %vm2145, 0.0, %v2497
  %v2530 = vsel %vm2146, 0.0, %v2498
  %v2531 = vsel %vm2147, 0.0, %v2499
  %v2532 = vsel %vm2148, 0.0, %v2500
  %v2533 = vsel %vm2149, 0.0, %v2501
  %v2534 = vsel %vm2150, 0.0, %v2502
  %v2535 = vsel %vm2151, 0.0, %v2503
  %v2536 = vsel %vm2152, 0.0, %v2504
  %v2537 = vsel %vm2153, 0.0, %v2505
  %v2538 = vsel %vm2154, 0.0, %v2506
  %v2539 = vsel %vm2155, 0.0, %v2507
  %v2540 = vsel %vm2156, 0.0, %v2508
  %v2541 = vsel %vm2157, 0.0, %v2509
  %v2542 = vsel %vm2158, 0.0, %v2510
  %v2543 = vsel %vm2159, 0.0, %v2511
  %v2544 = vsel %vm2160, 0.0, %v2512
  %v2545 = vsel %vm2161, 0.0, %v2513
  %v2546 = vsel %vm2162, 0.0, %v2514
  %v2547 = vsel %vm2163, 0.0, %v2515
  %v2548 = vsel %vm2164, 0.0, %v2516
  %v2549 = vsel %vm2165, 0.0, %v2517
  %v2550 = vsel %vm2166, 0.0, %v2518
  %vm2551 = vcmp.eq.s32.totalorder %v2423, 0
  %vm2552 = vcmp.eq.s32.totalorder %v2424, 0
  %vm2553 = vcmp.eq.s32.totalorder %v2425, 0
  %vm2554 = vcmp.eq.s32.totalorder %v2426, 0
  %vm2555 = vcmp.eq.s32.totalorder %v2427, 0
  %vm2556 = vcmp.eq.s32.totalorder %v2428, 0
  %vm2557 = vcmp.eq.s32.totalorder %v2429, 0
  %vm2558 = vcmp.eq.s32.totalorder %v2430, 0
  %vm2559 = vcmp.eq.s32.totalorder %v2431, 0
  %vm2560 = vcmp.eq.s32.totalorder %v2432, 0
  %vm2561 = vcmp.eq.s32.totalorder %v2433, 0
  %vm2562 = vcmp.eq.s32.totalorder %v2434, 0
  %vm2563 = vcmp.eq.s32.totalorder %v2435, 0
  %vm2564 = vcmp.eq.s32.totalorder %v2436, 0
  %vm2565 = vcmp.eq.s32.totalorder %v2437, 0
  %vm2566 = vcmp.eq.s32.totalorder %v2438, 0
  %vm2567 = vcmp.eq.s32.totalorder %v2439, 0
  %vm2568 = vcmp.eq.s32.totalorder %v2440, 0
  %vm2569 = vcmp.eq.s32.totalorder %v2441, 0
  %vm2570 = vcmp.eq.s32.totalorder %v2442, 0
  %vm2571 = vcmp.eq.s32.totalorder %v2443, 0
  %vm2572 = vcmp.eq.s32.totalorder %v2444, 0
  %vm2573 = vcmp.eq.s32.totalorder %v2445, 0
  %vm2574 = vcmp.eq.s32.totalorder %v2446, 0
  %vm2575 = vcmp.eq.s32.totalorder %v2447, 0
  %vm2576 = vcmp.eq.s32.totalorder %v2448, 0
  %vm2577 = vcmp.eq.s32.totalorder %v2449, 0
  %vm2578 = vcmp.eq.s32.totalorder %v2450, 0
  %vm2579 = vcmp.eq.s32.totalorder %v2451, 0
  %vm2580 = vcmp.eq.s32.totalorder %v2452, 0
  %vm2581 = vcmp.eq.s32.totalorder %v2453, 0
  %vm2582 = vcmp.eq.s32.totalorder %v2454, 0
  %vm2583 = vcmp.eq.s32.totalorder %v2423, 9
  %vm2584 = vcmp.eq.s32.totalorder %v2424, 9
  %vm2585 = vcmp.eq.s32.totalorder %v2425, 9
  %vm2586 = vcmp.eq.s32.totalorder %v2426, 9
  %vm2587 = vcmp.eq.s32.totalorder %v2427, 9
  %vm2588 = vcmp.eq.s32.totalorder %v2428, 9
  %vm2589 = vcmp.eq.s32.totalorder %v2429, 9
  %vm2590 = vcmp.eq.s32.totalorder %v2430, 9
  %vm2591 = vcmp.eq.s32.totalorder %v2431, 9
  %vm2592 = vcmp.eq.s32.totalorder %v2432, 9
  %vm2593 = vcmp.eq.s32.totalorder %v2433, 9
  %vm2594 = vcmp.eq.s32.totalorder %v2434, 9
  %vm2595 = vcmp.eq.s32.totalorder %v2435, 9
  %vm2596 = vcmp.eq.s32.totalorder %v2436, 9
  %vm2597 = vcmp.eq.s32.totalorder %v2437, 9
  %vm2598 = vcmp.eq.s32.totalorder %v2438, 9
  %vm2599 = vcmp.eq.s32.totalorder %v2439, 9
  %vm2600 = vcmp.eq.s32.totalorder %v2440, 9
  %vm2601 = vcmp.eq.s32.totalorder %v2441, 9
  %vm2602 = vcmp.eq.s32.totalorder %v2442, 9
  %vm2603 = vcmp.eq.s32.totalorder %v2443, 9
  %vm2604 = vcmp.eq.s32.totalorder %v2444, 9
  %vm2605 = vcmp.eq.s32.totalorder %v2445, 9
  %vm2606 = vcmp.eq.s32.totalorder %v2446, 9
  %vm2607 = vcmp.eq.s32.totalorder %v2447, 9
  %vm2608 = vcmp.eq.s32.totalorder %v2448, 9
  %vm2609 = vcmp.eq.s32.totalorder %v2449, 9
  %vm2610 = vcmp.eq.s32.totalorder %v2450, 9
  %vm2611 = vcmp.eq.s32.totalorder %v2451, 9
  %vm2612 = vcmp.eq.s32.totalorder %v2452, 9
  %vm2613 = vcmp.eq.s32.totalorder %v2453, 9
  %vm2614 = vcmp.eq.s32.totalorder %v2454, 9
  %v2615 = vsel %vm2551, %v2455, 0.0
  %v2616 = vsel %vm2552, %v2456, 0.0
  %v2617 = vsel %vm2553, %v2457, 0.0
  %v2618 = vsel %vm2554, %v2458, 0.0
  %v2619 = vsel %vm2555, %v2459, 0.0
  %v2620 = vsel %vm2556, %v2460, 0.0
  %v2621 = vsel %vm2557, %v2461, 0.0
  %v2622 = vsel %vm2558, %v2462, 0.0
  %v2623 = vsel %vm2559, %v2463, 0.0
  %v2624 = vsel %vm2560, %v2464, 0.0
  %v2625 = vsel %vm2561, %v2465, 0.0
  %v2626 = vsel %vm2562, %v2466, 0.0
  %v2627 = vsel %vm2563, %v2467, 0.0
  %v2628 = vsel %vm2564, %v2468, 0.0
  %v2629 = vsel %vm2565, %v2469, 0.0
  %v2630 = vsel %vm2566, %v2470, 0.0
  %v2631 = vsel %vm2567, %v2471, 0.0
  %v2632 = vsel %vm2568, %v2472, 0.0
  %v2633 = vsel %vm2569, %v2473, 0.0
  %v2634 = vsel %vm2570, %v2474, 0.0
  %v2635 = vsel %vm2571, %v2475, 0.0
  %v2636 = vsel %vm2572, %v2476, 0.0
  %v2637 = vsel %vm2573, %v2477, 0.0
  %v2638 = vsel %vm2574, %v2478, 0.0
  %v2639 = vsel %vm2575, %v2479, 0.0
  %v2640 = vsel %vm2576, %v2480, 0.0
  %v2641 = vsel %vm2577, %v2481, 0.0
  %v2642 = vsel %vm2578, %v2482, 0.0
  %v2643 = vsel %vm2579, %v2483, 0.0
  %v2644 = vsel %vm2580, %v2484, 0.0
  %v2645 = vsel %vm2581, %v2485, 0.0
  %v2646 = vsel %vm2582, %v2486, 0.0
  %v2647 = vsel %vm2583, %v2519, 0.0
  %v2648 = vsel %vm2584, %v2520, 0.0
  %v2649 = vsel %vm2585, %v2521, 0.0
  %v2650 = vsel %vm2586, %v2522, 0.0
  %v2651 = vsel %vm2587, %v2523, 0.0
  %v2652 = vsel %vm2588, %v2524, 0.0
  %v2653 = vsel %vm2589, %v2525, 0.0
  %v2654 = vsel %vm2590, %v2526, 0.0
  %v2655 = vsel %vm2591, %v2527, 0.0
  %v2656 = vsel %vm2592, %v2528, 0.0
  %v2657 = vsel %vm2593, %v2529, 0.0
  %v2658 = vsel %vm2594, %v2530, 0.0
  %v2659 = vsel %vm2595, %v2531, 0.0
  %v2660 = vsel %vm2596, %v2532, 0.0
  %v2661 = vsel %vm2597, %v2533, 0.0
  %v2662 = vsel %vm2598, %v2534, 0.0
  %v2663 = vsel %vm2599, %v2535, 0.0
  %v2664 = vsel %vm2600, %v2536, 0.0
  %v2665 = vsel %vm2601, %v2537, 0.0
  %v2666 = vsel %vm2602, %v2538, 0.0
  %v2667 = vsel %vm2603, %v2539, 0.0
  %v2668 = vsel %vm2604, %v2540, 0.0
  %v2669 = vsel %vm2605, %v2541, 0.0
  %v2670 = vsel %vm2606, %v2542, 0.0
  %v2671 = vsel %vm2607, %v2543, 0.0
  %v2672 = vsel %vm2608, %v2544, 0.0
  %v2673 = vsel %vm2609, %v2545, 0.0
  %v2674 = vsel %vm2610, %v2546, 0.0
  %v2675 = vsel %vm2611, %v2547, 0.0
  %v2676 = vsel %vm2612, %v2548, 0.0
  %v2677 = vsel %vm2613, %v2549, 0.0
  %v2678 = vsel %vm2614, %v2550, 0.0
  %v2679 = vadd.f32 %v2615, %v2647
  %v2680 = vadd.f32 %v2616, %v2648
  %v2681 = vadd.f32 %v2617, %v2649
  %v2682 = vadd.f32 %v2618, %v2650
  %v2683 = vadd.f32 %v2619, %v2651
  %v2684 = vadd.f32 %v2620, %v2652
  %v2685 = vadd.f32 %v2621, %v2653
  %v2686 = vadd.f32 %v2622, %v2654
  %v2687 = vadd.f32 %v2623, %v2655
  %v2688 = vadd.f32 %v2624, %v2656
  %v2689 = vadd.f32 %v2625, %v2657
  %v2690 = vadd.f32 %v2626, %v2658
  %v2691 = vadd.f32 %v2627, %v2659
  %v2692 = vadd.f32 %v2628, %v2660
  %v2693 = vadd.f32 %v2629, %v2661
  %v2694 = vadd.f32 %v2630, %v2662
  %v2695 = vadd.f32 %v2631, %v2663
  %v2696 = vadd.f32 %v2632, %v2664
  %v2697 = vadd.f32 %v2633, %v2665
  %v2698 = vadd.f32 %v2634, %v2666
  %v2699 = vadd.f32 %v2635, %v2667
  %v2700 = vadd.f32 %v2636, %v2668
  %v2701 = vadd.f32 %v2637, %v2669
  %v2702 = vadd.f32 %v2638, %v2670
  %v2703 = vadd.f32 %v2639, %v2671
  %v2704 = vadd.f32 %v2640, %v2672
  %v2705 = vadd.f32 %v2641, %v2673
  %v2706 = vadd.f32 %v2642, %v2674
  %v2707 = vadd.f32 %v2643, %v2675
  %v2708 = vadd.f32 %v2644, %v2676
  %v2709 = vadd.f32 %v2645, %v2677
  %v2710 = vadd.f32 %v2646, %v2678
  %v2711 = vadd.f32 %v2679, %v2681
  %v2712 = vadd.f32 %v2711, %v2683
  %v2713 = vadd.f32 %v2712, %v2685
  %v2714 = vadd.f32 %v2713, %v2687
  %v2715 = vadd.f32 %v2714, %v2689
  %v2716 = vadd.f32 %v2715, %v2691
  %v2717 = vadd.f32 %v2716, %v2693
  %v2718 = vadd.f32 %v2680, %v2682
  %v2719 = vadd.f32 %v2718, %v2684
  %v2720 = vadd.f32 %v2719, %v2686
  %v2721 = vadd.f32 %v2720, %v2688
  %v2722 = vadd.f32 %v2721, %v2690
  %v2723 = vadd.f32 %v2722, %v2692
  %v2724 = vadd.f32 %v2723, %v2694
  %v2725 = vadd.f32 %v2695, %v2697
  %v2726 = vadd.f32 %v2725, %v2699
  %v2727 = vadd.f32 %v2726, %v2701
  %v2728 = vadd.f32 %v2727, %v2703
  %v2729 = vadd.f32 %v2728, %v2705
  %v2730 = vadd.f32 %v2729, %v2707
  %v2731 = vadd.f32 %v2730, %v2709
  %v2732 = vadd.f32 %v2696, %v2698
  %v2733 = vadd.f32 %v2732, %v2700
  %v2734 = vadd.f32 %v2733, %v2702
  %v2735 = vadd.f32 %v2734, %v2704
  %v2736 = vadd.f32 %v2735, %v2706
  %v2737 = vadd.f32 %v2736, %v2708
  %v2738 = vadd.f32 %v2737, %v2710
  %v2739 = vrot.slane %v2717, 4
  %v2740 = vadd.f32 %v2717, %v2739
  %v2741 = vrot.slane %v2740, 2
  %v2742 = vadd.f32 %v2740, %v2741
  %v2743 = vrot.slane %v2742, 1
  %v2744 = vadd.f32 %v2742, %v2743
  %v2745 = vrot.slane %v2724, 4
  %v2746 = vadd.f32 %v2724, %v2745
  %v2747 = vrot.slane %v2746, 2
  %v2748 = vadd.f32 %v2746, %v2747
  %v2749 = vrot.slane %v2748, 1
  %v2750 = vadd.f32 %v2748, %v2749
  %v2751 = vrot.slane %v2731, 4
  %v2752 = vadd.f32 %v2731, %v2751
  %v2753 = vrot.slane %v2752, 2
  %v2754 = vadd.f32 %v2752, %v2753
  %v2755 = vrot.slane %v2754, 1
  %v2756 = vadd.f32 %v2754, %v2755
  %v2757 = vrot.slane %v2738, 4
  %v2758 = vadd.f32 %v2738, %v2757
  %v2759 = vrot.slane %v2758, 2
  %v2760 = vadd.f32 %v2758, %v2759
  %v2761 = vrot.slane %v2760, 1
  %v2762 = vadd.f32 %v2760, %v2761
  %v2763 = vmul.f32 %v2744, 0.015625
  %v2764 = vmul.f32 %v2750, 0.015625
  %v2765 = vmul.f32 %v2756, 0.015625
  %v2766 = vmul.f32 %v2762, 0.015625
  %vm2771 = vcmask 1041409
  %v2772 = vsel %vm2771, %v2764, %v2763
  %vm2773 = vcmask 1042434
  %v2774 = vsel %vm2773, %v2765, %v2772
  %vm2775 = vcmask 1043459
  %v2776 = vsel %vm2775, %v2766, %v2774
  %2778 = vst [vmem:[%s1] sm:$0xf] %v2776
  %vm2779 = vcmp.eq.s32.totalorder %v2423, 1
  %vm2780 = vcmp.eq.s32.totalorder %v2424, 1
  %vm2781 = vcmp.eq.s32.totalorder %v2425, 1
  %vm2782 = vcmp.eq.s32.totalorder %v2426, 1
  %vm2783 = vcmp.eq.s32.totalorder %v2427, 1
  %vm2784 = vcmp.eq.s32.totalorder %v2428, 1
  %vm2785 = vcmp.eq.s32.totalorder %v2429, 1
  %vm2786 = vcmp.eq.s32.totalorder %v2430, 1
  %vm2787 = vcmp.eq.s32.totalorder %v2431, 1
  %vm2788 = vcmp.eq.s32.totalorder %v2432, 1
  %vm2789 = vcmp.eq.s32.totalorder %v2433, 1
  %vm2790 = vcmp.eq.s32.totalorder %v2434, 1
  %vm2791 = vcmp.eq.s32.totalorder %v2435, 1
  %vm2792 = vcmp.eq.s32.totalorder %v2436, 1
  %vm2793 = vcmp.eq.s32.totalorder %v2437, 1
  %vm2794 = vcmp.eq.s32.totalorder %v2438, 1
  %vm2795 = vcmp.eq.s32.totalorder %v2439, 1
  %vm2796 = vcmp.eq.s32.totalorder %v2440, 1
  %vm2797 = vcmp.eq.s32.totalorder %v2441, 1
  %vm2798 = vcmp.eq.s32.totalorder %v2442, 1
  %vm2799 = vcmp.eq.s32.totalorder %v2443, 1
  %vm2800 = vcmp.eq.s32.totalorder %v2444, 1
  %vm2801 = vcmp.eq.s32.totalorder %v2445, 1
  %vm2802 = vcmp.eq.s32.totalorder %v2446, 1
  %vm2803 = vcmp.eq.s32.totalorder %v2447, 1
  %vm2804 = vcmp.eq.s32.totalorder %v2448, 1
  %vm2805 = vcmp.eq.s32.totalorder %v2449, 1
  %vm2806 = vcmp.eq.s32.totalorder %v2450, 1
  %vm2807 = vcmp.eq.s32.totalorder %v2451, 1
  %vm2808 = vcmp.eq.s32.totalorder %v2452, 1
  %vm2809 = vcmp.eq.s32.totalorder %v2453, 1
  %vm2810 = vcmp.eq.s32.totalorder %v2454, 1
  %v2811 = vsel %vm2779, %v2455, 0.0
  %v2812 = vsel %vm2780, %v2456, 0.0
  %v2813 = vsel %vm2781, %v2457, 0.0
  %v2814 = vsel %vm2782, %v2458, 0.0
  %v2815 = vsel %vm2783, %v2459, 0.0
  %v2816 = vsel %vm2784, %v2460, 0.0
  %v2817 = vsel %vm2785, %v2461, 0.0
  %v2818 = vsel %vm2786, %v2462, 0.0
  %v2819 = vsel %vm2787, %v2463, 0.0
  %v2820 = vsel %vm2788, %v2464, 0.0
  %v2821 = vsel %vm2789, %v2465, 0.0
  %v2822 = vsel %vm2790, %v2466, 0.0
  %v2823 = vsel %vm2791, %v2467, 0.0
  %v2824 = vsel %vm2792, %v2468, 0.0
  %v2825 = vsel %vm2793, %v2469, 0.0
  %v2826 = vsel %vm2794, %v2470, 0.0
  %v2827 = vsel %vm2795, %v2471, 0.0
  %v2828 = vsel %vm2796, %v2472, 0.0
  %v2829 = vsel %vm2797, %v2473, 0.0
  %v2830 = vsel %vm2798, %v2474, 0.0
  %v2831 = vsel %vm2799, %v2475, 0.0
  %v2832 = vsel %vm2800, %v2476, 0.0
  %v2833 = vsel %vm2801, %v2477, 0.0
  %v2834 = vsel %vm2802, %v2478, 0.0
  %v2835 = vsel %vm2803, %v2479, 0.0
  %v2836 = vsel %vm2804, %v2480, 0.0
  %v2837 = vsel %vm2805, %v2481, 0.0
  %v2838 = vsel %vm2806, %v2482, 0.0
  %v2839 = vsel %vm2807, %v2483, 0.0
  %v2840 = vsel %vm2808, %v2484, 0.0
  %v2841 = vsel %vm2809, %v2485, 0.0
  %v2842 = vsel %vm2810, %v2486, 0.0
  %v2843 = vsel %vm2551, %v2519, 0.0
  %v2844 = vsel %vm2552, %v2520, 0.0
  %v2845 = vsel %vm2553, %v2521, 0.0
  %v2846 = vsel %vm2554, %v2522, 0.0
  %v2847 = vsel %vm2555, %v2523, 0.0
  %v2848 = vsel %vm2556, %v2524, 0.0
  %v2849 = vsel %vm2557, %v2525, 0.0
  %v2850 = vsel %vm2558, %v2526, 0.0
  %v2851 = vsel %vm2559, %v2527, 0.0
  %v2852 = vsel %vm2560, %v2528, 0.0
  %v2853 = vsel %vm2561, %v2529, 0.0
  %v2854 = vsel %vm2562, %v2530, 0.0
  %v2855 = vsel %vm2563, %v2531, 0.0
  %v2856 = vsel %vm2564, %v2532, 0.0
  %v2857 = vsel %vm2565, %v2533, 0.0
  %v2858 = vsel %vm2566, %v2534, 0.0
  %v2859 = vsel %vm2567, %v2535, 0.0
  %v2860 = vsel %vm2568, %v2536, 0.0
  %v2861 = vsel %vm2569, %v2537, 0.0
  %v2862 = vsel %vm2570, %v2538, 0.0
  %v2863 = vsel %vm2571, %v2539, 0.0
  %v2864 = vsel %vm2572, %v2540, 0.0
  %v2865 = vsel %vm2573, %v2541, 0.0
  %v2866 = vsel %vm2574, %v2542, 0.0
  %v2867 = vsel %vm2575, %v2543, 0.0
  %v2868 = vsel %vm2576, %v2544, 0.0
  %v2869 = vsel %vm2577, %v2545, 0.0
  %v2870 = vsel %vm2578, %v2546, 0.0
  %v2871 = vsel %vm2579, %v2547, 0.0
  %v2872 = vsel %vm2580, %v2548, 0.0
  %v2873 = vsel %vm2581, %v2549, 0.0
  %v2874 = vsel %vm2582, %v2550, 0.0
  %v2875 = vadd.f32 %v2811, %v2843
  %v2876 = vadd.f32 %v2812, %v2844
  %v2877 = vadd.f32 %v2813, %v2845
  %v2878 = vadd.f32 %v2814, %v2846
  %v2879 = vadd.f32 %v2815, %v2847
  %v2880 = vadd.f32 %v2816, %v2848
  %v2881 = vadd.f32 %v2817, %v2849
  %v2882 = vadd.f32 %v2818, %v2850
  %v2883 = vadd.f32 %v2819, %v2851
  %v2884 = vadd.f32 %v2820, %v2852
  %v2885 = vadd.f32 %v2821, %v2853
  %v2886 = vadd.f32 %v2822, %v2854
  %v2887 = vadd.f32 %v2823, %v2855
  %v2888 = vadd.f32 %v2824, %v2856
  %v2889 = vadd.f32 %v2825, %v2857
  %v2890 = vadd.f32 %v2826, %v2858
  %v2891 = vadd.f32 %v2827, %v2859
  %v2892 = vadd.f32 %v2828, %v2860
  %v2893 = vadd.f32 %v2829, %v2861
  %v2894 = vadd.f32 %v2830, %v2862
  %v2895 = vadd.f32 %v2831, %v2863
  %v2896 = vadd.f32 %v2832, %v2864
  %v2897 = vadd.f32 %v2833, %v2865
  %v2898 = vadd.f32 %v2834, %v2866
  %v2899 = vadd.f32 %v2835, %v2867
  %v2900 = vadd.f32 %v2836, %v2868
  %v2901 = vadd.f32 %v2837, %v2869
  %v2902 = vadd.f32 %v2838, %v2870
  %v2903 = vadd.f32 %v2839, %v2871
  %v2904 = vadd.f32 %v2840, %v2872
  %v2905 = vadd.f32 %v2841, %v2873
  %v2906 = vadd.f32 %v2842, %v2874
  %v2907 = vadd.f32 %v2875, %v2877
  %v2908 = vadd.f32 %v2907, %v2879
  %v2909 = vadd.f32 %v2908, %v2881
  %v2910 = vadd.f32 %v2909, %v2883
  %v2911 = vadd.f32 %v2910, %v2885
  %v2912 = vadd.f32 %v2911, %v2887
  %v2913 = vadd.f32 %v2912, %v2889
  %v2914 = vadd.f32 %v2876, %v2878
  %v2915 = vadd.f32 %v2914, %v2880
  %v2916 = vadd.f32 %v2915, %v2882
  %v2917 = vadd.f32 %v2916, %v2884
  %v2918 = vadd.f32 %v2917, %v2886
  %v2919 = vadd.f32 %v2918, %v2888
  %v2920 = vadd.f32 %v2919, %v2890
  %v2921 = vadd.f32 %v2891, %v2893
  %v2922 = vadd.f32 %v2921, %v2895
  %v2923 = vadd.f32 %v2922, %v2897
  %v2924 = vadd.f32 %v2923, %v2899
  %v2925 = vadd.f32 %v2924, %v2901
  %v2926 = vadd.f32 %v2925, %v2903
  %v2927 = vadd.f32 %v2926, %v2905
  %v2928 = vadd.f32 %v2892, %v2894
  %v2929 = vadd.f32 %v2928, %v2896
  %v2930 = vadd.f32 %v2929, %v2898
  %v2931 = vadd.f32 %v2930, %v2900
  %v2932 = vadd.f32 %v2931, %v2902
  %v2933 = vadd.f32 %v2932, %v2904
  %v2934 = vadd.f32 %v2933, %v2906
  %v2935 = vrot.slane %v2913, 4
  %v2936 = vadd.f32 %v2913, %v2935
  %v2937 = vrot.slane %v2936, 2
  %v2938 = vadd.f32 %v2936, %v2937
  %v2939 = vrot.slane %v2938, 1
  %v2940 = vadd.f32 %v2938, %v2939
  %v2941 = vrot.slane %v2920, 4
  %v2942 = vadd.f32 %v2920, %v2941
  %v2943 = vrot.slane %v2942, 2
  %v2944 = vadd.f32 %v2942, %v2943
  %v2945 = vrot.slane %v2944, 1
  %v2946 = vadd.f32 %v2944, %v2945
  %v2947 = vrot.slane %v2927, 4
  %v2948 = vadd.f32 %v2927, %v2947
  %v2949 = vrot.slane %v2948, 2
  %v2950 = vadd.f32 %v2948, %v2949
  %v2951 = vrot.slane %v2950, 1
  %v2952 = vadd.f32 %v2950, %v2951
  %v2953 = vrot.slane %v2934, 4
  %v2954 = vadd.f32 %v2934, %v2953
  %v2955 = vrot.slane %v2954, 2
  %v2956 = vadd.f32 %v2954, %v2955
  %v2957 = vrot.slane %v2956, 1
  %v2958 = vadd.f32 %v2956, %v2957
  %v2959 = vmul.f32 %v2940, 0.015625
  %v2960 = vmul.f32 %v2946, 0.015625
  %v2961 = vmul.f32 %v2952, 0.015625
  %v2962 = vmul.f32 %v2958, 0.015625
  %v2967 = vsel %vm2771, %v2960, %v2959
  %v2968 = vsel %vm2773, %v2961, %v2967
  %v2969 = vsel %vm2775, %v2962, %v2968
  %2971 = vst [vmem:[%s1 + $0x4] sm:$0xf] %v2969
  %vm2972 = vcmp.eq.s32.totalorder %v2423, 2
  %vm2973 = vcmp.eq.s32.totalorder %v2424, 2
  %vm2974 = vcmp.eq.s32.totalorder %v2425, 2
  %vm2975 = vcmp.eq.s32.totalorder %v2426, 2
  %vm2976 = vcmp.eq.s32.totalorder %v2427, 2
  %vm2977 = vcmp.eq.s32.totalorder %v2428, 2
  %vm2978 = vcmp.eq.s32.totalorder %v2429, 2
  %vm2979 = vcmp.eq.s32.totalorder %v2430, 2
  %vm2980 = vcmp.eq.s32.totalorder %v2431, 2
  %vm2981 = vcmp.eq.s32.totalorder %v2432, 2
  %vm2982 = vcmp.eq.s32.totalorder %v2433, 2
  %vm2983 = vcmp.eq.s32.totalorder %v2434, 2
  %vm2984 = vcmp.eq.s32.totalorder %v2435, 2
  %vm2985 = vcmp.eq.s32.totalorder %v2436, 2
  %vm2986 = vcmp.eq.s32.totalorder %v2437, 2
  %vm2987 = vcmp.eq.s32.totalorder %v2438, 2
  %vm2988 = vcmp.eq.s32.totalorder %v2439, 2
  %vm2989 = vcmp.eq.s32.totalorder %v2440, 2
  %vm2990 = vcmp.eq.s32.totalorder %v2441, 2
  %vm2991 = vcmp.eq.s32.totalorder %v2442, 2
  %vm2992 = vcmp.eq.s32.totalorder %v2443, 2
  %vm2993 = vcmp.eq.s32.totalorder %v2444, 2
  %vm2994 = vcmp.eq.s32.totalorder %v2445, 2
  %vm2995 = vcmp.eq.s32.totalorder %v2446, 2
  %vm2996 = vcmp.eq.s32.totalorder %v2447, 2
  %vm2997 = vcmp.eq.s32.totalorder %v2448, 2
  %vm2998 = vcmp.eq.s32.totalorder %v2449, 2
  %vm2999 = vcmp.eq.s32.totalorder %v2450, 2
  %vm3000 = vcmp.eq.s32.totalorder %v2451, 2
  %vm3001 = vcmp.eq.s32.totalorder %v2452, 2
  %vm3002 = vcmp.eq.s32.totalorder %v2453, 2
  %vm3003 = vcmp.eq.s32.totalorder %v2454, 2
  %v3004 = vsel %vm2972, %v2455, 0.0
  %v3005 = vsel %vm2973, %v2456, 0.0
  %v3006 = vsel %vm2974, %v2457, 0.0
  %v3007 = vsel %vm2975, %v2458, 0.0
  %v3008 = vsel %vm2976, %v2459, 0.0
  %v3009 = vsel %vm2977, %v2460, 0.0
  %v3010 = vsel %vm2978, %v2461, 0.0
  %v3011 = vsel %vm2979, %v2462, 0.0
  %v3012 = vsel %vm2980, %v2463, 0.0
  %v3013 = vsel %vm2981, %v2464, 0.0
  %v3014 = vsel %vm2982, %v2465, 0.0
  %v3015 = vsel %vm2983, %v2466, 0.0
  %v3016 = vsel %vm2984, %v2467, 0.0
  %v3017 = vsel %vm2985, %v2468, 0.0
  %v3018 = vsel %vm2986, %v2469, 0.0
  %v3019 = vsel %vm2987, %v2470, 0.0
  %v3020 = vsel %vm2988, %v2471, 0.0
  %v3021 = vsel %vm2989, %v2472, 0.0
  %v3022 = vsel %vm2990, %v2473, 0.0
  %v3023 = vsel %vm2991, %v2474, 0.0
  %v3024 = vsel %vm2992, %v2475, 0.0
  %v3025 = vsel %vm2993, %v2476, 0.0
  %v3026 = vsel %vm2994, %v2477, 0.0
  %v3027 = vsel %vm2995, %v2478, 0.0
  %v3028 = vsel %vm2996, %v2479, 0.0
  %v3029 = vsel %vm2997, %v2480, 0.0
  %v3030 = vsel %vm2998, %v2481, 0.0
  %v3031 = vsel %vm2999, %v2482, 0.0
  %v3032 = vsel %vm3000, %v2483, 0.0
  %v3033 = vsel %vm3001, %v2484, 0.0
  %v3034 = vsel %vm3002, %v2485, 0.0
  %v3035 = vsel %vm3003, %v2486, 0.0
  %v3036 = vsel %vm2779, %v2519, 0.0
  %v3037 = vsel %vm2780, %v2520, 0.0
  %v3038 = vsel %vm2781, %v2521, 0.0
  %v3039 = vsel %vm2782, %v2522, 0.0
  %v3040 = vsel %vm2783, %v2523, 0.0
  %v3041 = vsel %vm2784, %v2524, 0.0
  %v3042 = vsel %vm2785, %v2525, 0.0
  %v3043 = vsel %vm2786, %v2526, 0.0
  %v3044 = vsel %vm2787, %v2527, 0.0
  %v3045 = vsel %vm2788, %v2528, 0.0
  %v3046 = vsel %vm2789, %v2529, 0.0
  %v3047 = vsel %vm2790, %v2530, 0.0
  %v3048 = vsel %vm2791, %v2531, 0.0
  %v3049 = vsel %vm2792, %v2532, 0.0
  %v3050 = vsel %vm2793, %v2533, 0.0
  %v3051 = vsel %vm2794, %v2534, 0.0
  %v3052 = vsel %vm2795, %v2535, 0.0
  %v3053 = vsel %vm2796, %v2536, 0.0
  %v3054 = vsel %vm2797, %v2537, 0.0
  %v3055 = vsel %vm2798, %v2538, 0.0
  %v3056 = vsel %vm2799, %v2539, 0.0
  %v3057 = vsel %vm2800, %v2540, 0.0
  %v3058 = vsel %vm2801, %v2541, 0.0
  %v3059 = vsel %vm2802, %v2542, 0.0
  %v3060 = vsel %vm2803, %v2543, 0.0
  %v3061 = vsel %vm2804, %v2544, 0.0
  %v3062 = vsel %vm2805, %v2545, 0.0
  %v3063 = vsel %vm2806, %v2546, 0.0
  %v3064 = vsel %vm2807, %v2547, 0.0
  %v3065 = vsel %vm2808, %v2548, 0.0
  %v3066 = vsel %vm2809, %v2549, 0.0
  %v3067 = vsel %vm2810, %v2550, 0.0
  %v3068 = vadd.f32 %v3004, %v3036
  %v3069 = vadd.f32 %v3005, %v3037
  %v3070 = vadd.f32 %v3006, %v3038
  %v3071 = vadd.f32 %v3007, %v3039
  %v3072 = vadd.f32 %v3008, %v3040
  %v3073 = vadd.f32 %v3009, %v3041
  %v3074 = vadd.f32 %v3010, %v3042
  %v3075 = vadd.f32 %v3011, %v3043
  %v3076 = vadd.f32 %v3012, %v3044
  %v3077 = vadd.f32 %v3013, %v3045
  %v3078 = vadd.f32 %v3014, %v3046
  %v3079 = vadd.f32 %v3015, %v3047
  %v3080 = vadd.f32 %v3016, %v3048
  %v3081 = vadd.f32 %v3017, %v3049
  %v3082 = vadd.f32 %v3018, %v3050
  %v3083 = vadd.f32 %v3019, %v3051
  %v3084 = vadd.f32 %v3020, %v3052
  %v3085 = vadd.f32 %v3021, %v3053
  %v3086 = vadd.f32 %v3022, %v3054
  %v3087 = vadd.f32 %v3023, %v3055
  %v3088 = vadd.f32 %v3024, %v3056
  %v3089 = vadd.f32 %v3025, %v3057
  %v3090 = vadd.f32 %v3026, %v3058
  %v3091 = vadd.f32 %v3027, %v3059
  %v3092 = vadd.f32 %v3028, %v3060
  %v3093 = vadd.f32 %v3029, %v3061
  %v3094 = vadd.f32 %v3030, %v3062
  %v3095 = vadd.f32 %v3031, %v3063
  %v3096 = vadd.f32 %v3032, %v3064
  %v3097 = vadd.f32 %v3033, %v3065
  %v3098 = vadd.f32 %v3034, %v3066
  %v3099 = vadd.f32 %v3035, %v3067
  %v3100 = vadd.f32 %v3068, %v3070
  %v3101 = vadd.f32 %v3100, %v3072
  %v3102 = vadd.f32 %v3101, %v3074
  %v3103 = vadd.f32 %v3102, %v3076
  %v3104 = vadd.f32 %v3103, %v3078
  %v3105 = vadd.f32 %v3104, %v3080
  %v3106 = vadd.f32 %v3105, %v3082
  %v3107 = vadd.f32 %v3069, %v3071
  %v3108 = vadd.f32 %v3107, %v3073
  %v3109 = vadd.f32 %v3108, %v3075
  %v3110 = vadd.f32 %v3109, %v3077
  %v3111 = vadd.f32 %v3110, %v3079
  %v3112 = vadd.f32 %v3111, %v3081
  %v3113 = vadd.f32 %v3112, %v3083
  %v3114 = vadd.f32 %v3084, %v3086
  %v3115 = vadd.f32 %v3114, %v3088
  %v3116 = vadd.f32 %v3115, %v3090
  %v3117 = vadd.f32 %v3116, %v3092
  %v3118 = vadd.f32 %v3117, %v3094
  %v3119 = vadd.f32 %v3118, %v3096
  %v3120 = vadd.f32 %v3119, %v3098
  %v3121 = vadd.f32 %v3085, %v3087
  %v3122 = vadd.f32 %v3121, %v3089
  %v3123 = vadd.f32 %v3122, %v3091
  %v3124 = vadd.f32 %v3123, %v3093
  %v3125 = vadd.f32 %v3124, %v3095
  %v3126 = vadd.f32 %v3125, %v3097
  %v3127 = vadd.f32 %v3126, %v3099
  %v3128 = vrot.slane %v3106, 4
  %v3129 = vadd.f32 %v3106, %v3128
  %v3130 = vrot.slane %v3129, 2
  %v3131 = vadd.f32 %v3129, %v3130
  %v3132 = vrot.slane %v3131, 1
  %v3133 = vadd.f32 %v3131, %v3132
  %v3134 = vrot.slane %v3113, 4
  %v3135 = vadd.f32 %v3113, %v3134
  %v3136 = vrot.slane %v3135, 2
  %v3137 = vadd.f32 %v3135, %v3136
  %v3138 = vrot.slane %v3137, 1
  %v3139 = vadd.f32 %v3137, %v3138
  %v3140 = vrot.slane %v3120, 4
  %v3141 = vadd.f32 %v3120, %v3140
  %v3142 = vrot.slane %v3141, 2
  %v3143 = vadd.f32 %v3141, %v3142
  %v3144 = vrot.slane %v3143, 1
  %v3145 = vadd.f32 %v3143, %v3144
  %v3146 = vrot.slane %v3127, 4
  %v3147 = vadd.f32 %v3127, %v3146
  %v3148 = vrot.slane %v3147, 2
  %v3149 = vadd.f32 %v3147, %v3148
  %v3150 = vrot.slane %v3149, 1
  %v3151 = vadd.f32 %v3149, %v3150
  %v3152 = vmul.f32 %v3133, 0.015625
  %v3153 = vmul.f32 %v3139, 0.015625
  %v3154 = vmul.f32 %v3145, 0.015625
  %v3155 = vmul.f32 %v3151, 0.015625
  %v3160 = vsel %vm2771, %v3153, %v3152
  %v3161 = vsel %vm2773, %v3154, %v3160
  %v3162 = vsel %vm2775, %v3155, %v3161
  %3164 = vst [vmem:[%s1 + $0x8] sm:$0xf] %v3162
  %vm3165 = vcmp.eq.s32.totalorder %v2423, 3
  %vm3166 = vcmp.eq.s32.totalorder %v2424, 3
  %vm3167 = vcmp.eq.s32.totalorder %v2425, 3
  %vm3168 = vcmp.eq.s32.totalorder %v2426, 3
  %vm3169 = vcmp.eq.s32.totalorder %v2427, 3
  %vm3170 = vcmp.eq.s32.totalorder %v2428, 3
  %vm3171 = vcmp.eq.s32.totalorder %v2429, 3
  %vm3172 = vcmp.eq.s32.totalorder %v2430, 3
  %vm3173 = vcmp.eq.s32.totalorder %v2431, 3
  %vm3174 = vcmp.eq.s32.totalorder %v2432, 3
  %vm3175 = vcmp.eq.s32.totalorder %v2433, 3
  %vm3176 = vcmp.eq.s32.totalorder %v2434, 3
  %vm3177 = vcmp.eq.s32.totalorder %v2435, 3
  %vm3178 = vcmp.eq.s32.totalorder %v2436, 3
  %vm3179 = vcmp.eq.s32.totalorder %v2437, 3
  %vm3180 = vcmp.eq.s32.totalorder %v2438, 3
  %vm3181 = vcmp.eq.s32.totalorder %v2439, 3
  %vm3182 = vcmp.eq.s32.totalorder %v2440, 3
  %vm3183 = vcmp.eq.s32.totalorder %v2441, 3
  %vm3184 = vcmp.eq.s32.totalorder %v2442, 3
  %vm3185 = vcmp.eq.s32.totalorder %v2443, 3
  %vm3186 = vcmp.eq.s32.totalorder %v2444, 3
  %vm3187 = vcmp.eq.s32.totalorder %v2445, 3
  %vm3188 = vcmp.eq.s32.totalorder %v2446, 3
  %vm3189 = vcmp.eq.s32.totalorder %v2447, 3
  %vm3190 = vcmp.eq.s32.totalorder %v2448, 3
  %vm3191 = vcmp.eq.s32.totalorder %v2449, 3
  %vm3192 = vcmp.eq.s32.totalorder %v2450, 3
  %vm3193 = vcmp.eq.s32.totalorder %v2451, 3
  %vm3194 = vcmp.eq.s32.totalorder %v2452, 3
  %vm3195 = vcmp.eq.s32.totalorder %v2453, 3
  %vm3196 = vcmp.eq.s32.totalorder %v2454, 3
  %v3197 = vsel %vm3165, %v2455, 0.0
  %v3198 = vsel %vm3166, %v2456, 0.0
  %v3199 = vsel %vm3167, %v2457, 0.0
  %v3200 = vsel %vm3168, %v2458, 0.0
  %v3201 = vsel %vm3169, %v2459, 0.0
  %v3202 = vsel %vm3170, %v2460, 0.0
  %v3203 = vsel %vm3171, %v2461, 0.0
  %v3204 = vsel %vm3172, %v2462, 0.0
  %v3205 = vsel %vm3173, %v2463, 0.0
  %v3206 = vsel %vm3174, %v2464, 0.0
  %v3207 = vsel %vm3175, %v2465, 0.0
  %v3208 = vsel %vm3176, %v2466, 0.0
  %v3209 = vsel %vm3177, %v2467, 0.0
  %v3210 = vsel %vm3178, %v2468, 0.0
  %v3211 = vsel %vm3179, %v2469, 0.0
  %v3212 = vsel %vm3180, %v2470, 0.0
  %v3213 = vsel %vm3181, %v2471, 0.0
  %v3214 = vsel %vm3182, %v2472, 0.0
  %v3215 = vsel %vm3183, %v2473, 0.0
  %v3216 = vsel %vm3184, %v2474, 0.0
  %v3217 = vsel %vm3185, %v2475, 0.0
  %v3218 = vsel %vm3186, %v2476, 0.0
  %v3219 = vsel %vm3187, %v2477, 0.0
  %v3220 = vsel %vm3188, %v2478, 0.0
  %v3221 = vsel %vm3189, %v2479, 0.0
  %v3222 = vsel %vm3190, %v2480, 0.0
  %v3223 = vsel %vm3191, %v2481, 0.0
  %v3224 = vsel %vm3192, %v2482, 0.0
  %v3225 = vsel %vm3193, %v2483, 0.0
  %v3226 = vsel %vm3194, %v2484, 0.0
  %v3227 = vsel %vm3195, %v2485, 0.0
  %v3228 = vsel %vm3196, %v2486, 0.0
  %v3229 = vsel %vm2972, %v2519, 0.0
  %v3230 = vsel %vm2973, %v2520, 0.0
  %v3231 = vsel %vm2974, %v2521, 0.0
  %v3232 = vsel %vm2975, %v2522, 0.0
  %v3233 = vsel %vm2976, %v2523, 0.0
  %v3234 = vsel %vm2977, %v2524, 0.0
  %v3235 = vsel %vm2978, %v2525, 0.0
  %v3236 = vsel %vm2979, %v2526, 0.0
  %v3237 = vsel %vm2980, %v2527, 0.0
  %v3238 = vsel %vm2981, %v2528, 0.0
  %v3239 = vsel %vm2982, %v2529, 0.0
  %v3240 = vsel %vm2983, %v2530, 0.0
  %v3241 = vsel %vm2984, %v2531, 0.0
  %v3242 = vsel %vm2985, %v2532, 0.0
  %v3243 = vsel %vm2986, %v2533, 0.0
  %v3244 = vsel %vm2987, %v2534, 0.0
  %v3245 = vsel %vm2988, %v2535, 0.0
  %v3246 = vsel %vm2989, %v2536, 0.0
  %v3247 = vsel %vm2990, %v2537, 0.0
  %v3248 = vsel %vm2991, %v2538, 0.0
  %v3249 = vsel %vm2992, %v2539, 0.0
  %v3250 = vsel %vm2993, %v2540, 0.0
  %v3251 = vsel %vm2994, %v2541, 0.0
  %v3252 = vsel %vm2995, %v2542, 0.0
  %v3253 = vsel %vm2996, %v2543, 0.0
  %v3254 = vsel %vm2997, %v2544, 0.0
  %v3255 = vsel %vm2998, %v2545, 0.0
  %v3256 = vsel %vm2999, %v2546, 0.0
  %v3257 = vsel %vm3000, %v2547, 0.0
  %v3258 = vsel %vm3001, %v2548, 0.0
  %v3259 = vsel %vm3002, %v2549, 0.0
  %v3260 = vsel %vm3003, %v2550, 0.0
  %v3261 = vadd.f32 %v3197, %v3229
  %v3262 = vadd.f32 %v3198, %v3230
  %v3263 = vadd.f32 %v3199, %v3231
  %v3264 = vadd.f32 %v3200, %v3232
  %v3265 = vadd.f32 %v3201, %v3233
  %v3266 = vadd.f32 %v3202, %v3234
  %v3267 = vadd.f32 %v3203, %v3235
  %v3268 = vadd.f32 %v3204, %v3236
  %v3269 = vadd.f32 %v3205, %v3237
  %v3270 = vadd.f32 %v3206, %v3238
  %v3271 = vadd.f32 %v3207, %v3239
  %v3272 = vadd.f32 %v3208, %v3240
  %v3273 = vadd.f32 %v3209, %v3241
  %v3274 = vadd.f32 %v3210, %v3242
  %v3275 = vadd.f32 %v3211, %v3243
  %v3276 = vadd.f32 %v3212, %v3244
  %v3277 = vadd.f32 %v3213, %v3245
  %v3278 = vadd.f32 %v3214, %v3246
  %v3279 = vadd.f32 %v3215, %v3247
  %v3280 = vadd.f32 %v3216, %v3248
  %v3281 = vadd.f32 %v3217, %v3249
  %v3282 = vadd.f32 %v3218, %v3250
  %v3283 = vadd.f32 %v3219, %v3251
  %v3284 = vadd.f32 %v3220, %v3252
  %v3285 = vadd.f32 %v3221, %v3253
  %v3286 = vadd.f32 %v3222, %v3254
  %v3287 = vadd.f32 %v3223, %v3255
  %v3288 = vadd.f32 %v3224, %v3256
  %v3289 = vadd.f32 %v3225, %v3257
  %v3290 = vadd.f32 %v3226, %v3258
  %v3291 = vadd.f32 %v3227, %v3259
  %v3292 = vadd.f32 %v3228, %v3260
  %v3293 = vadd.f32 %v3261, %v3263
  %v3294 = vadd.f32 %v3293, %v3265
  %v3295 = vadd.f32 %v3294, %v3267
  %v3296 = vadd.f32 %v3295, %v3269
  %v3297 = vadd.f32 %v3296, %v3271
  %v3298 = vadd.f32 %v3297, %v3273
  %v3299 = vadd.f32 %v3298, %v3275
  %v3300 = vadd.f32 %v3262, %v3264
  %v3301 = vadd.f32 %v3300, %v3266
  %v3302 = vadd.f32 %v3301, %v3268
  %v3303 = vadd.f32 %v3302, %v3270
  %v3304 = vadd.f32 %v3303, %v3272
  %v3305 = vadd.f32 %v3304, %v3274
  %v3306 = vadd.f32 %v3305, %v3276
  %v3307 = vadd.f32 %v3277, %v3279
  %v3308 = vadd.f32 %v3307, %v3281
  %v3309 = vadd.f32 %v3308, %v3283
  %v3310 = vadd.f32 %v3309, %v3285
  %v3311 = vadd.f32 %v3310, %v3287
  %v3312 = vadd.f32 %v3311, %v3289
  %v3313 = vadd.f32 %v3312, %v3291
  %v3314 = vadd.f32 %v3278, %v3280
  %v3315 = vadd.f32 %v3314, %v3282
  %v3316 = vadd.f32 %v3315, %v3284
  %v3317 = vadd.f32 %v3316, %v3286
  %v3318 = vadd.f32 %v3317, %v3288
  %v3319 = vadd.f32 %v3318, %v3290
  %v3320 = vadd.f32 %v3319, %v3292
  %v3321 = vrot.slane %v3299, 4
  %v3322 = vadd.f32 %v3299, %v3321
  %v3323 = vrot.slane %v3322, 2
  %v3324 = vadd.f32 %v3322, %v3323
  %v3325 = vrot.slane %v3324, 1
  %v3326 = vadd.f32 %v3324, %v3325
  %v3327 = vrot.slane %v3306, 4
  %v3328 = vadd.f32 %v3306, %v3327
  %v3329 = vrot.slane %v3328, 2
  %v3330 = vadd.f32 %v3328, %v3329
  %v3331 = vrot.slane %v3330, 1
  %v3332 = vadd.f32 %v3330, %v3331
  %v3333 = vrot.slane %v3313, 4
  %v3334 = vadd.f32 %v3313, %v3333
  %v3335 = vrot.slane %v3334, 2
  %v3336 = vadd.f32 %v3334, %v3335
  %v3337 = vrot.slane %v3336, 1
  %v3338 = vadd.f32 %v3336, %v3337
  %v3339 = vrot.slane %v3320, 4
  %v3340 = vadd.f32 %v3320, %v3339
  %v3341 = vrot.slane %v3340, 2
  %v3342 = vadd.f32 %v3340, %v3341
  %v3343 = vrot.slane %v3342, 1
  %v3344 = vadd.f32 %v3342, %v3343
  %v3345 = vmul.f32 %v3326, 0.015625
  %v3346 = vmul.f32 %v3332, 0.015625
  %v3347 = vmul.f32 %v3338, 0.015625
  %v3348 = vmul.f32 %v3344, 0.015625
  %v3353 = vsel %vm2771, %v3346, %v3345
  %v3354 = vsel %vm2773, %v3347, %v3353
  %v3355 = vsel %vm2775, %v3348, %v3354
  %3357 = vst [vmem:[%s1 + $0xc] sm:$0xf] %v3355
  %vm3358 = vcmp.eq.s32.totalorder %v2423, 4
  %vm3359 = vcmp.eq.s32.totalorder %v2424, 4
  %vm3360 = vcmp.eq.s32.totalorder %v2425, 4
  %vm3361 = vcmp.eq.s32.totalorder %v2426, 4
  %vm3362 = vcmp.eq.s32.totalorder %v2427, 4
  %vm3363 = vcmp.eq.s32.totalorder %v2428, 4
  %vm3364 = vcmp.eq.s32.totalorder %v2429, 4
  %vm3365 = vcmp.eq.s32.totalorder %v2430, 4
  %vm3366 = vcmp.eq.s32.totalorder %v2431, 4
  %vm3367 = vcmp.eq.s32.totalorder %v2432, 4
  %vm3368 = vcmp.eq.s32.totalorder %v2433, 4
  %vm3369 = vcmp.eq.s32.totalorder %v2434, 4
  %vm3370 = vcmp.eq.s32.totalorder %v2435, 4
  %vm3371 = vcmp.eq.s32.totalorder %v2436, 4
  %vm3372 = vcmp.eq.s32.totalorder %v2437, 4
  %vm3373 = vcmp.eq.s32.totalorder %v2438, 4
  %vm3374 = vcmp.eq.s32.totalorder %v2439, 4
  %vm3375 = vcmp.eq.s32.totalorder %v2440, 4
  %vm3376 = vcmp.eq.s32.totalorder %v2441, 4
  %vm3377 = vcmp.eq.s32.totalorder %v2442, 4
  %vm3378 = vcmp.eq.s32.totalorder %v2443, 4
  %vm3379 = vcmp.eq.s32.totalorder %v2444, 4
  %vm3380 = vcmp.eq.s32.totalorder %v2445, 4
  %vm3381 = vcmp.eq.s32.totalorder %v2446, 4
  %vm3382 = vcmp.eq.s32.totalorder %v2447, 4
  %vm3383 = vcmp.eq.s32.totalorder %v2448, 4
  %vm3384 = vcmp.eq.s32.totalorder %v2449, 4
  %vm3385 = vcmp.eq.s32.totalorder %v2450, 4
  %vm3386 = vcmp.eq.s32.totalorder %v2451, 4
  %vm3387 = vcmp.eq.s32.totalorder %v2452, 4
  %vm3388 = vcmp.eq.s32.totalorder %v2453, 4
  %vm3389 = vcmp.eq.s32.totalorder %v2454, 4
  %v3390 = vsel %vm3358, %v2455, 0.0
  %v3391 = vsel %vm3359, %v2456, 0.0
  %v3392 = vsel %vm3360, %v2457, 0.0
  %v3393 = vsel %vm3361, %v2458, 0.0
  %v3394 = vsel %vm3362, %v2459, 0.0
  %v3395 = vsel %vm3363, %v2460, 0.0
  %v3396 = vsel %vm3364, %v2461, 0.0
  %v3397 = vsel %vm3365, %v2462, 0.0
  %v3398 = vsel %vm3366, %v2463, 0.0
  %v3399 = vsel %vm3367, %v2464, 0.0
  %v3400 = vsel %vm3368, %v2465, 0.0
  %v3401 = vsel %vm3369, %v2466, 0.0
  %v3402 = vsel %vm3370, %v2467, 0.0
  %v3403 = vsel %vm3371, %v2468, 0.0
  %v3404 = vsel %vm3372, %v2469, 0.0
  %v3405 = vsel %vm3373, %v2470, 0.0
  %v3406 = vsel %vm3374, %v2471, 0.0
  %v3407 = vsel %vm3375, %v2472, 0.0
  %v3408 = vsel %vm3376, %v2473, 0.0
  %v3409 = vsel %vm3377, %v2474, 0.0
  %v3410 = vsel %vm3378, %v2475, 0.0
  %v3411 = vsel %vm3379, %v2476, 0.0
  %v3412 = vsel %vm3380, %v2477, 0.0
  %v3413 = vsel %vm3381, %v2478, 0.0
  %v3414 = vsel %vm3382, %v2479, 0.0
  %v3415 = vsel %vm3383, %v2480, 0.0
  %v3416 = vsel %vm3384, %v2481, 0.0
  %v3417 = vsel %vm3385, %v2482, 0.0
  %v3418 = vsel %vm3386, %v2483, 0.0
  %v3419 = vsel %vm3387, %v2484, 0.0
  %v3420 = vsel %vm3388, %v2485, 0.0
  %v3421 = vsel %vm3389, %v2486, 0.0
  %v3422 = vsel %vm3165, %v2519, 0.0
  %v3423 = vsel %vm3166, %v2520, 0.0
  %v3424 = vsel %vm3167, %v2521, 0.0
  %v3425 = vsel %vm3168, %v2522, 0.0
  %v3426 = vsel %vm3169, %v2523, 0.0
  %v3427 = vsel %vm3170, %v2524, 0.0
  %v3428 = vsel %vm3171, %v2525, 0.0
  %v3429 = vsel %vm3172, %v2526, 0.0
  %v3430 = vsel %vm3173, %v2527, 0.0
  %v3431 = vsel %vm3174, %v2528, 0.0
  %v3432 = vsel %vm3175, %v2529, 0.0
  %v3433 = vsel %vm3176, %v2530, 0.0
  %v3434 = vsel %vm3177, %v2531, 0.0
  %v3435 = vsel %vm3178, %v2532, 0.0
  %v3436 = vsel %vm3179, %v2533, 0.0
  %v3437 = vsel %vm3180, %v2534, 0.0
  %v3438 = vsel %vm3181, %v2535, 0.0
  %v3439 = vsel %vm3182, %v2536, 0.0
  %v3440 = vsel %vm3183, %v2537, 0.0
  %v3441 = vsel %vm3184, %v2538, 0.0
  %v3442 = vsel %vm3185, %v2539, 0.0
  %v3443 = vsel %vm3186, %v2540, 0.0
  %v3444 = vsel %vm3187, %v2541, 0.0
  %v3445 = vsel %vm3188, %v2542, 0.0
  %v3446 = vsel %vm3189, %v2543, 0.0
  %v3447 = vsel %vm3190, %v2544, 0.0
  %v3448 = vsel %vm3191, %v2545, 0.0
  %v3449 = vsel %vm3192, %v2546, 0.0
  %v3450 = vsel %vm3193, %v2547, 0.0
  %v3451 = vsel %vm3194, %v2548, 0.0
  %v3452 = vsel %vm3195, %v2549, 0.0
  %v3453 = vsel %vm3196, %v2550, 0.0
  %v3454 = vadd.f32 %v3390, %v3422
  %v3455 = vadd.f32 %v3391, %v3423
  %v3456 = vadd.f32 %v3392, %v3424
  %v3457 = vadd.f32 %v3393, %v3425
  %v3458 = vadd.f32 %v3394, %v3426
  %v3459 = vadd.f32 %v3395, %v3427
  %v3460 = vadd.f32 %v3396, %v3428
  %v3461 = vadd.f32 %v3397, %v3429
  %v3462 = vadd.f32 %v3398, %v3430
  %v3463 = vadd.f32 %v3399, %v3431
  %v3464 = vadd.f32 %v3400, %v3432
  %v3465 = vadd.f32 %v3401, %v3433
  %v3466 = vadd.f32 %v3402, %v3434
  %v3467 = vadd.f32 %v3403, %v3435
  %v3468 = vadd.f32 %v3404, %v3436
  %v3469 = vadd.f32 %v3405, %v3437
  %v3470 = vadd.f32 %v3406, %v3438
  %v3471 = vadd.f32 %v3407, %v3439
  %v3472 = vadd.f32 %v3408, %v3440
  %v3473 = vadd.f32 %v3409, %v3441
  %v3474 = vadd.f32 %v3410, %v3442
  %v3475 = vadd.f32 %v3411, %v3443
  %v3476 = vadd.f32 %v3412, %v3444
  %v3477 = vadd.f32 %v3413, %v3445
  %v3478 = vadd.f32 %v3414, %v3446
  %v3479 = vadd.f32 %v3415, %v3447
  %v3480 = vadd.f32 %v3416, %v3448
  %v3481 = vadd.f32 %v3417, %v3449
  %v3482 = vadd.f32 %v3418, %v3450
  %v3483 = vadd.f32 %v3419, %v3451
  %v3484 = vadd.f32 %v3420, %v3452
  %v3485 = vadd.f32 %v3421, %v3453
  %v3486 = vadd.f32 %v3454, %v3456
  %v3487 = vadd.f32 %v3486, %v3458
  %v3488 = vadd.f32 %v3487, %v3460
  %v3489 = vadd.f32 %v3488, %v3462
  %v3490 = vadd.f32 %v3489, %v3464
  %v3491 = vadd.f32 %v3490, %v3466
  %v3492 = vadd.f32 %v3491, %v3468
  %v3493 = vadd.f32 %v3455, %v3457
  %v3494 = vadd.f32 %v3493, %v3459
  %v3495 = vadd.f32 %v3494, %v3461
  %v3496 = vadd.f32 %v3495, %v3463
  %v3497 = vadd.f32 %v3496, %v3465
  %v3498 = vadd.f32 %v3497, %v3467
  %v3499 = vadd.f32 %v3498, %v3469
  %v3500 = vadd.f32 %v3470, %v3472
  %v3501 = vadd.f32 %v3500, %v3474
  %v3502 = vadd.f32 %v3501, %v3476
  %v3503 = vadd.f32 %v3502, %v3478
  %v3504 = vadd.f32 %v3503, %v3480
  %v3505 = vadd.f32 %v3504, %v3482
  %v3506 = vadd.f32 %v3505, %v3484
  %v3507 = vadd.f32 %v3471, %v3473
  %v3508 = vadd.f32 %v3507, %v3475
  %v3509 = vadd.f32 %v3508, %v3477
  %v3510 = vadd.f32 %v3509, %v3479
  %v3511 = vadd.f32 %v3510, %v3481
  %v3512 = vadd.f32 %v3511, %v3483
  %v3513 = vadd.f32 %v3512, %v3485
  %v3514 = vrot.slane %v3492, 4
  %v3515 = vadd.f32 %v3492, %v3514
  %v3516 = vrot.slane %v3515, 2
  %v3517 = vadd.f32 %v3515, %v3516
  %v3518 = vrot.slane %v3517, 1
  %v3519 = vadd.f32 %v3517, %v3518
  %v3520 = vrot.slane %v3499, 4
  %v3521 = vadd.f32 %v3499, %v3520
  %v3522 = vrot.slane %v3521, 2
  %v3523 = vadd.f32 %v3521, %v3522
  %v3524 = vrot.slane %v3523, 1
  %v3525 = vadd.f32 %v3523, %v3524
  %v3526 = vrot.slane %v3506, 4
  %v3527 = vadd.f32 %v3506, %v3526
  %v3528 = vrot.slane %v3527, 2
  %v3529 = vadd.f32 %v3527, %v3528
  %v3530 = vrot.slane %v3529, 1
  %v3531 = vadd.f32 %v3529, %v3530
  %v3532 = vrot.slane %v3513, 4
  %v3533 = vadd.f32 %v3513, %v3532
  %v3534 = vrot.slane %v3533, 2
  %v3535 = vadd.f32 %v3533, %v3534
  %v3536 = vrot.slane %v3535, 1
  %v3537 = vadd.f32 %v3535, %v3536
  %v3538 = vmul.f32 %v3519, 0.015625
  %v3539 = vmul.f32 %v3525, 0.015625
  %v3540 = vmul.f32 %v3531, 0.015625
  %v3541 = vmul.f32 %v3537, 0.015625
  %v3546 = vsel %vm2771, %v3539, %v3538
  %v3547 = vsel %vm2773, %v3540, %v3546
  %v3548 = vsel %vm2775, %v3541, %v3547
  %3550 = vst [vmem:[%s1 + $0x10] sm:$0xf] %v3548
  %vm3551 = vcmp.eq.s32.totalorder %v2423, 5
  %vm3552 = vcmp.eq.s32.totalorder %v2424, 5
  %vm3553 = vcmp.eq.s32.totalorder %v2425, 5
  %vm3554 = vcmp.eq.s32.totalorder %v2426, 5
  %vm3555 = vcmp.eq.s32.totalorder %v2427, 5
  %vm3556 = vcmp.eq.s32.totalorder %v2428, 5
  %vm3557 = vcmp.eq.s32.totalorder %v2429, 5
  %vm3558 = vcmp.eq.s32.totalorder %v2430, 5
  %vm3559 = vcmp.eq.s32.totalorder %v2431, 5
  %vm3560 = vcmp.eq.s32.totalorder %v2432, 5
  %vm3561 = vcmp.eq.s32.totalorder %v2433, 5
  %vm3562 = vcmp.eq.s32.totalorder %v2434, 5
  %vm3563 = vcmp.eq.s32.totalorder %v2435, 5
  %vm3564 = vcmp.eq.s32.totalorder %v2436, 5
  %vm3565 = vcmp.eq.s32.totalorder %v2437, 5
  %vm3566 = vcmp.eq.s32.totalorder %v2438, 5
  %vm3567 = vcmp.eq.s32.totalorder %v2439, 5
  %vm3568 = vcmp.eq.s32.totalorder %v2440, 5
  %vm3569 = vcmp.eq.s32.totalorder %v2441, 5
  %vm3570 = vcmp.eq.s32.totalorder %v2442, 5
  %vm3571 = vcmp.eq.s32.totalorder %v2443, 5
  %vm3572 = vcmp.eq.s32.totalorder %v2444, 5
  %vm3573 = vcmp.eq.s32.totalorder %v2445, 5
  %vm3574 = vcmp.eq.s32.totalorder %v2446, 5
  %vm3575 = vcmp.eq.s32.totalorder %v2447, 5
  %vm3576 = vcmp.eq.s32.totalorder %v2448, 5
  %vm3577 = vcmp.eq.s32.totalorder %v2449, 5
  %vm3578 = vcmp.eq.s32.totalorder %v2450, 5
  %vm3579 = vcmp.eq.s32.totalorder %v2451, 5
  %vm3580 = vcmp.eq.s32.totalorder %v2452, 5
  %vm3581 = vcmp.eq.s32.totalorder %v2453, 5
  %vm3582 = vcmp.eq.s32.totalorder %v2454, 5
  %v3583 = vsel %vm3551, %v2455, 0.0
  %v3584 = vsel %vm3552, %v2456, 0.0
  %v3585 = vsel %vm3553, %v2457, 0.0
  %v3586 = vsel %vm3554, %v2458, 0.0
  %v3587 = vsel %vm3555, %v2459, 0.0
  %v3588 = vsel %vm3556, %v2460, 0.0
  %v3589 = vsel %vm3557, %v2461, 0.0
  %v3590 = vsel %vm3558, %v2462, 0.0
  %v3591 = vsel %vm3559, %v2463, 0.0
  %v3592 = vsel %vm3560, %v2464, 0.0
  %v3593 = vsel %vm3561, %v2465, 0.0
  %v3594 = vsel %vm3562, %v2466, 0.0
  %v3595 = vsel %vm3563, %v2467, 0.0
  %v3596 = vsel %vm3564, %v2468, 0.0
  %v3597 = vsel %vm3565, %v2469, 0.0
  %v3598 = vsel %vm3566, %v2470, 0.0
  %v3599 = vsel %vm3567, %v2471, 0.0
  %v3600 = vsel %vm3568, %v2472, 0.0
  %v3601 = vsel %vm3569, %v2473, 0.0
  %v3602 = vsel %vm3570, %v2474, 0.0
  %v3603 = vsel %vm3571, %v2475, 0.0
  %v3604 = vsel %vm3572, %v2476, 0.0
  %v3605 = vsel %vm3573, %v2477, 0.0
  %v3606 = vsel %vm3574, %v2478, 0.0
  %v3607 = vsel %vm3575, %v2479, 0.0
  %v3608 = vsel %vm3576, %v2480, 0.0
  %v3609 = vsel %vm3577, %v2481, 0.0
  %v3610 = vsel %vm3578, %v2482, 0.0
  %v3611 = vsel %vm3579, %v2483, 0.0
  %v3612 = vsel %vm3580, %v2484, 0.0
  %v3613 = vsel %vm3581, %v2485, 0.0
  %v3614 = vsel %vm3582, %v2486, 0.0
  %v3615 = vsel %vm3358, %v2519, 0.0
  %v3616 = vsel %vm3359, %v2520, 0.0
  %v3617 = vsel %vm3360, %v2521, 0.0
  %v3618 = vsel %vm3361, %v2522, 0.0
  %v3619 = vsel %vm3362, %v2523, 0.0
  %v3620 = vsel %vm3363, %v2524, 0.0
  %v3621 = vsel %vm3364, %v2525, 0.0
  %v3622 = vsel %vm3365, %v2526, 0.0
  %v3623 = vsel %vm3366, %v2527, 0.0
  %v3624 = vsel %vm3367, %v2528, 0.0
  %v3625 = vsel %vm3368, %v2529, 0.0
  %v3626 = vsel %vm3369, %v2530, 0.0
  %v3627 = vsel %vm3370, %v2531, 0.0
  %v3628 = vsel %vm3371, %v2532, 0.0
  %v3629 = vsel %vm3372, %v2533, 0.0
  %v3630 = vsel %vm3373, %v2534, 0.0
  %v3631 = vsel %vm3374, %v2535, 0.0
  %v3632 = vsel %vm3375, %v2536, 0.0
  %v3633 = vsel %vm3376, %v2537, 0.0
  %v3634 = vsel %vm3377, %v2538, 0.0
  %v3635 = vsel %vm3378, %v2539, 0.0
  %v3636 = vsel %vm3379, %v2540, 0.0
  %v3637 = vsel %vm3380, %v2541, 0.0
  %v3638 = vsel %vm3381, %v2542, 0.0
  %v3639 = vsel %vm3382, %v2543, 0.0
  %v3640 = vsel %vm3383, %v2544, 0.0
  %v3641 = vsel %vm3384, %v2545, 0.0
  %v3642 = vsel %vm3385, %v2546, 0.0
  %v3643 = vsel %vm3386, %v2547, 0.0
  %v3644 = vsel %vm3387, %v2548, 0.0
  %v3645 = vsel %vm3388, %v2549, 0.0
  %v3646 = vsel %vm3389, %v2550, 0.0
  %v3647 = vadd.f32 %v3583, %v3615
  %v3648 = vadd.f32 %v3584, %v3616
  %v3649 = vadd.f32 %v3585, %v3617
  %v3650 = vadd.f32 %v3586, %v3618
  %v3651 = vadd.f32 %v3587, %v3619
  %v3652 = vadd.f32 %v3588, %v3620
  %v3653 = vadd.f32 %v3589, %v3621
  %v3654 = vadd.f32 %v3590, %v3622
  %v3655 = vadd.f32 %v3591, %v3623
  %v3656 = vadd.f32 %v3592, %v3624
  %v3657 = vadd.f32 %v3593, %v3625
  %v3658 = vadd.f32 %v3594, %v3626
  %v3659 = vadd.f32 %v3595, %v3627
  %v3660 = vadd.f32 %v3596, %v3628
  %v3661 = vadd.f32 %v3597, %v3629
  %v3662 = vadd.f32 %v3598, %v3630
  %v3663 = vadd.f32 %v3599, %v3631
  %v3664 = vadd.f32 %v3600, %v3632
  %v3665 = vadd.f32 %v3601, %v3633
  %v3666 = vadd.f32 %v3602, %v3634
  %v3667 = vadd.f32 %v3603, %v3635
  %v3668 = vadd.f32 %v3604, %v3636
  %v3669 = vadd.f32 %v3605, %v3637
  %v3670 = vadd.f32 %v3606, %v3638
  %v3671 = vadd.f32 %v3607, %v3639
  %v3672 = vadd.f32 %v3608, %v3640
  %v3673 = vadd.f32 %v3609, %v3641
  %v3674 = vadd.f32 %v3610, %v3642
  %v3675 = vadd.f32 %v3611, %v3643
  %v3676 = vadd.f32 %v3612, %v3644
  %v3677 = vadd.f32 %v3613, %v3645
  %v3678 = vadd.f32 %v3614, %v3646
  %v3679 = vadd.f32 %v3647, %v3649
  %v3680 = vadd.f32 %v3679, %v3651
  %v3681 = vadd.f32 %v3680, %v3653
  %v3682 = vadd.f32 %v3681, %v3655
  %v3683 = vadd.f32 %v3682, %v3657
  %v3684 = vadd.f32 %v3683, %v3659
  %v3685 = vadd.f32 %v3684, %v3661
  %v3686 = vadd.f32 %v3648, %v3650
  %v3687 = vadd.f32 %v3686, %v3652
  %v3688 = vadd.f32 %v3687, %v3654
  %v3689 = vadd.f32 %v3688, %v3656
  %v3690 = vadd.f32 %v3689, %v3658
  %v3691 = vadd.f32 %v3690, %v3660
  %v3692 = vadd.f32 %v3691, %v3662
  %v3693 = vadd.f32 %v3663, %v3665
  %v3694 = vadd.f32 %v3693, %v3667
  %v3695 = vadd.f32 %v3694, %v3669
  %v3696 = vadd.f32 %v3695, %v3671
  %v3697 = vadd.f32 %v3696, %v3673
  %v3698 = vadd.f32 %v3697, %v3675
  %v3699 = vadd.f32 %v3698, %v3677
  %v3700 = vadd.f32 %v3664, %v3666
  %v3701 = vadd.f32 %v3700, %v3668
  %v3702 = vadd.f32 %v3701, %v3670
  %v3703 = vadd.f32 %v3702, %v3672
  %v3704 = vadd.f32 %v3703, %v3674
  %v3705 = vadd.f32 %v3704, %v3676
  %v3706 = vadd.f32 %v3705, %v3678
  %v3707 = vrot.slane %v3685, 4
  %v3708 = vadd.f32 %v3685, %v3707
  %v3709 = vrot.slane %v3708, 2
  %v3710 = vadd.f32 %v3708, %v3709
  %v3711 = vrot.slane %v3710, 1
  %v3712 = vadd.f32 %v3710, %v3711
  %v3713 = vrot.slane %v3692, 4
  %v3714 = vadd.f32 %v3692, %v3713
  %v3715 = vrot.slane %v3714, 2
  %v3716 = vadd.f32 %v3714, %v3715
  %v3717 = vrot.slane %v3716, 1
  %v3718 = vadd.f32 %v3716, %v3717
  %v3719 = vrot.slane %v3699, 4
  %v3720 = vadd.f32 %v3699, %v3719
  %v3721 = vrot.slane %v3720, 2
  %v3722 = vadd.f32 %v3720, %v3721
  %v3723 = vrot.slane %v3722, 1
  %v3724 = vadd.f32 %v3722, %v3723
  %v3725 = vrot.slane %v3706, 4
  %v3726 = vadd.f32 %v3706, %v3725
  %v3727 = vrot.slane %v3726, 2
  %v3728 = vadd.f32 %v3726, %v3727
  %v3729 = vrot.slane %v3728, 1
  %v3730 = vadd.f32 %v3728, %v3729
  %v3731 = vmul.f32 %v3712, 0.015625
  %v3732 = vmul.f32 %v3718, 0.015625
  %v3733 = vmul.f32 %v3724, 0.015625
  %v3734 = vmul.f32 %v3730, 0.015625
  %v3739 = vsel %vm2771, %v3732, %v3731
  %v3740 = vsel %vm2773, %v3733, %v3739
  %v3741 = vsel %vm2775, %v3734, %v3740
  %3743 = vst [vmem:[%s1 + $0x14] sm:$0xf] %v3741
  %vm3744 = vcmp.eq.s32.totalorder %v2423, 6
  %vm3745 = vcmp.eq.s32.totalorder %v2424, 6
  %vm3746 = vcmp.eq.s32.totalorder %v2425, 6
  %vm3747 = vcmp.eq.s32.totalorder %v2426, 6
  %vm3748 = vcmp.eq.s32.totalorder %v2427, 6
  %vm3749 = vcmp.eq.s32.totalorder %v2428, 6
  %vm3750 = vcmp.eq.s32.totalorder %v2429, 6
  %vm3751 = vcmp.eq.s32.totalorder %v2430, 6
  %vm3752 = vcmp.eq.s32.totalorder %v2431, 6
  %vm3753 = vcmp.eq.s32.totalorder %v2432, 6
  %vm3754 = vcmp.eq.s32.totalorder %v2433, 6
  %vm3755 = vcmp.eq.s32.totalorder %v2434, 6
  %vm3756 = vcmp.eq.s32.totalorder %v2435, 6
  %vm3757 = vcmp.eq.s32.totalorder %v2436, 6
  %vm3758 = vcmp.eq.s32.totalorder %v2437, 6
  %vm3759 = vcmp.eq.s32.totalorder %v2438, 6
  %vm3760 = vcmp.eq.s32.totalorder %v2439, 6
  %vm3761 = vcmp.eq.s32.totalorder %v2440, 6
  %vm3762 = vcmp.eq.s32.totalorder %v2441, 6
  %vm3763 = vcmp.eq.s32.totalorder %v2442, 6
  %vm3764 = vcmp.eq.s32.totalorder %v2443, 6
  %vm3765 = vcmp.eq.s32.totalorder %v2444, 6
  %vm3766 = vcmp.eq.s32.totalorder %v2445, 6
  %vm3767 = vcmp.eq.s32.totalorder %v2446, 6
  %vm3768 = vcmp.eq.s32.totalorder %v2447, 6
  %vm3769 = vcmp.eq.s32.totalorder %v2448, 6
  %vm3770 = vcmp.eq.s32.totalorder %v2449, 6
  %vm3771 = vcmp.eq.s32.totalorder %v2450, 6
  %vm3772 = vcmp.eq.s32.totalorder %v2451, 6
  %vm3773 = vcmp.eq.s32.totalorder %v2452, 6
  %vm3774 = vcmp.eq.s32.totalorder %v2453, 6
  %vm3775 = vcmp.eq.s32.totalorder %v2454, 6
  %v3776 = vsel %vm3744, %v2455, 0.0
  %v3777 = vsel %vm3745, %v2456, 0.0
  %v3778 = vsel %vm3746, %v2457, 0.0
  %v3779 = vsel %vm3747, %v2458, 0.0
  %v3780 = vsel %vm3748, %v2459, 0.0
  %v3781 = vsel %vm3749, %v2460, 0.0
  %v3782 = vsel %vm3750, %v2461, 0.0
  %v3783 = vsel %vm3751, %v2462, 0.0
  %v3784 = vsel %vm3752, %v2463, 0.0
  %v3785 = vsel %vm3753, %v2464, 0.0
  %v3786 = vsel %vm3754, %v2465, 0.0
  %v3787 = vsel %vm3755, %v2466, 0.0
  %v3788 = vsel %vm3756, %v2467, 0.0
  %v3789 = vsel %vm3757, %v2468, 0.0
  %v3790 = vsel %vm3758, %v2469, 0.0
  %v3791 = vsel %vm3759, %v2470, 0.0
  %v3792 = vsel %vm3760, %v2471, 0.0
  %v3793 = vsel %vm3761, %v2472, 0.0
  %v3794 = vsel %vm3762, %v2473, 0.0
  %v3795 = vsel %vm3763, %v2474, 0.0
  %v3796 = vsel %vm3764, %v2475, 0.0
  %v3797 = vsel %vm3765, %v2476, 0.0
  %v3798 = vsel %vm3766, %v2477, 0.0
  %v3799 = vsel %vm3767, %v2478, 0.0
  %v3800 = vsel %vm3768, %v2479, 0.0
  %v3801 = vsel %vm3769, %v2480, 0.0
  %v3802 = vsel %vm3770, %v2481, 0.0
  %v3803 = vsel %vm3771, %v2482, 0.0
  %v3804 = vsel %vm3772, %v2483, 0.0
  %v3805 = vsel %vm3773, %v2484, 0.0
  %v3806 = vsel %vm3774, %v2485, 0.0
  %v3807 = vsel %vm3775, %v2486, 0.0
  %v3808 = vsel %vm3551, %v2519, 0.0
  %v3809 = vsel %vm3552, %v2520, 0.0
  %v3810 = vsel %vm3553, %v2521, 0.0
  %v3811 = vsel %vm3554, %v2522, 0.0
  %v3812 = vsel %vm3555, %v2523, 0.0
  %v3813 = vsel %vm3556, %v2524, 0.0
  %v3814 = vsel %vm3557, %v2525, 0.0
  %v3815 = vsel %vm3558, %v2526, 0.0
  %v3816 = vsel %vm3559, %v2527, 0.0
  %v3817 = vsel %vm3560, %v2528, 0.0
  %v3818 = vsel %vm3561, %v2529, 0.0
  %v3819 = vsel %vm3562, %v2530, 0.0
  %v3820 = vsel %vm3563, %v2531, 0.0
  %v3821 = vsel %vm3564, %v2532, 0.0
  %v3822 = vsel %vm3565, %v2533, 0.0
  %v3823 = vsel %vm3566, %v2534, 0.0
  %v3824 = vsel %vm3567, %v2535, 0.0
  %v3825 = vsel %vm3568, %v2536, 0.0
  %v3826 = vsel %vm3569, %v2537, 0.0
  %v3827 = vsel %vm3570, %v2538, 0.0
  %v3828 = vsel %vm3571, %v2539, 0.0
  %v3829 = vsel %vm3572, %v2540, 0.0
  %v3830 = vsel %vm3573, %v2541, 0.0
  %v3831 = vsel %vm3574, %v2542, 0.0
  %v3832 = vsel %vm3575, %v2543, 0.0
  %v3833 = vsel %vm3576, %v2544, 0.0
  %v3834 = vsel %vm3577, %v2545, 0.0
  %v3835 = vsel %vm3578, %v2546, 0.0
  %v3836 = vsel %vm3579, %v2547, 0.0
  %v3837 = vsel %vm3580, %v2548, 0.0
  %v3838 = vsel %vm3581, %v2549, 0.0
  %v3839 = vsel %vm3582, %v2550, 0.0
  %v3840 = vadd.f32 %v3776, %v3808
  %v3841 = vadd.f32 %v3777, %v3809
  %v3842 = vadd.f32 %v3778, %v3810
  %v3843 = vadd.f32 %v3779, %v3811
  %v3844 = vadd.f32 %v3780, %v3812
  %v3845 = vadd.f32 %v3781, %v3813
  %v3846 = vadd.f32 %v3782, %v3814
  %v3847 = vadd.f32 %v3783, %v3815
  %v3848 = vadd.f32 %v3784, %v3816
  %v3849 = vadd.f32 %v3785, %v3817
  %v3850 = vadd.f32 %v3786, %v3818
  %v3851 = vadd.f32 %v3787, %v3819
  %v3852 = vadd.f32 %v3788, %v3820
  %v3853 = vadd.f32 %v3789, %v3821
  %v3854 = vadd.f32 %v3790, %v3822
  %v3855 = vadd.f32 %v3791, %v3823
  %v3856 = vadd.f32 %v3792, %v3824
  %v3857 = vadd.f32 %v3793, %v3825
  %v3858 = vadd.f32 %v3794, %v3826
  %v3859 = vadd.f32 %v3795, %v3827
  %v3860 = vadd.f32 %v3796, %v3828
  %v3861 = vadd.f32 %v3797, %v3829
  %v3862 = vadd.f32 %v3798, %v3830
  %v3863 = vadd.f32 %v3799, %v3831
  %v3864 = vadd.f32 %v3800, %v3832
  %v3865 = vadd.f32 %v3801, %v3833
  %v3866 = vadd.f32 %v3802, %v3834
  %v3867 = vadd.f32 %v3803, %v3835
  %v3868 = vadd.f32 %v3804, %v3836
  %v3869 = vadd.f32 %v3805, %v3837
  %v3870 = vadd.f32 %v3806, %v3838
  %v3871 = vadd.f32 %v3807, %v3839
  %v3872 = vadd.f32 %v3840, %v3842
  %v3873 = vadd.f32 %v3872, %v3844
  %v3874 = vadd.f32 %v3873, %v3846
  %v3875 = vadd.f32 %v3874, %v3848
  %v3876 = vadd.f32 %v3875, %v3850
  %v3877 = vadd.f32 %v3876, %v3852
  %v3878 = vadd.f32 %v3877, %v3854
  %v3879 = vadd.f32 %v3841, %v3843
  %v3880 = vadd.f32 %v3879, %v3845
  %v3881 = vadd.f32 %v3880, %v3847
  %v3882 = vadd.f32 %v3881, %v3849
  %v3883 = vadd.f32 %v3882, %v3851
  %v3884 = vadd.f32 %v3883, %v3853
  %v3885 = vadd.f32 %v3884, %v3855
  %v3886 = vadd.f32 %v3856, %v3858
  %v3887 = vadd.f32 %v3886, %v3860
  %v3888 = vadd.f32 %v3887, %v3862
  %v3889 = vadd.f32 %v3888, %v3864
  %v3890 = vadd.f32 %v3889, %v3866
  %v3891 = vadd.f32 %v3890, %v3868
  %v3892 = vadd.f32 %v3891, %v3870
  %v3893 = vadd.f32 %v3857, %v3859
  %v3894 = vadd.f32 %v3893, %v3861
  %v3895 = vadd.f32 %v3894, %v3863
  %v3896 = vadd.f32 %v3895, %v3865
  %v3897 = vadd.f32 %v3896, %v3867
  %v3898 = vadd.f32 %v3897, %v3869
  %v3899 = vadd.f32 %v3898, %v3871
  %v3900 = vrot.slane %v3878, 4
  %v3901 = vadd.f32 %v3878, %v3900
  %v3902 = vrot.slane %v3901, 2
  %v3903 = vadd.f32 %v3901, %v3902
  %v3904 = vrot.slane %v3903, 1
  %v3905 = vadd.f32 %v3903, %v3904
  %v3906 = vrot.slane %v3885, 4
  %v3907 = vadd.f32 %v3885, %v3906
  %v3908 = vrot.slane %v3907, 2
  %v3909 = vadd.f32 %v3907, %v3908
  %v3910 = vrot.slane %v3909, 1
  %v3911 = vadd.f32 %v3909, %v3910
  %v3912 = vrot.slane %v3892, 4
  %v3913 = vadd.f32 %v3892, %v3912
  %v3914 = vrot.slane %v3913, 2
  %v3915 = vadd.f32 %v3913, %v3914
  %v3916 = vrot.slane %v3915, 1
  %v3917 = vadd.f32 %v3915, %v3916
  %v3918 = vrot.slane %v3899, 4
  %v3919 = vadd.f32 %v3899, %v3918
  %v3920 = vrot.slane %v3919, 2
  %v3921 = vadd.f32 %v3919, %v3920
  %v3922 = vrot.slane %v3921, 1
  %v3923 = vadd.f32 %v3921, %v3922
  %v3924 = vmul.f32 %v3905, 0.015625
  %v3925 = vmul.f32 %v3911, 0.015625
  %v3926 = vmul.f32 %v3917, 0.015625
  %v3927 = vmul.f32 %v3923, 0.015625
  %v3932 = vsel %vm2771, %v3925, %v3924
  %v3933 = vsel %vm2773, %v3926, %v3932
  %v3934 = vsel %vm2775, %v3927, %v3933
  %3936 = vst [vmem:[%s1 + $0x18] sm:$0xf] %v3934
  %vm3937 = vcmp.eq.s32.totalorder %v2423, 7
  %vm3938 = vcmp.eq.s32.totalorder %v2424, 7
  %vm3939 = vcmp.eq.s32.totalorder %v2425, 7
  %vm3940 = vcmp.eq.s32.totalorder %v2426, 7
  %vm3941 = vcmp.eq.s32.totalorder %v2427, 7
  %vm3942 = vcmp.eq.s32.totalorder %v2428, 7
  %vm3943 = vcmp.eq.s32.totalorder %v2429, 7
  %vm3944 = vcmp.eq.s32.totalorder %v2430, 7
  %vm3945 = vcmp.eq.s32.totalorder %v2431, 7
  %vm3946 = vcmp.eq.s32.totalorder %v2432, 7
  %vm3947 = vcmp.eq.s32.totalorder %v2433, 7
  %vm3948 = vcmp.eq.s32.totalorder %v2434, 7
  %vm3949 = vcmp.eq.s32.totalorder %v2435, 7
  %vm3950 = vcmp.eq.s32.totalorder %v2436, 7
  %vm3951 = vcmp.eq.s32.totalorder %v2437, 7
  %vm3952 = vcmp.eq.s32.totalorder %v2438, 7
  %vm3953 = vcmp.eq.s32.totalorder %v2439, 7
  %vm3954 = vcmp.eq.s32.totalorder %v2440, 7
  %vm3955 = vcmp.eq.s32.totalorder %v2441, 7
  %vm3956 = vcmp.eq.s32.totalorder %v2442, 7
  %vm3957 = vcmp.eq.s32.totalorder %v2443, 7
  %vm3958 = vcmp.eq.s32.totalorder %v2444, 7
  %vm3959 = vcmp.eq.s32.totalorder %v2445, 7
  %vm3960 = vcmp.eq.s32.totalorder %v2446, 7
  %vm3961 = vcmp.eq.s32.totalorder %v2447, 7
  %vm3962 = vcmp.eq.s32.totalorder %v2448, 7
  %vm3963 = vcmp.eq.s32.totalorder %v2449, 7
  %vm3964 = vcmp.eq.s32.totalorder %v2450, 7
  %vm3965 = vcmp.eq.s32.totalorder %v2451, 7
  %vm3966 = vcmp.eq.s32.totalorder %v2452, 7
  %vm3967 = vcmp.eq.s32.totalorder %v2453, 7
  %vm3968 = vcmp.eq.s32.totalorder %v2454, 7
  %v3969 = vsel %vm3937, %v2455, 0.0
  %v3970 = vsel %vm3938, %v2456, 0.0
  %v3971 = vsel %vm3939, %v2457, 0.0
  %v3972 = vsel %vm3940, %v2458, 0.0
  %v3973 = vsel %vm3941, %v2459, 0.0
  %v3974 = vsel %vm3942, %v2460, 0.0
  %v3975 = vsel %vm3943, %v2461, 0.0
  %v3976 = vsel %vm3944, %v2462, 0.0
  %v3977 = vsel %vm3945, %v2463, 0.0
  %v3978 = vsel %vm3946, %v2464, 0.0
  %v3979 = vsel %vm3947, %v2465, 0.0
  %v3980 = vsel %vm3948, %v2466, 0.0
  %v3981 = vsel %vm3949, %v2467, 0.0
  %v3982 = vsel %vm3950, %v2468, 0.0
  %v3983 = vsel %vm3951, %v2469, 0.0
  %v3984 = vsel %vm3952, %v2470, 0.0
  %v3985 = vsel %vm3953, %v2471, 0.0
  %v3986 = vsel %vm3954, %v2472, 0.0
  %v3987 = vsel %vm3955, %v2473, 0.0
  %v3988 = vsel %vm3956, %v2474, 0.0
  %v3989 = vsel %vm3957, %v2475, 0.0
  %v3990 = vsel %vm3958, %v2476, 0.0
  %v3991 = vsel %vm3959, %v2477, 0.0
  %v3992 = vsel %vm3960, %v2478, 0.0
  %v3993 = vsel %vm3961, %v2479, 0.0
  %v3994 = vsel %vm3962, %v2480, 0.0
  %v3995 = vsel %vm3963, %v2481, 0.0
  %v3996 = vsel %vm3964, %v2482, 0.0
  %v3997 = vsel %vm3965, %v2483, 0.0
  %v3998 = vsel %vm3966, %v2484, 0.0
  %v3999 = vsel %vm3967, %v2485, 0.0
  %v4000 = vsel %vm3968, %v2486, 0.0
  %v4001 = vsel %vm3744, %v2519, 0.0
  %v4002 = vsel %vm3745, %v2520, 0.0
  %v4003 = vsel %vm3746, %v2521, 0.0
  %v4004 = vsel %vm3747, %v2522, 0.0
  %v4005 = vsel %vm3748, %v2523, 0.0
  %v4006 = vsel %vm3749, %v2524, 0.0
  %v4007 = vsel %vm3750, %v2525, 0.0
  %v4008 = vsel %vm3751, %v2526, 0.0
  %v4009 = vsel %vm3752, %v2527, 0.0
  %v4010 = vsel %vm3753, %v2528, 0.0
  %v4011 = vsel %vm3754, %v2529, 0.0
  %v4012 = vsel %vm3755, %v2530, 0.0
  %v4013 = vsel %vm3756, %v2531, 0.0
  %v4014 = vsel %vm3757, %v2532, 0.0
  %v4015 = vsel %vm3758, %v2533, 0.0
  %v4016 = vsel %vm3759, %v2534, 0.0
  %v4017 = vsel %vm3760, %v2535, 0.0
  %v4018 = vsel %vm3761, %v2536, 0.0
  %v4019 = vsel %vm3762, %v2537, 0.0
  %v4020 = vsel %vm3763, %v2538, 0.0
  %v4021 = vsel %vm3764, %v2539, 0.0
  %v4022 = vsel %vm3765, %v2540, 0.0
  %v4023 = vsel %vm3766, %v2541, 0.0
  %v4024 = vsel %vm3767, %v2542, 0.0
  %v4025 = vsel %vm3768, %v2543, 0.0
  %v4026 = vsel %vm3769, %v2544, 0.0
  %v4027 = vsel %vm3770, %v2545, 0.0
  %v4028 = vsel %vm3771, %v2546, 0.0
  %v4029 = vsel %vm3772, %v2547, 0.0
  %v4030 = vsel %vm3773, %v2548, 0.0
  %v4031 = vsel %vm3774, %v2549, 0.0
  %v4032 = vsel %vm3775, %v2550, 0.0
  %v4033 = vadd.f32 %v3969, %v4001
  %v4034 = vadd.f32 %v3970, %v4002
  %v4035 = vadd.f32 %v3971, %v4003
  %v4036 = vadd.f32 %v3972, %v4004
  %v4037 = vadd.f32 %v3973, %v4005
  %v4038 = vadd.f32 %v3974, %v4006
  %v4039 = vadd.f32 %v3975, %v4007
  %v4040 = vadd.f32 %v3976, %v4008
  %v4041 = vadd.f32 %v3977, %v4009
  %v4042 = vadd.f32 %v3978, %v4010
  %v4043 = vadd.f32 %v3979, %v4011
  %v4044 = vadd.f32 %v3980, %v4012
  %v4045 = vadd.f32 %v3981, %v4013
  %v4046 = vadd.f32 %v3982, %v4014
  %v4047 = vadd.f32 %v3983, %v4015
  %v4048 = vadd.f32 %v3984, %v4016
  %v4049 = vadd.f32 %v3985, %v4017
  %v4050 = vadd.f32 %v3986, %v4018
  %v4051 = vadd.f32 %v3987, %v4019
  %v4052 = vadd.f32 %v3988, %v4020
  %v4053 = vadd.f32 %v3989, %v4021
  %v4054 = vadd.f32 %v3990, %v4022
  %v4055 = vadd.f32 %v3991, %v4023
  %v4056 = vadd.f32 %v3992, %v4024
  %v4057 = vadd.f32 %v3993, %v4025
  %v4058 = vadd.f32 %v3994, %v4026
  %v4059 = vadd.f32 %v3995, %v4027
  %v4060 = vadd.f32 %v3996, %v4028
  %v4061 = vadd.f32 %v3997, %v4029
  %v4062 = vadd.f32 %v3998, %v4030
  %v4063 = vadd.f32 %v3999, %v4031
  %v4064 = vadd.f32 %v4000, %v4032
  %v4065 = vadd.f32 %v4033, %v4035
  %v4066 = vadd.f32 %v4065, %v4037
  %v4067 = vadd.f32 %v4066, %v4039
  %v4068 = vadd.f32 %v4067, %v4041
  %v4069 = vadd.f32 %v4068, %v4043
  %v4070 = vadd.f32 %v4069, %v4045
  %v4071 = vadd.f32 %v4070, %v4047
  %v4072 = vadd.f32 %v4034, %v4036
  %v4073 = vadd.f32 %v4072, %v4038
  %v4074 = vadd.f32 %v4073, %v4040
  %v4075 = vadd.f32 %v4074, %v4042
  %v4076 = vadd.f32 %v4075, %v4044
  %v4077 = vadd.f32 %v4076, %v4046
  %v4078 = vadd.f32 %v4077, %v4048
  %v4079 = vadd.f32 %v4049, %v4051
  %v4080 = vadd.f32 %v4079, %v4053
  %v4081 = vadd.f32 %v4080, %v4055
  %v4082 = vadd.f32 %v4081, %v4057
  %v4083 = vadd.f32 %v4082, %v4059
  %v4084 = vadd.f32 %v4083, %v4061
  %v4085 = vadd.f32 %v4084, %v4063
  %v4086 = vadd.f32 %v4050, %v4052
  %v4087 = vadd.f32 %v4086, %v4054
  %v4088 = vadd.f32 %v4087, %v4056
  %v4089 = vadd.f32 %v4088, %v4058
  %v4090 = vadd.f32 %v4089, %v4060
  %v4091 = vadd.f32 %v4090, %v4062
  %v4092 = vadd.f32 %v4091, %v4064
  %v4093 = vrot.slane %v4071, 4
  %v4094 = vadd.f32 %v4071, %v4093
  %v4095 = vrot.slane %v4094, 2
  %v4096 = vadd.f32 %v4094, %v4095
  %v4097 = vrot.slane %v4096, 1
  %v4098 = vadd.f32 %v4096, %v4097
  %v4099 = vrot.slane %v4078, 4
  %v4100 = vadd.f32 %v4078, %v4099
  %v4101 = vrot.slane %v4100, 2
  %v4102 = vadd.f32 %v4100, %v4101
  %v4103 = vrot.slane %v4102, 1
  %v4104 = vadd.f32 %v4102, %v4103
  %v4105 = vrot.slane %v4085, 4
  %v4106 = vadd.f32 %v4085, %v4105
  %v4107 = vrot.slane %v4106, 2
  %v4108 = vadd.f32 %v4106, %v4107
  %v4109 = vrot.slane %v4108, 1
  %v4110 = vadd.f32 %v4108, %v4109
  %v4111 = vrot.slane %v4092, 4
  %v4112 = vadd.f32 %v4092, %v4111
  %v4113 = vrot.slane %v4112, 2
  %v4114 = vadd.f32 %v4112, %v4113
  %v4115 = vrot.slane %v4114, 1
  %v4116 = vadd.f32 %v4114, %v4115
  %v4117 = vmul.f32 %v4098, 0.015625
  %v4118 = vmul.f32 %v4104, 0.015625
  %v4119 = vmul.f32 %v4110, 0.015625
  %v4120 = vmul.f32 %v4116, 0.015625
  %v4125 = vsel %vm2771, %v4118, %v4117
  %v4126 = vsel %vm2773, %v4119, %v4125
  %v4127 = vsel %vm2775, %v4120, %v4126
  %4129 = vst [vmem:[%s1 + $0x1c] sm:$0xf] %v4127
  %vm4130 = vcmp.eq.s32.totalorder %v2423, 8
  %vm4131 = vcmp.eq.s32.totalorder %v2424, 8
  %vm4132 = vcmp.eq.s32.totalorder %v2425, 8
  %vm4133 = vcmp.eq.s32.totalorder %v2426, 8
  %vm4134 = vcmp.eq.s32.totalorder %v2427, 8
  %vm4135 = vcmp.eq.s32.totalorder %v2428, 8
  %vm4136 = vcmp.eq.s32.totalorder %v2429, 8
  %vm4137 = vcmp.eq.s32.totalorder %v2430, 8
  %vm4138 = vcmp.eq.s32.totalorder %v2431, 8
  %vm4139 = vcmp.eq.s32.totalorder %v2432, 8
  %vm4140 = vcmp.eq.s32.totalorder %v2433, 8
  %vm4141 = vcmp.eq.s32.totalorder %v2434, 8
  %vm4142 = vcmp.eq.s32.totalorder %v2435, 8
  %vm4143 = vcmp.eq.s32.totalorder %v2436, 8
  %vm4144 = vcmp.eq.s32.totalorder %v2437, 8
  %vm4145 = vcmp.eq.s32.totalorder %v2438, 8
  %vm4146 = vcmp.eq.s32.totalorder %v2439, 8
  %vm4147 = vcmp.eq.s32.totalorder %v2440, 8
  %vm4148 = vcmp.eq.s32.totalorder %v2441, 8
  %vm4149 = vcmp.eq.s32.totalorder %v2442, 8
  %vm4150 = vcmp.eq.s32.totalorder %v2443, 8
  %vm4151 = vcmp.eq.s32.totalorder %v2444, 8
  %vm4152 = vcmp.eq.s32.totalorder %v2445, 8
  %vm4153 = vcmp.eq.s32.totalorder %v2446, 8
  %vm4154 = vcmp.eq.s32.totalorder %v2447, 8
  %vm4155 = vcmp.eq.s32.totalorder %v2448, 8
  %vm4156 = vcmp.eq.s32.totalorder %v2449, 8
  %vm4157 = vcmp.eq.s32.totalorder %v2450, 8
  %vm4158 = vcmp.eq.s32.totalorder %v2451, 8
  %vm4159 = vcmp.eq.s32.totalorder %v2452, 8
  %vm4160 = vcmp.eq.s32.totalorder %v2453, 8
  %vm4161 = vcmp.eq.s32.totalorder %v2454, 8
  %v4162 = vsel %vm4130, %v2455, 0.0
  %v4163 = vsel %vm4131, %v2456, 0.0
  %v4164 = vsel %vm4132, %v2457, 0.0
  %v4165 = vsel %vm4133, %v2458, 0.0
  %v4166 = vsel %vm4134, %v2459, 0.0
  %v4167 = vsel %vm4135, %v2460, 0.0
  %v4168 = vsel %vm4136, %v2461, 0.0
  %v4169 = vsel %vm4137, %v2462, 0.0
  %v4170 = vsel %vm4138, %v2463, 0.0
  %v4171 = vsel %vm4139, %v2464, 0.0
  %v4172 = vsel %vm4140, %v2465, 0.0
  %v4173 = vsel %vm4141, %v2466, 0.0
  %v4174 = vsel %vm4142, %v2467, 0.0
  %v4175 = vsel %vm4143, %v2468, 0.0
  %v4176 = vsel %vm4144, %v2469, 0.0
  %v4177 = vsel %vm4145, %v2470, 0.0
  %v4178 = vsel %vm4146, %v2471, 0.0
  %v4179 = vsel %vm4147, %v2472, 0.0
  %v4180 = vsel %vm4148, %v2473, 0.0
  %v4181 = vsel %vm4149, %v2474, 0.0
  %v4182 = vsel %vm4150, %v2475, 0.0
  %v4183 = vsel %vm4151, %v2476, 0.0
  %v4184 = vsel %vm4152, %v2477, 0.0
  %v4185 = vsel %vm4153, %v2478, 0.0
  %v4186 = vsel %vm4154, %v2479, 0.0
  %v4187 = vsel %vm4155, %v2480, 0.0
  %v4188 = vsel %vm4156, %v2481, 0.0
  %v4189 = vsel %vm4157, %v2482, 0.0
  %v4190 = vsel %vm4158, %v2483, 0.0
  %v4191 = vsel %vm4159, %v2484, 0.0
  %v4192 = vsel %vm4160, %v2485, 0.0
  %v4193 = vsel %vm4161, %v2486, 0.0
  %v4194 = vsel %vm3937, %v2519, 0.0
  %v4195 = vsel %vm3938, %v2520, 0.0
  %v4196 = vsel %vm3939, %v2521, 0.0
  %v4197 = vsel %vm3940, %v2522, 0.0
  %v4198 = vsel %vm3941, %v2523, 0.0
  %v4199 = vsel %vm3942, %v2524, 0.0
  %v4200 = vsel %vm3943, %v2525, 0.0
  %v4201 = vsel %vm3944, %v2526, 0.0
  %v4202 = vsel %vm3945, %v2527, 0.0
  %v4203 = vsel %vm3946, %v2528, 0.0
  %v4204 = vsel %vm3947, %v2529, 0.0
  %v4205 = vsel %vm3948, %v2530, 0.0
  %v4206 = vsel %vm3949, %v2531, 0.0
  %v4207 = vsel %vm3950, %v2532, 0.0
  %v4208 = vsel %vm3951, %v2533, 0.0
  %v4209 = vsel %vm3952, %v2534, 0.0
  %v4210 = vsel %vm3953, %v2535, 0.0
  %v4211 = vsel %vm3954, %v2536, 0.0
  %v4212 = vsel %vm3955, %v2537, 0.0
  %v4213 = vsel %vm3956, %v2538, 0.0
  %v4214 = vsel %vm3957, %v2539, 0.0
  %v4215 = vsel %vm3958, %v2540, 0.0
  %v4216 = vsel %vm3959, %v2541, 0.0
  %v4217 = vsel %vm3960, %v2542, 0.0
  %v4218 = vsel %vm3961, %v2543, 0.0
  %v4219 = vsel %vm3962, %v2544, 0.0
  %v4220 = vsel %vm3963, %v2545, 0.0
  %v4221 = vsel %vm3964, %v2546, 0.0
  %v4222 = vsel %vm3965, %v2547, 0.0
  %v4223 = vsel %vm3966, %v2548, 0.0
  %v4224 = vsel %vm3967, %v2549, 0.0
  %v4225 = vsel %vm3968, %v2550, 0.0
  %v4226 = vadd.f32 %v4162, %v4194
  %v4227 = vadd.f32 %v4163, %v4195
  %v4228 = vadd.f32 %v4164, %v4196
  %v4229 = vadd.f32 %v4165, %v4197
  %v4230 = vadd.f32 %v4166, %v4198
  %v4231 = vadd.f32 %v4167, %v4199
  %v4232 = vadd.f32 %v4168, %v4200
  %v4233 = vadd.f32 %v4169, %v4201
  %v4234 = vadd.f32 %v4170, %v4202
  %v4235 = vadd.f32 %v4171, %v4203
  %v4236 = vadd.f32 %v4172, %v4204
  %v4237 = vadd.f32 %v4173, %v4205
  %v4238 = vadd.f32 %v4174, %v4206
  %v4239 = vadd.f32 %v4175, %v4207
  %v4240 = vadd.f32 %v4176, %v4208
  %v4241 = vadd.f32 %v4177, %v4209
  %v4242 = vadd.f32 %v4178, %v4210
  %v4243 = vadd.f32 %v4179, %v4211
  %v4244 = vadd.f32 %v4180, %v4212
  %v4245 = vadd.f32 %v4181, %v4213
  %v4246 = vadd.f32 %v4182, %v4214
  %v4247 = vadd.f32 %v4183, %v4215
  %v4248 = vadd.f32 %v4184, %v4216
  %v4249 = vadd.f32 %v4185, %v4217
  %v4250 = vadd.f32 %v4186, %v4218
  %v4251 = vadd.f32 %v4187, %v4219
  %v4252 = vadd.f32 %v4188, %v4220
  %v4253 = vadd.f32 %v4189, %v4221
  %v4254 = vadd.f32 %v4190, %v4222
  %v4255 = vadd.f32 %v4191, %v4223
  %v4256 = vadd.f32 %v4192, %v4224
  %v4257 = vadd.f32 %v4193, %v4225
  %v4258 = vadd.f32 %v4226, %v4228
  %v4259 = vadd.f32 %v4258, %v4230
  %v4260 = vadd.f32 %v4259, %v4232
  %v4261 = vadd.f32 %v4260, %v4234
  %v4262 = vadd.f32 %v4261, %v4236
  %v4263 = vadd.f32 %v4262, %v4238
  %v4264 = vadd.f32 %v4263, %v4240
  %v4265 = vadd.f32 %v4227, %v4229
  %v4266 = vadd.f32 %v4265, %v4231
  %v4267 = vadd.f32 %v4266, %v4233
  %v4268 = vadd.f32 %v4267, %v4235
  %v4269 = vadd.f32 %v4268, %v4237
  %v4270 = vadd.f32 %v4269, %v4239
  %v4271 = vadd.f32 %v4270, %v4241
  %v4272 = vadd.f32 %v4242, %v4244
  %v4273 = vadd.f32 %v4272, %v4246
  %v4274 = vadd.f32 %v4273, %v4248
  %v4275 = vadd.f32 %v4274, %v4250
  %v4276 = vadd.f32 %v4275, %v4252
  %v4277 = vadd.f32 %v4276, %v4254
  %v4278 = vadd.f32 %v4277, %v4256
  %v4279 = vadd.f32 %v4243, %v4245
  %v4280 = vadd.f32 %v4279, %v4247
  %v4281 = vadd.f32 %v4280, %v4249
  %v4282 = vadd.f32 %v4281, %v4251
  %v4283 = vadd.f32 %v4282, %v4253
  %v4284 = vadd.f32 %v4283, %v4255
  %v4285 = vadd.f32 %v4284, %v4257
  %v4286 = vrot.slane %v4264, 4
  %v4287 = vadd.f32 %v4264, %v4286
  %v4288 = vrot.slane %v4287, 2
  %v4289 = vadd.f32 %v4287, %v4288
  %v4290 = vrot.slane %v4289, 1
  %v4291 = vadd.f32 %v4289, %v4290
  %v4292 = vrot.slane %v4271, 4
  %v4293 = vadd.f32 %v4271, %v4292
  %v4294 = vrot.slane %v4293, 2
  %v4295 = vadd.f32 %v4293, %v4294
  %v4296 = vrot.slane %v4295, 1
  %v4297 = vadd.f32 %v4295, %v4296
  %v4298 = vrot.slane %v4278, 4
  %v4299 = vadd.f32 %v4278, %v4298
  %v4300 = vrot.slane %v4299, 2
  %v4301 = vadd.f32 %v4299, %v4300
  %v4302 = vrot.slane %v4301, 1
  %v4303 = vadd.f32 %v4301, %v4302
  %v4304 = vrot.slane %v4285, 4
  %v4305 = vadd.f32 %v4285, %v4304
  %v4306 = vrot.slane %v4305, 2
  %v4307 = vadd.f32 %v4305, %v4306
  %v4308 = vrot.slane %v4307, 1
  %v4309 = vadd.f32 %v4307, %v4308
  %v4310 = vmul.f32 %v4291, 0.015625
  %v4311 = vmul.f32 %v4297, 0.015625
  %v4312 = vmul.f32 %v4303, 0.015625
  %v4313 = vmul.f32 %v4309, 0.015625
  %v4318 = vsel %vm2771, %v4311, %v4310
  %v4319 = vsel %vm2773, %v4312, %v4318
  %v4320 = vsel %vm2775, %v4313, %v4319
  %4322 = vst [vmem:[%s1 + $0x20] sm:$0xf] %v4320
  %v4323 = vsel %vm2583, %v2455, 0.0
  %v4324 = vsel %vm2584, %v2456, 0.0
  %v4325 = vsel %vm2585, %v2457, 0.0
  %v4326 = vsel %vm2586, %v2458, 0.0
  %v4327 = vsel %vm2587, %v2459, 0.0
  %v4328 = vsel %vm2588, %v2460, 0.0
  %v4329 = vsel %vm2589, %v2461, 0.0
  %v4330 = vsel %vm2590, %v2462, 0.0
  %v4331 = vsel %vm2591, %v2463, 0.0
  %v4332 = vsel %vm2592, %v2464, 0.0
  %v4333 = vsel %vm2593, %v2465, 0.0
  %v4334 = vsel %vm2594, %v2466, 0.0
  %v4335 = vsel %vm2595, %v2467, 0.0
  %v4336 = vsel %vm2596, %v2468, 0.0
  %v4337 = vsel %vm2597, %v2469, 0.0
  %v4338 = vsel %vm2598, %v2470, 0.0
  %v4339 = vsel %vm2599, %v2471, 0.0
  %v4340 = vsel %vm2600, %v2472, 0.0
  %v4341 = vsel %vm2601, %v2473, 0.0
  %v4342 = vsel %vm2602, %v2474, 0.0
  %v4343 = vsel %vm2603, %v2475, 0.0
  %v4344 = vsel %vm2604, %v2476, 0.0
  %v4345 = vsel %vm2605, %v2477, 0.0
  %v4346 = vsel %vm2606, %v2478, 0.0
  %v4347 = vsel %vm2607, %v2479, 0.0
  %v4348 = vsel %vm2608, %v2480, 0.0
  %v4349 = vsel %vm2609, %v2481, 0.0
  %v4350 = vsel %vm2610, %v2482, 0.0
  %v4351 = vsel %vm2611, %v2483, 0.0
  %v4352 = vsel %vm2612, %v2484, 0.0
  %v4353 = vsel %vm2613, %v2485, 0.0
  %v4354 = vsel %vm2614, %v2486, 0.0
  %v4355 = vsel %vm4130, %v2519, 0.0
  %v4356 = vsel %vm4131, %v2520, 0.0
  %v4357 = vsel %vm4132, %v2521, 0.0
  %v4358 = vsel %vm4133, %v2522, 0.0
  %v4359 = vsel %vm4134, %v2523, 0.0
  %v4360 = vsel %vm4135, %v2524, 0.0
  %v4361 = vsel %vm4136, %v2525, 0.0
  %v4362 = vsel %vm4137, %v2526, 0.0
  %v4363 = vsel %vm4138, %v2527, 0.0
  %v4364 = vsel %vm4139, %v2528, 0.0
  %v4365 = vsel %vm4140, %v2529, 0.0
  %v4366 = vsel %vm4141, %v2530, 0.0
  %v4367 = vsel %vm4142, %v2531, 0.0
  %v4368 = vsel %vm4143, %v2532, 0.0
  %v4369 = vsel %vm4144, %v2533, 0.0
  %v4370 = vsel %vm4145, %v2534, 0.0
  %v4371 = vsel %vm4146, %v2535, 0.0
  %v4372 = vsel %vm4147, %v2536, 0.0
  %v4373 = vsel %vm4148, %v2537, 0.0
  %v4374 = vsel %vm4149, %v2538, 0.0
  %v4375 = vsel %vm4150, %v2539, 0.0
  %v4376 = vsel %vm4151, %v2540, 0.0
  %v4377 = vsel %vm4152, %v2541, 0.0
  %v4378 = vsel %vm4153, %v2542, 0.0
  %v4379 = vsel %vm4154, %v2543, 0.0
  %v4380 = vsel %vm4155, %v2544, 0.0
  %v4381 = vsel %vm4156, %v2545, 0.0
  %v4382 = vsel %vm4157, %v2546, 0.0
  %v4383 = vsel %vm4158, %v2547, 0.0
  %v4384 = vsel %vm4159, %v2548, 0.0
  %v4385 = vsel %vm4160, %v2549, 0.0
  %v4386 = vsel %vm4161, %v2550, 0.0
  %v4387 = vadd.f32 %v4323, %v4355
  %v4388 = vadd.f32 %v4324, %v4356
  %v4389 = vadd.f32 %v4325, %v4357
  %v4390 = vadd.f32 %v4326, %v4358
  %v4391 = vadd.f32 %v4327, %v4359
  %v4392 = vadd.f32 %v4328, %v4360
  %v4393 = vadd.f32 %v4329, %v4361
  %v4394 = vadd.f32 %v4330, %v4362
  %v4395 = vadd.f32 %v4331, %v4363
  %v4396 = vadd.f32 %v4332, %v4364
  %v4397 = vadd.f32 %v4333, %v4365
  %v4398 = vadd.f32 %v4334, %v4366
  %v4399 = vadd.f32 %v4335, %v4367
  %v4400 = vadd.f32 %v4336, %v4368
  %v4401 = vadd.f32 %v4337, %v4369
  %v4402 = vadd.f32 %v4338, %v4370
  %v4403 = vadd.f32 %v4339, %v4371
  %v4404 = vadd.f32 %v4340, %v4372
  %v4405 = vadd.f32 %v4341, %v4373
  %v4406 = vadd.f32 %v4342, %v4374
  %v4407 = vadd.f32 %v4343, %v4375
  %v4408 = vadd.f32 %v4344, %v4376
  %v4409 = vadd.f32 %v4345, %v4377
  %v4410 = vadd.f32 %v4346, %v4378
  %v4411 = vadd.f32 %v4347, %v4379
  %v4412 = vadd.f32 %v4348, %v4380
  %v4413 = vadd.f32 %v4349, %v4381
  %v4414 = vadd.f32 %v4350, %v4382
  %v4415 = vadd.f32 %v4351, %v4383
  %v4416 = vadd.f32 %v4352, %v4384
  %v4417 = vadd.f32 %v4353, %v4385
  %v4418 = vadd.f32 %v4354, %v4386
  %v4419 = vadd.f32 %v4387, %v4389
  %v4420 = vadd.f32 %v4419, %v4391
  %v4421 = vadd.f32 %v4420, %v4393
  %v4422 = vadd.f32 %v4421, %v4395
  %v4423 = vadd.f32 %v4422, %v4397
  %v4424 = vadd.f32 %v4423, %v4399
  %v4425 = vadd.f32 %v4424, %v4401
  %v4426 = vadd.f32 %v4388, %v4390
  %v4427 = vadd.f32 %v4426, %v4392
  %v4428 = vadd.f32 %v4427, %v4394
  %v4429 = vadd.f32 %v4428, %v4396
  %v4430 = vadd.f32 %v4429, %v4398
  %v4431 = vadd.f32 %v4430, %v4400
  %v4432 = vadd.f32 %v4431, %v4402
  %v4433 = vadd.f32 %v4403, %v4405
  %v4434 = vadd.f32 %v4433, %v4407
  %v4435 = vadd.f32 %v4434, %v4409
  %v4436 = vadd.f32 %v4435, %v4411
  %v4437 = vadd.f32 %v4436, %v4413
  %v4438 = vadd.f32 %v4437, %v4415
  %v4439 = vadd.f32 %v4438, %v4417
  %v4440 = vadd.f32 %v4404, %v4406
  %v4441 = vadd.f32 %v4440, %v4408
  %v4442 = vadd.f32 %v4441, %v4410
  %v4443 = vadd.f32 %v4442, %v4412
  %v4444 = vadd.f32 %v4443, %v4414
  %v4445 = vadd.f32 %v4444, %v4416
  %v4446 = vadd.f32 %v4445, %v4418
  %v4447 = vrot.slane %v4425, 4
  %v4448 = vadd.f32 %v4425, %v4447
  %v4449 = vrot.slane %v4448, 2
  %v4450 = vadd.f32 %v4448, %v4449
  %v4451 = vrot.slane %v4450, 1
  %v4452 = vadd.f32 %v4450, %v4451
  %v4453 = vrot.slane %v4432, 4
  %v4454 = vadd.f32 %v4432, %v4453
  %v4455 = vrot.slane %v4454, 2
  %v4456 = vadd.f32 %v4454, %v4455
  %v4457 = vrot.slane %v4456, 1
  %v4458 = vadd.f32 %v4456, %v4457
  %v4459 = vrot.slane %v4439, 4
  %v4460 = vadd.f32 %v4439, %v4459
  %v4461 = vrot.slane %v4460, 2
  %v4462 = vadd.f32 %v4460, %v4461
  %v4463 = vrot.slane %v4462, 1
  %v4464 = vadd.f32 %v4462, %v4463
  %v4465 = vrot.slane %v4446, 4
  %v4466 = vadd.f32 %v4446, %v4465
  %v4467 = vrot.slane %v4466, 2
  %v4468 = vadd.f32 %v4466, %v4467
  %v4469 = vrot.slane %v4468, 1
  %v4470 = vadd.f32 %v4468, %v4469
  %v4471 = vmul.f32 %v4452, 0.015625
  %v4472 = vmul.f32 %v4458, 0.015625
  %v4473 = vmul.f32 %v4464, 0.015625
  %v4474 = vmul.f32 %v4470, 0.015625
  %v4479 = vsel %vm2771, %v4472, %v4471
  %v4480 = vsel %vm2773, %v4473, %v4479
  %v4481 = vsel %vm2775, %v4474, %v4480
  %4483 = vst [vmem:[%s1 + $0x24] sm:$0xf] %v4481
  // Predicated region
  $region6: #{hog_layer.1} parent=0 // pred_check
    _
  $region7: #{hog_layer.1} parent=0 // pred_check_branch
    %4485 = sbr.rel (0) target = $region9
  $region8: #{hog_layer.1} parent=0 // pred_region
    _
  $region9: #{hog_layer.1} parent=0 // pred_fallthru
    _
  // Predicated region
  $region10: #{hog_layer.1} parent=0 // pred_check
    _
  $region11: #{hog_layer.1} parent=0 // pred_check_branch
    %4487 = sbr.rel (0) target = $region13
  $region12: #{hog_layer.1} parent=0 // pred_region
    _
  $region13: #{hog_layer.1} parent=0 // pred_fallthru
    _

</llo_original>
